<compile_context>
chip_gen: v5e
topology: v5e:2x2
jax: 0.10.0
libtpu: 0.0.40
codegen_flags: <defaults>
</compile_context>

<pallas_src>
import functools

import jax
import jax.numpy as jnp
from jax.experimental import pallas as pl
from jax.experimental.pallas import tpu as pltpu

LANES = 128     # lane-dense padded channel width
KSIZE = 10      # Conv1d kernel_size (all three layers)
STRIDE = 5      # Conv1d stride (all three layers)


def _conv_out_len(l):
    return (l - KSIZE) // STRIDE + 1


# ----------------------------------------------------------------------------
# Single fused kernel: conv1+relu+bn -> conv2+relu+bn -> conv3+relu+bn ->
# flatten -> fc0+relu -> fc1.  One grid step == one batch item.
# ----------------------------------------------------------------------------
def _fused_cnn_kernel(x_ref, w1_ref, e1_ref, w2_ref, e2_ref, w3_ref, e3_ref,
                      wf0_ref, bf0_ref, wf1_ref, bf1_ref,
                      o_ref, act1_ref, act2_ref, *, l1, l2, l3):
    def conv_block(slice_fn, w_ref, e_ref):
        # y[t, co] = sum_k sum_ci x[s*t + k, ci] * W[co, ci, k]
        # computed as a sum over the K taps; each tap is one MXU matmul on a
        # stride-5 sublane slice of the (time, channels) activation.
        acc = jnp.dot(slice_fn(0), w_ref[0], preferred_element_type=jnp.float32)
        for k in range(1, KSIZE):
            acc = acc + jnp.dot(slice_fn(k), w_ref[k],
                                preferred_element_type=jnp.float32)
        y = jnp.maximum(acc + e_ref[0:1, :], 0.0)        # conv bias + ReLU
        return y * e_ref[1:2, :] + e_ref[2:3, :]         # folded eval BatchNorm1d

    # Conv1d(40 -> 100) + ReLU + BN   ->  (l1, 128) kept in VMEM scratch.
    act1_ref[...] = conv_block(
        lambda k: x_ref[pl.ds(k, l1, stride=STRIDE), :], w1_ref, e1_ref)

    # Conv1d(100 -> 50) + ReLU + BN   ->  (l2, 128) kept in VMEM scratch.
    act2_ref[...] = conv_block(
        lambda k: act1_ref[pl.ds(k, l2, stride=STRIDE), :], w2_ref, e2_ref)

    # Conv1d(50 -> 10) + ReLU + BN    ->  (l3, 128) value.
    y3 = conv_block(
        lambda k: act2_ref[pl.ds(k, l3, stride=STRIDE), :], w3_ref, e3_ref)

    # torch .view(B, -1) flattens (C=10, L=l3) channel-major; that ordering is
    # baked into wf0 (wf0[l][c, j] == fc0_w[j, c*l3 + l]), so the Linear(20->16)
    # becomes a sum over the l3 time taps of lane-dense matmuls.
    h = bf0_ref[...]
    for l in range(l3):
        h = h + jnp.dot(y3[l:l + 1, :], wf0_ref[l],
                        preferred_element_type=jnp.float32)
    h = jnp.maximum(h, 0.0)
    # Dropout(0.5): eval-mode identity.

    # Linear(16 -> class_num), padded to 128 lanes (extra lanes are exact zeros).
    out = jnp.dot(h, wf1_ref[...], preferred_element_type=jnp.float32) + bf1_ref[...]
    o_ref[...] = out.astype(o_ref.dtype)


# ----------------------------------------------------------------------------
# Parameter prep (done ONCE, outside the forward pass): BN folding, weight
# transposes, zero-padding of channel dims to 128 lanes.
# ----------------------------------------------------------------------------
def fold_bn(gamma, beta, mean, var, eps=1e-5):
    scale = gamma / jnp.sqrt(var + eps)
    shift = beta - mean * scale
    return scale, shift


def _pad_lanes(v, n=LANES):
    return jnp.pad(v, (0, n - v.shape[0]))


def prepare_kernel_params(params, class_num, l3=2):
    prep = {}
    for li in range(3):
        w = params[f"conv{li}_w"]                  # torch layout (C_out, C_in, K)
        c_out, c_in, _ = w.shape
        in_pad = c_in if li == 0 else LANES        # layer-0 input is the real 40ch
        wk = jnp.transpose(w, (2, 1, 0))           # (K, C_in, C_out)
        wk = jnp.pad(wk, ((0, 0), (0, in_pad - c_in), (0, LANES - c_out)))
        prep[f"w{li}"] = wk.astype(jnp.float32)
        s, t = fold_bn(params[f"bn{li}_gamma"], params[f"bn{li}_beta"],
                       params[f"bn{li}_mean"], params[f"bn{li}_var"])
        prep[f"e{li}"] = jnp.stack(
            [_pad_lanes(params[f"conv{li}_b"]), _pad_lanes(s), _pad_lanes(t)]
        ).astype(jnp.float32)                      # rows: bias / bn_scale / bn_shift

    fc0_w = params["fc0_w"]                        # (16, 20), columns are c*l3 + l
    n_hidden, flat = fc0_w.shape
    c3 = flat // l3
    a = jnp.transpose(fc0_w.reshape(n_hidden, c3, l3), (2, 1, 0))   # (l3, c3, 16)
    prep["wf0"] = jnp.pad(
        a, ((0, 0), (0, LANES - c3), (0, LANES - n_hidden))).astype(jnp.float32)
    prep["bf0"] = _pad_lanes(params["fc0_b"])[None, :].astype(jnp.float32)

    wf1 = jnp.pad(params["fc1_w"].T,               # (16, class_num) -> (128, 128)
                  ((0, LANES - n_hidden), (0, LANES - class_num)))
    prep["wf1"] = wf1.astype(jnp.float32)
    prep["bf1"] = _pad_lanes(params["fc1_b"])[None, :].astype(jnp.float32)
    return prep


# ----------------------------------------------------------------------------
# Forward pass: one transpose of the input to channels-last, one pallas_call,
# one final slice of the padded logits.
# ----------------------------------------------------------------------------
def cnn_mel_1d_forward(prep, x, class_num):
    B = x.shape[0]
    c_in = x.shape[2]
    L = x.shape[3]
    l1, l2, l3 = _conv_out_len(L), _conv_out_len(_conv_out_len(L)), None
    l3 = _conv_out_len(l2)
    assert prep["wf0"].shape[0] == l3, "input length inconsistent with Linear(20,16)"

    # channels-last: time on sublanes, channels on lanes.
    xt = jnp.transpose(jnp.squeeze(x, axis=1), (0, 2, 1))   # (B, L, 40)

    kernel = functools.partial(_fused_cnn_kernel, l1=l1, l2=l2, l3=l3)

    operands = (xt, prep["w0"], prep["e0"], prep["w1"], prep["e1"],
                prep["w2"], prep["e2"], prep["wf0"], prep["bf0"],
                prep["wf1"], prep["bf1"])
    flops = int(2 * B * (l1 * c_in * KSIZE * 100 + l2 * 100 * KSIZE * 50
                         + l3 * 50 * KSIZE * 10 + 10 * l3 * 16 + 16 * class_num))
    bytes_accessed = int(sum(4 * op.size for op in operands) + 4 * B * LANES)

    out = pl.pallas_call(
        kernel,
        out_shape=jax.ShapeDtypeStruct((B, 1, LANES), jnp.float32),
        grid=(B,),
        in_specs=[
            pl.BlockSpec((None, L, c_in), lambda b: (b, 0, 0)),        # x (per-batch)
            pl.BlockSpec((KSIZE, c_in, LANES), lambda b: (0, 0, 0)),   # conv0 taps
            pl.BlockSpec((3, LANES), lambda b: (0, 0)),                # conv0 b/s/t
            pl.BlockSpec((KSIZE, LANES, LANES), lambda b: (0, 0, 0)),  # conv1 taps
            pl.BlockSpec((3, LANES), lambda b: (0, 0)),                # conv1 b/s/t
            pl.BlockSpec((KSIZE, LANES, LANES), lambda b: (0, 0, 0)),  # conv2 taps
            pl.BlockSpec((3, LANES), lambda b: (0, 0)),                # conv2 b/s/t
            pl.BlockSpec((l3, LANES, LANES), lambda b: (0, 0, 0)),     # fc0 (per tap)
            pl.BlockSpec((1, LANES), lambda b: (0, 0)),                # fc0 bias
            pl.BlockSpec((LANES, LANES), lambda b: (0, 0)),            # fc1 weight
            pl.BlockSpec((1, LANES), lambda b: (0, 0)),                # fc1 bias
        ],
        out_specs=pl.BlockSpec((None, 1, LANES), lambda b: (b, 0, 0)),
        scratch_shapes=[
            pltpu.VMEM((l1, LANES), jnp.float32),   # conv0 activation (VMEM-resident)
            pltpu.VMEM((l2, LANES), jnp.float32),   # conv1 activation (VMEM-resident)
        ],
        compiler_params=pltpu.CompilerParams(dimension_semantics=("parallel",)),
        cost_estimate=pl.CostEstimate(flops=flops, transcendentals=0,
                                      bytes_accessed=bytes_accessed),
    )(*operands)
    return out[:, 0, :class_num]


# ----------------------------------------------------------------------------
# Deterministic parameter init (torch layouts) and a pure-JAX reference.
# ----------------------------------------------------------------------------
def init_params(key, class_num):
    keys = jax.random.split(key, 20)
    p = {}
    conv_shapes = [(100, 40, 10), (50, 100, 10), (10, 50, 10)]
    ki = 0
    for li, (co, ci, k) in enumerate(conv_shapes):
        p[f"conv{li}_w"] = 0.05 * jax.random.normal(keys[ki], (co, ci, k), jnp.float32); ki += 1
        p[f"conv{li}_b"] = 0.01 * jax.random.normal(keys[ki], (co,), jnp.float32); ki += 1
        p[f"bn{li}_gamma"] = 1.0 + 0.05 * jax.random.normal(keys[ki], (co,), jnp.float32); ki += 1
        p[f"bn{li}_beta"] = 0.01 * jax.random.normal(keys[ki], (co,), jnp.float32); ki += 1
        p[f"bn{li}_mean"] = 0.01 * jax.random.normal(keys[ki], (co,), jnp.float32)
        p[f"bn{li}_var"] = 1.0 + 0.1 * jnp.abs(jax.random.normal(keys[ki], (co,), jnp.float32)); ki += 1
    p["fc0_w"] = 0.1 * jax.random.normal(keys[ki], (16, 20), jnp.float32); ki += 1
    p["fc0_b"] = 0.01 * jax.random.normal(keys[ki], (16,), jnp.float32); ki += 1
    p["fc1_w"] = 0.1 * jax.random.normal(keys[ki], (class_num, 16), jnp.float32); ki += 1
    p["fc1_b"] = 0.01 * jax.random.normal(keys[ki], (class_num,), jnp.float32); ki += 1
    return p


def _im2col_1d(x, kernel_size, stride):
    B, C, L = x.shape
    L_out = (L - kernel_size) // stride + 1
    idx = jnp.arange(L_out)[:, None] * stride + jnp.arange(kernel_size)[None, :]
    patches = x[:, :, idx]                           # (B, C, L_out, K)
    patches = jnp.transpose(patches, (0, 2, 1, 3))   # (B, L_out, C, K)
    return patches.reshape(B, L_out, C * kernel_size)


def _reference_forward(params, x):
    """Pure-JAX reference (no Pallas), same math as the torch module in eval mode."""
    x = jnp.squeeze(x, axis=1)
    h = x
    for li in range(3):
        w = params[f"conv{li}_w"]
        C_out, C_in, K = w.shape
        patches = _im2col_1d(h, K, STRIDE)
        y = patches @ w.reshape(C_out, C_in * K).T + params[f"conv{li}_b"]
        y = jnp.maximum(y, 0.0)
        s, t = fold_bn(params[f"bn{li}_gamma"], params[f"bn{li}_beta"],
                       params[f"bn{li}_mean"], params[f"bn{li}_var"])
        y = y * s + t
        h = jnp.transpose(y, (0, 2, 1))
    cnn = h.reshape(x.shape[0], -1)
    h = jnp.maximum(cnn @ params["fc0_w"].T + params["fc0_b"], 0.0)
    return h @ params["fc1_w"].T + params["fc1_b"]


if __name__ == "__main__":
    class_num = 4
    B, L = 2, 501            # matches the module's print_summary input (40, 501)
    key = jax.random.PRNGKey(0)
    pkey, xkey = jax.random.split(key)
    params = init_params(pkey, class_num)
    x = jax.random.normal(xkey, (B, 1, 40, L), jnp.float32)

    prep = prepare_kernel_params(params, class_num)   # one-time weight prep
    fwd = jax.jit(functools.partial(cnn_mel_1d_forward, class_num=class_num))
    out = jax.block_until_ready(fwd(prep, x))
    assert out.shape == (B, class_num), out.shape

    ref = jax.block_until_ready(_reference_forward(params, x))
    assert jnp.allclose(out, ref, atol=1e-4, rtol=1e-4), "mismatch vs reference"

    print("KERNEL_OK")
</pallas_src>

<mosaic_0001>
module attributes {stable_mosaic.version = 11 : i64} {
  func.func @_fused_cnn_kernel(%arg0: i32, %arg1: memref<1x501x40xf32, #tpu.memory_space<vmem>>, %arg2: memref<10x40x128xf32, #tpu.memory_space<vmem>>, %arg3: memref<3x128xf32, #tpu.memory_space<vmem>>, %arg4: memref<10x128x128xf32, #tpu.memory_space<vmem>>, %arg5: memref<3x128xf32, #tpu.memory_space<vmem>>, %arg6: memref<10x128x128xf32, #tpu.memory_space<vmem>>, %arg7: memref<3x128xf32, #tpu.memory_space<vmem>>, %arg8: memref<2x128x128xf32, #tpu.memory_space<vmem>>, %arg9: memref<1x128xf32, #tpu.memory_space<vmem>>, %arg10: memref<128x128xf32, #tpu.memory_space<vmem>>, %arg11: memref<1x128xf32, #tpu.memory_space<vmem>>, %arg12: memref<1x1x128xf32, #tpu.memory_space<vmem>>, %arg13: memref<99x128xf32, #tpu.memory_space<vmem>>, %arg14: memref<18x128xf32, #tpu.memory_space<vmem>>) attributes {dimension_semantics = [#tpu.dimension_semantics<parallel>], iteration_bounds = array<i64: 2>, scalar_prefetch = 0 : i64, scratch_operands = 2 : i64, tpu.core_type = #tpu.core_type<tc>, window_params = [{transform_indices = @transform_0, window_bounds = array<i64: 1, 501, 40>}, {pipeline_mode = #tpu.pipeline_mode<synchronous>, transform_indices = @transform_1, window_bounds = array<i64: 10, 40, 128>}, {pipeline_mode = #tpu.pipeline_mode<synchronous>, transform_indices = @transform_2, window_bounds = array<i64: 3, 128>}, {pipeline_mode = #tpu.pipeline_mode<synchronous>, transform_indices = @transform_3, window_bounds = array<i64: 10, 128, 128>}, {pipeline_mode = #tpu.pipeline_mode<synchronous>, transform_indices = @transform_4, window_bounds = array<i64: 3, 128>}, {pipeline_mode = #tpu.pipeline_mode<synchronous>, transform_indices = @transform_5, window_bounds = array<i64: 10, 128, 128>}, {pipeline_mode = #tpu.pipeline_mode<synchronous>, transform_indices = @transform_6, window_bounds = array<i64: 3, 128>}, {pipeline_mode = #tpu.pipeline_mode<synchronous>, transform_indices = @transform_7, window_bounds = array<i64: 2, 128, 128>}, {pipeline_mode = #tpu.pipeline_mode<synchronous>, transform_indices = @transform_8, window_bounds = array<i64: 1, 128>}, {pipeline_mode = #tpu.pipeline_mode<synchronous>, transform_indices = @transform_9, window_bounds = array<i64: 128, 128>}, {pipeline_mode = #tpu.pipeline_mode<synchronous>, transform_indices = @transform_10, window_bounds = array<i64: 1, 128>}, {transform_indices = @transform_11, window_bounds = array<i64: 1, 1, 128>}]} {
    %c0 = arith.constant 0 : index
    %c0_0 = arith.constant 0 : index
    %c0_1 = arith.constant 0 : index
    %0 = tpu.strided_load %arg1[%c0, %c0_0, %c0_1] {strides = array<i32: 1, 5, 1>} : memref<1x501x40xf32, #tpu.memory_space<vmem>>, vector<1x99x40xf32>
    %1 = vector.shape_cast %0 : vector<1x99x40xf32> to vector<99x40xf32>
    %c0_2 = arith.constant 0 : index
    %c0_3 = arith.constant 0 : index
    %c0_4 = arith.constant 0 : index
    %2 = vector.load %arg2[%c0_2, %c0_3, %c0_4] : memref<10x40x128xf32, #tpu.memory_space<vmem>>, vector<1x40x128xf32>
    %3 = vector.shape_cast %2 : vector<1x40x128xf32> to vector<40x128xf32>
    %cst = arith.constant dense<0.000000e+00> : vector<99x128xf32>
    %4 = tpu.matmul %1, %3, %cst {dimension_numbers = #tpu.dot_dimension_numbers<[1], [0], [0], [1], [0, 0, 1, 1], [], []>} : vector<99x40xf32>, vector<40x128xf32>, vector<99x128xf32> -> vector<99x128xf32>
    %c0_5 = arith.constant 0 : index
    %c1 = arith.constant 1 : index
    %c0_6 = arith.constant 0 : index
    %5 = tpu.strided_load %arg1[%c0_5, %c1, %c0_6] {strides = array<i32: 1, 5, 1>} : memref<1x501x40xf32, #tpu.memory_space<vmem>>, vector<1x99x40xf32>
    %6 = vector.shape_cast %5 : vector<1x99x40xf32> to vector<99x40xf32>
    %c1_7 = arith.constant 1 : index
    %c0_8 = arith.constant 0 : index
    %c0_9 = arith.constant 0 : index
    %7 = vector.load %arg2[%c1_7, %c0_8, %c0_9] : memref<10x40x128xf32, #tpu.memory_space<vmem>>, vector<1x40x128xf32>
    %8 = vector.shape_cast %7 : vector<1x40x128xf32> to vector<40x128xf32>
    %cst_10 = arith.constant dense<0.000000e+00> : vector<99x128xf32>
    %9 = tpu.matmul %6, %8, %cst_10 {dimension_numbers = #tpu.dot_dimension_numbers<[1], [0], [0], [1], [0, 0, 1, 1], [], []>} : vector<99x40xf32>, vector<40x128xf32>, vector<99x128xf32> -> vector<99x128xf32>
    %10 = arith.addf %4, %9 : vector<99x128xf32>
    %c0_11 = arith.constant 0 : index
    %c2 = arith.constant 2 : index
    %c0_12 = arith.constant 0 : index
    %11 = tpu.strided_load %arg1[%c0_11, %c2, %c0_12] {strides = array<i32: 1, 5, 1>} : memref<1x501x40xf32, #tpu.memory_space<vmem>>, vector<1x99x40xf32>
    %12 = vector.shape_cast %11 : vector<1x99x40xf32> to vector<99x40xf32>
    %c2_13 = arith.constant 2 : index
    %c0_14 = arith.constant 0 : index
    %c0_15 = arith.constant 0 : index
    %13 = vector.load %arg2[%c2_13, %c0_14, %c0_15] : memref<10x40x128xf32, #tpu.memory_space<vmem>>, vector<1x40x128xf32>
    %14 = vector.shape_cast %13 : vector<1x40x128xf32> to vector<40x128xf32>
    %cst_16 = arith.constant dense<0.000000e+00> : vector<99x128xf32>
    %15 = tpu.matmul %12, %14, %cst_16 {dimension_numbers = #tpu.dot_dimension_numbers<[1], [0], [0], [1], [0, 0, 1, 1], [], []>} : vector<99x40xf32>, vector<40x128xf32>, vector<99x128xf32> -> vector<99x128xf32>
    %16 = arith.addf %10, %15 : vector<99x128xf32>
    %c0_17 = arith.constant 0 : index
    %c3 = arith.constant 3 : index
    %c0_18 = arith.constant 0 : index
    %17 = tpu.strided_load %arg1[%c0_17, %c3, %c0_18] {strides = array<i32: 1, 5, 1>} : memref<1x501x40xf32, #tpu.memory_space<vmem>>, vector<1x99x40xf32>
    %18 = vector.shape_cast %17 : vector<1x99x40xf32> to vector<99x40xf32>
    %c3_19 = arith.constant 3 : index
    %c0_20 = arith.constant 0 : index
    %c0_21 = arith.constant 0 : index
    %19 = vector.load %arg2[%c3_19, %c0_20, %c0_21] : memref<10x40x128xf32, #tpu.memory_space<vmem>>, vector<1x40x128xf32>
    %20 = vector.shape_cast %19 : vector<1x40x128xf32> to vector<40x128xf32>
    %cst_22 = arith.constant dense<0.000000e+00> : vector<99x128xf32>
    %21 = tpu.matmul %18, %20, %cst_22 {dimension_numbers = #tpu.dot_dimension_numbers<[1], [0], [0], [1], [0, 0, 1, 1], [], []>} : vector<99x40xf32>, vector<40x128xf32>, vector<99x128xf32> -> vector<99x128xf32>
    %22 = arith.addf %16, %21 : vector<99x128xf32>
    %c0_23 = arith.constant 0 : index
    %c4 = arith.constant 4 : index
    %c0_24 = arith.constant 0 : index
    %23 = tpu.strided_load %arg1[%c0_23, %c4, %c0_24] {strides = array<i32: 1, 5, 1>} : memref<1x501x40xf32, #tpu.memory_space<vmem>>, vector<1x99x40xf32>
    %24 = vector.shape_cast %23 : vector<1x99x40xf32> to vector<99x40xf32>
    %c4_25 = arith.constant 4 : index
    %c0_26 = arith.constant 0 : index
    %c0_27 = arith.constant 0 : index
    %25 = vector.load %arg2[%c4_25, %c0_26, %c0_27] : memref<10x40x128xf32, #tpu.memory_space<vmem>>, vector<1x40x128xf32>
    %26 = vector.shape_cast %25 : vector<1x40x128xf32> to vector<40x128xf32>
    %cst_28 = arith.constant dense<0.000000e+00> : vector<99x128xf32>
    %27 = tpu.matmul %24, %26, %cst_28 {dimension_numbers = #tpu.dot_dimension_numbers<[1], [0], [0], [1], [0, 0, 1, 1], [], []>} : vector<99x40xf32>, vector<40x128xf32>, vector<99x128xf32> -> vector<99x128xf32>
    %28 = arith.addf %22, %27 : vector<99x128xf32>
    %c0_29 = arith.constant 0 : index
    %c5 = arith.constant 5 : index
    %c0_30 = arith.constant 0 : index
    %29 = tpu.strided_load %arg1[%c0_29, %c5, %c0_30] {strides = array<i32: 1, 5, 1>} : memref<1x501x40xf32, #tpu.memory_space<vmem>>, vector<1x99x40xf32>
    %30 = vector.shape_cast %29 : vector<1x99x40xf32> to vector<99x40xf32>
    %c5_31 = arith.constant 5 : index
    %c0_32 = arith.constant 0 : index
    %c0_33 = arith.constant 0 : index
    %31 = vector.load %arg2[%c5_31, %c0_32, %c0_33] : memref<10x40x128xf32, #tpu.memory_space<vmem>>, vector<1x40x128xf32>
    %32 = vector.shape_cast %31 : vector<1x40x128xf32> to vector<40x128xf32>
    %cst_34 = arith.constant dense<0.000000e+00> : vector<99x128xf32>
    %33 = tpu.matmul %30, %32, %cst_34 {dimension_numbers = #tpu.dot_dimension_numbers<[1], [0], [0], [1], [0, 0, 1, 1], [], []>} : vector<99x40xf32>, vector<40x128xf32>, vector<99x128xf32> -> vector<99x128xf32>
    %34 = arith.addf %28, %33 : vector<99x128xf32>
    %c0_35 = arith.constant 0 : index
    %c6 = arith.constant 6 : index
    %c0_36 = arith.constant 0 : index
    %35 = tpu.strided_load %arg1[%c0_35, %c6, %c0_36] {strides = array<i32: 1, 5, 1>} : memref<1x501x40xf32, #tpu.memory_space<vmem>>, vector<1x99x40xf32>
    %36 = vector.shape_cast %35 : vector<1x99x40xf32> to vector<99x40xf32>
    %c6_37 = arith.constant 6 : index
    %c0_38 = arith.constant 0 : index
    %c0_39 = arith.constant 0 : index
    %37 = vector.load %arg2[%c6_37, %c0_38, %c0_39] : memref<10x40x128xf32, #tpu.memory_space<vmem>>, vector<1x40x128xf32>
    %38 = vector.shape_cast %37 : vector<1x40x128xf32> to vector<40x128xf32>
    %cst_40 = arith.constant dense<0.000000e+00> : vector<99x128xf32>
    %39 = tpu.matmul %36, %38, %cst_40 {dimension_numbers = #tpu.dot_dimension_numbers<[1], [0], [0], [1], [0, 0, 1, 1], [], []>} : vector<99x40xf32>, vector<40x128xf32>, vector<99x128xf32> -> vector<99x128xf32>
    %40 = arith.addf %34, %39 : vector<99x128xf32>
    %c0_41 = arith.constant 0 : index
    %c7 = arith.constant 7 : index
    %c0_42 = arith.constant 0 : index
    %41 = tpu.strided_load %arg1[%c0_41, %c7, %c0_42] {strides = array<i32: 1, 5, 1>} : memref<1x501x40xf32, #tpu.memory_space<vmem>>, vector<1x99x40xf32>
    %42 = vector.shape_cast %41 : vector<1x99x40xf32> to vector<99x40xf32>
    %c7_43 = arith.constant 7 : index
    %c0_44 = arith.constant 0 : index
    %c0_45 = arith.constant 0 : index
    %43 = vector.load %arg2[%c7_43, %c0_44, %c0_45] : memref<10x40x128xf32, #tpu.memory_space<vmem>>, vector<1x40x128xf32>
    %44 = vector.shape_cast %43 : vector<1x40x128xf32> to vector<40x128xf32>
    %cst_46 = arith.constant dense<0.000000e+00> : vector<99x128xf32>
    %45 = tpu.matmul %42, %44, %cst_46 {dimension_numbers = #tpu.dot_dimension_numbers<[1], [0], [0], [1], [0, 0, 1, 1], [], []>} : vector<99x40xf32>, vector<40x128xf32>, vector<99x128xf32> -> vector<99x128xf32>
    %46 = arith.addf %40, %45 : vector<99x128xf32>
    %c0_47 = arith.constant 0 : index
    %c8 = arith.constant 8 : index
    %c0_48 = arith.constant 0 : index
    %47 = tpu.strided_load %arg1[%c0_47, %c8, %c0_48] {strides = array<i32: 1, 5, 1>} : memref<1x501x40xf32, #tpu.memory_space<vmem>>, vector<1x99x40xf32>
    %48 = vector.shape_cast %47 : vector<1x99x40xf32> to vector<99x40xf32>
    %c8_49 = arith.constant 8 : index
    %c0_50 = arith.constant 0 : index
    %c0_51 = arith.constant 0 : index
    %49 = vector.load %arg2[%c8_49, %c0_50, %c0_51] : memref<10x40x128xf32, #tpu.memory_space<vmem>>, vector<1x40x128xf32>
    %50 = vector.shape_cast %49 : vector<1x40x128xf32> to vector<40x128xf32>
    %cst_52 = arith.constant dense<0.000000e+00> : vector<99x128xf32>
    %51 = tpu.matmul %48, %50, %cst_52 {dimension_numbers = #tpu.dot_dimension_numbers<[1], [0], [0], [1], [0, 0, 1, 1], [], []>} : vector<99x40xf32>, vector<40x128xf32>, vector<99x128xf32> -> vector<99x128xf32>
    %52 = arith.addf %46, %51 : vector<99x128xf32>
    %c0_53 = arith.constant 0 : index
    %c9 = arith.constant 9 : index
    %c0_54 = arith.constant 0 : index
    %53 = tpu.strided_load %arg1[%c0_53, %c9, %c0_54] {strides = array<i32: 1, 5, 1>} : memref<1x501x40xf32, #tpu.memory_space<vmem>>, vector<1x99x40xf32>
    %54 = vector.shape_cast %53 : vector<1x99x40xf32> to vector<99x40xf32>
    %c9_55 = arith.constant 9 : index
    %c0_56 = arith.constant 0 : index
    %c0_57 = arith.constant 0 : index
    %55 = vector.load %arg2[%c9_55, %c0_56, %c0_57] : memref<10x40x128xf32, #tpu.memory_space<vmem>>, vector<1x40x128xf32>
    %56 = vector.shape_cast %55 : vector<1x40x128xf32> to vector<40x128xf32>
    %cst_58 = arith.constant dense<0.000000e+00> : vector<99x128xf32>
    %57 = tpu.matmul %54, %56, %cst_58 {dimension_numbers = #tpu.dot_dimension_numbers<[1], [0], [0], [1], [0, 0, 1, 1], [], []>} : vector<99x40xf32>, vector<40x128xf32>, vector<99x128xf32> -> vector<99x128xf32>
    %58 = arith.addf %52, %57 : vector<99x128xf32>
    %c0_59 = arith.constant 0 : index
    %c0_60 = arith.constant 0 : index
    %59 = vector.load %arg3[%c0_59, %c0_60] : memref<3x128xf32, #tpu.memory_space<vmem>>, vector<1x128xf32>
    %60 = vector.broadcast %59 : vector<1x128xf32> to vector<99x128xf32>
    %61 = arith.addf %58, %60 : vector<99x128xf32>
    %cst_61 = arith.constant 0.000000e+00 : f32
    %62 = vector.broadcast %cst_61 : f32 to vector<99x128xf32>
    %63 = arith.maximumf %61, %62 : vector<99x128xf32>
    %c1_62 = arith.constant 1 : index
    %c0_63 = arith.constant 0 : index
    %64 = vector.load %arg3[%c1_62, %c0_63] : memref<3x128xf32, #tpu.memory_space<vmem>>, vector<1x128xf32>
    %65 = vector.broadcast %64 : vector<1x128xf32> to vector<99x128xf32>
    %66 = arith.mulf %63, %65 : vector<99x128xf32>
    %c2_64 = arith.constant 2 : index
    %c0_65 = arith.constant 0 : index
    %67 = vector.load %arg3[%c2_64, %c0_65] : memref<3x128xf32, #tpu.memory_space<vmem>>, vector<1x128xf32>
    %68 = vector.broadcast %67 : vector<1x128xf32> to vector<99x128xf32>
    %69 = arith.addf %66, %68 : vector<99x128xf32>
    %c0_66 = arith.constant 0 : index
    %c0_67 = arith.constant 0 : index
    %70 = vector.load %arg13[%c0_66, %c0_67] : memref<99x128xf32, #tpu.memory_space<vmem>>, vector<99x128xf32>
    tpu.vector_store %arg13[%c0_66, %c0_67], %69 {strides = array<i32>} : memref<99x128xf32, #tpu.memory_space<vmem>>, vector<99x128xf32>,
    %c0_68 = arith.constant 0 : index
    %c0_69 = arith.constant 0 : index
    %71 = tpu.strided_load %arg13[%c0_68, %c0_69] {strides = array<i32: 5, 1>} : memref<99x128xf32, #tpu.memory_space<vmem>>, vector<18x128xf32>
    %c0_70 = arith.constant 0 : index
    %c0_71 = arith.constant 0 : index
    %c0_72 = arith.constant 0 : index
    %72 = vector.load %arg4[%c0_70, %c0_71, %c0_72] : memref<10x128x128xf32, #tpu.memory_space<vmem>>, vector<1x128x128xf32>
    %73 = vector.shape_cast %72 : vector<1x128x128xf32> to vector<128x128xf32>
    %cst_73 = arith.constant dense<0.000000e+00> : vector<18x128xf32>
    %74 = tpu.matmul %71, %73, %cst_73 {dimension_numbers = #tpu.dot_dimension_numbers<[1], [0], [0], [1], [0, 0, 1, 1], [], []>} : vector<18x128xf32>, vector<128x128xf32>, vector<18x128xf32> -> vector<18x128xf32>
    %c1_74 = arith.constant 1 : index
    %c0_75 = arith.constant 0 : index
    %75 = tpu.strided_load %arg13[%c1_74, %c0_75] {strides = array<i32: 5, 1>} : memref<99x128xf32, #tpu.memory_space<vmem>>, vector<18x128xf32>
    %c1_76 = arith.constant 1 : index
    %c0_77 = arith.constant 0 : index
    %c0_78 = arith.constant 0 : index
    %76 = vector.load %arg4[%c1_76, %c0_77, %c0_78] : memref<10x128x128xf32, #tpu.memory_space<vmem>>, vector<1x128x128xf32>
    %77 = vector.shape_cast %76 : vector<1x128x128xf32> to vector<128x128xf32>
    %cst_79 = arith.constant dense<0.000000e+00> : vector<18x128xf32>
    %78 = tpu.matmul %75, %77, %cst_79 {dimension_numbers = #tpu.dot_dimension_numbers<[1], [0], [0], [1], [0, 0, 1, 1], [], []>} : vector<18x128xf32>, vector<128x128xf32>, vector<18x128xf32> -> vector<18x128xf32>
    %79 = arith.addf %74, %78 : vector<18x128xf32>
    %c2_80 = arith.constant 2 : index
    %c0_81 = arith.constant 0 : index
    %80 = tpu.strided_load %arg13[%c2_80, %c0_81] {strides = array<i32: 5, 1>} : memref<99x128xf32, #tpu.memory_space<vmem>>, vector<18x128xf32>
    %c2_82 = arith.constant 2 : index
    %c0_83 = arith.constant 0 : index
    %c0_84 = arith.constant 0 : index
    %81 = vector.load %arg4[%c2_82, %c0_83, %c0_84] : memref<10x128x128xf32, #tpu.memory_space<vmem>>, vector<1x128x128xf32>
    %82 = vector.shape_cast %81 : vector<1x128x128xf32> to vector<128x128xf32>
    %cst_85 = arith.constant dense<0.000000e+00> : vector<18x128xf32>
    %83 = tpu.matmul %80, %82, %cst_85 {dimension_numbers = #tpu.dot_dimension_numbers<[1], [0], [0], [1], [0, 0, 1, 1], [], []>} : vector<18x128xf32>, vector<128x128xf32>, vector<18x128xf32> -> vector<18x128xf32>
    %84 = arith.addf %79, %83 : vector<18x128xf32>
    %c3_86 = arith.constant 3 : index
    %c0_87 = arith.constant 0 : index
    %85 = tpu.strided_load %arg13[%c3_86, %c0_87] {strides = array<i32: 5, 1>} : memref<99x128xf32, #tpu.memory_space<vmem>>, vector<18x128xf32>
    %c3_88 = arith.constant 3 : index
    %c0_89 = arith.constant 0 : index
    %c0_90 = arith.constant 0 : index
    %86 = vector.load %arg4[%c3_88, %c0_89, %c0_90] : memref<10x128x128xf32, #tpu.memory_space<vmem>>, vector<1x128x128xf32>
    %87 = vector.shape_cast %86 : vector<1x128x128xf32> to vector<128x128xf32>
    %cst_91 = arith.constant dense<0.000000e+00> : vector<18x128xf32>
    %88 = tpu.matmul %85, %87, %cst_91 {dimension_numbers = #tpu.dot_dimension_numbers<[1], [0], [0], [1], [0, 0, 1, 1], [], []>} : vector<18x128xf32>, vector<128x128xf32>, vector<18x128xf32> -> vector<18x128xf32>
    %89 = arith.addf %84, %88 : vector<18x128xf32>
    %c4_92 = arith.constant 4 : index
    %c0_93 = arith.constant 0 : index
    %90 = tpu.strided_load %arg13[%c4_92, %c0_93] {strides = array<i32: 5, 1>} : memref<99x128xf32, #tpu.memory_space<vmem>>, vector<18x128xf32>
    %c4_94 = arith.constant 4 : index
    %c0_95 = arith.constant 0 : index
    %c0_96 = arith.constant 0 : index
    %91 = vector.load %arg4[%c4_94, %c0_95, %c0_96] : memref<10x128x128xf32, #tpu.memory_space<vmem>>, vector<1x128x128xf32>
    %92 = vector.shape_cast %91 : vector<1x128x128xf32> to vector<128x128xf32>
    %cst_97 = arith.constant dense<0.000000e+00> : vector<18x128xf32>
    %93 = tpu.matmul %90, %92, %cst_97 {dimension_numbers = #tpu.dot_dimension_numbers<[1], [0], [0], [1], [0, 0, 1, 1], [], []>} : vector<18x128xf32>, vector<128x128xf32>, vector<18x128xf32> -> vector<18x128xf32>
    %94 = arith.addf %89, %93 : vector<18x128xf32>
    %c5_98 = arith.constant 5 : index
    %c0_99 = arith.constant 0 : index
    %95 = tpu.strided_load %arg13[%c5_98, %c0_99] {strides = array<i32: 5, 1>} : memref<99x128xf32, #tpu.memory_space<vmem>>, vector<18x128xf32>
    %c5_100 = arith.constant 5 : index
    %c0_101 = arith.constant 0 : index
    %c0_102 = arith.constant 0 : index
    %96 = vector.load %arg4[%c5_100, %c0_101, %c0_102] : memref<10x128x128xf32, #tpu.memory_space<vmem>>, vector<1x128x128xf32>
    %97 = vector.shape_cast %96 : vector<1x128x128xf32> to vector<128x128xf32>
    %cst_103 = arith.constant dense<0.000000e+00> : vector<18x128xf32>
    %98 = tpu.matmul %95, %97, %cst_103 {dimension_numbers = #tpu.dot_dimension_numbers<[1], [0], [0], [1], [0, 0, 1, 1], [], []>} : vector<18x128xf32>, vector<128x128xf32>, vector<18x128xf32> -> vector<18x128xf32>
    %99 = arith.addf %94, %98 : vector<18x128xf32>
    %c6_104 = arith.constant 6 : index
    %c0_105 = arith.constant 0 : index
    %100 = tpu.strided_load %arg13[%c6_104, %c0_105] {strides = array<i32: 5, 1>} : memref<99x128xf32, #tpu.memory_space<vmem>>, vector<18x128xf32>
    %c6_106 = arith.constant 6 : index
    %c0_107 = arith.constant 0 : index
    %c0_108 = arith.constant 0 : index
    %101 = vector.load %arg4[%c6_106, %c0_107, %c0_108] : memref<10x128x128xf32, #tpu.memory_space<vmem>>, vector<1x128x128xf32>
    %102 = vector.shape_cast %101 : vector<1x128x128xf32> to vector<128x128xf32>
    %cst_109 = arith.constant dense<0.000000e+00> : vector<18x128xf32>
    %103 = tpu.matmul %100, %102, %cst_109 {dimension_numbers = #tpu.dot_dimension_numbers<[1], [0], [0], [1], [0, 0, 1, 1], [], []>} : vector<18x128xf32>, vector<128x128xf32>, vector<18x128xf32> -> vector<18x128xf32>
    %104 = arith.addf %99, %103 : vector<18x128xf32>
    %c7_110 = arith.constant 7 : index
    %c0_111 = arith.constant 0 : index
    %105 = tpu.strided_load %arg13[%c7_110, %c0_111] {strides = array<i32: 5, 1>} : memref<99x128xf32, #tpu.memory_space<vmem>>, vector<18x128xf32>
    %c7_112 = arith.constant 7 : index
    %c0_113 = arith.constant 0 : index
    %c0_114 = arith.constant 0 : index
    %106 = vector.load %arg4[%c7_112, %c0_113, %c0_114] : memref<10x128x128xf32, #tpu.memory_space<vmem>>, vector<1x128x128xf32>
    %107 = vector.shape_cast %106 : vector<1x128x128xf32> to vector<128x128xf32>
    %cst_115 = arith.constant dense<0.000000e+00> : vector<18x128xf32>
    %108 = tpu.matmul %105, %107, %cst_115 {dimension_numbers = #tpu.dot_dimension_numbers<[1], [0], [0], [1], [0, 0, 1, 1], [], []>} : vector<18x128xf32>, vector<128x128xf32>, vector<18x128xf32> -> vector<18x128xf32>
    %109 = arith.addf %104, %108 : vector<18x128xf32>
    %c8_116 = arith.constant 8 : index
    %c0_117 = arith.constant 0 : index
    %110 = tpu.strided_load %arg13[%c8_116, %c0_117] {strides = array<i32: 5, 1>} : memref<99x128xf32, #tpu.memory_space<vmem>>, vector<18x128xf32>
    %c8_118 = arith.constant 8 : index
    %c0_119 = arith.constant 0 : index
    %c0_120 = arith.constant 0 : index
    %111 = vector.load %arg4[%c8_118, %c0_119, %c0_120] : memref<10x128x128xf32, #tpu.memory_space<vmem>>, vector<1x128x128xf32>
    %112 = vector.shape_cast %111 : vector<1x128x128xf32> to vector<128x128xf32>
    %cst_121 = arith.constant dense<0.000000e+00> : vector<18x128xf32>
    %113 = tpu.matmul %110, %112, %cst_121 {dimension_numbers = #tpu.dot_dimension_numbers<[1], [0], [0], [1], [0, 0, 1, 1], [], []>} : vector<18x128xf32>, vector<128x128xf32>, vector<18x128xf32> -> vector<18x128xf32>
    %114 = arith.addf %109, %113 : vector<18x128xf32>
    %c9_122 = arith.constant 9 : index
    %c0_123 = arith.constant 0 : index
    %115 = tpu.strided_load %arg13[%c9_122, %c0_123] {strides = array<i32: 5, 1>} : memref<99x128xf32, #tpu.memory_space<vmem>>, vector<18x128xf32>
    %c9_124 = arith.constant 9 : index
    %c0_125 = arith.constant 0 : index
    %c0_126 = arith.constant 0 : index
    %116 = vector.load %arg4[%c9_124, %c0_125, %c0_126] : memref<10x128x128xf32, #tpu.memory_space<vmem>>, vector<1x128x128xf32>
    %117 = vector.shape_cast %116 : vector<1x128x128xf32> to vector<128x128xf32>
    %cst_127 = arith.constant dense<0.000000e+00> : vector<18x128xf32>
    %118 = tpu.matmul %115, %117, %cst_127 {dimension_numbers = #tpu.dot_dimension_numbers<[1], [0], [0], [1], [0, 0, 1, 1], [], []>} : vector<18x128xf32>, vector<128x128xf32>, vector<18x128xf32> -> vector<18x128xf32>
    %119 = arith.addf %114, %118 : vector<18x128xf32>
    %c0_128 = arith.constant 0 : index
    %c0_129 = arith.constant 0 : index
    %120 = vector.load %arg5[%c0_128, %c0_129] : memref<3x128xf32, #tpu.memory_space<vmem>>, vector<1x128xf32>
    %121 = vector.broadcast %120 : vector<1x128xf32> to vector<18x128xf32>
    %122 = arith.addf %119, %121 : vector<18x128xf32>
    %cst_130 = arith.constant 0.000000e+00 : f32
    %123 = vector.broadcast %cst_130 : f32 to vector<18x128xf32>
    %124 = arith.maximumf %122, %123 : vector<18x128xf32>
    %c1_131 = arith.constant 1 : index
    %c0_132 = arith.constant 0 : index
    %125 = vector.load %arg5[%c1_131, %c0_132] : memref<3x128xf32, #tpu.memory_space<vmem>>, vector<1x128xf32>
    %126 = vector.broadcast %125 : vector<1x128xf32> to vector<18x128xf32>
    %127 = arith.mulf %124, %126 : vector<18x128xf32>
    %c2_133 = arith.constant 2 : index
    %c0_134 = arith.constant 0 : index
    %128 = vector.load %arg5[%c2_133, %c0_134] : memref<3x128xf32, #tpu.memory_space<vmem>>, vector<1x128xf32>
    %129 = vector.broadcast %128 : vector<1x128xf32> to vector<18x128xf32>
    %130 = arith.addf %127, %129 : vector<18x128xf32>
    %c0_135 = arith.constant 0 : index
    %c0_136 = arith.constant 0 : index
    %131 = vector.load %arg14[%c0_135, %c0_136] : memref<18x128xf32, #tpu.memory_space<vmem>>, vector<18x128xf32>
    tpu.vector_store %arg14[%c0_135, %c0_136], %130 {strides = array<i32>} : memref<18x128xf32, #tpu.memory_space<vmem>>, vector<18x128xf32>,
    %c0_137 = arith.constant 0 : index
    %c0_138 = arith.constant 0 : index
    %132 = tpu.strided_load %arg14[%c0_137, %c0_138] {strides = array<i32: 5, 1>} : memref<18x128xf32, #tpu.memory_space<vmem>>, vector<2x128xf32>
    %c0_139 = arith.constant 0 : index
    %c0_140 = arith.constant 0 : index
    %c0_141 = arith.constant 0 : index
    %133 = vector.load %arg6[%c0_139, %c0_140, %c0_141] : memref<10x128x128xf32, #tpu.memory_space<vmem>>, vector<1x128x128xf32>
    %134 = vector.shape_cast %133 : vector<1x128x128xf32> to vector<128x128xf32>
    %cst_142 = arith.constant dense<0.000000e+00> : vector<2x128xf32>
    %135 = tpu.matmul %132, %134, %cst_142 {dimension_numbers = #tpu.dot_dimension_numbers<[1], [0], [0], [1], [0, 0, 1, 1], [], []>} : vector<2x128xf32>, vector<128x128xf32>, vector<2x128xf32> -> vector<2x128xf32>
    %c1_143 = arith.constant 1 : index
    %c0_144 = arith.constant 0 : index
    %136 = tpu.strided_load %arg14[%c1_143, %c0_144] {strides = array<i32: 5, 1>} : memref<18x128xf32, #tpu.memory_space<vmem>>, vector<2x128xf32>
    %c1_145 = arith.constant 1 : index
    %c0_146 = arith.constant 0 : index
    %c0_147 = arith.constant 0 : index
    %137 = vector.load %arg6[%c1_145, %c0_146, %c0_147] : memref<10x128x128xf32, #tpu.memory_space<vmem>>, vector<1x128x128xf32>
    %138 = vector.shape_cast %137 : vector<1x128x128xf32> to vector<128x128xf32>
    %cst_148 = arith.constant dense<0.000000e+00> : vector<2x128xf32>
    %139 = tpu.matmul %136, %138, %cst_148 {dimension_numbers = #tpu.dot_dimension_numbers<[1], [0], [0], [1], [0, 0, 1, 1], [], []>} : vector<2x128xf32>, vector<128x128xf32>, vector<2x128xf32> -> vector<2x128xf32>
    %140 = arith.addf %135, %139 : vector<2x128xf32>
    %c2_149 = arith.constant 2 : index
    %c0_150 = arith.constant 0 : index
    %141 = tpu.strided_load %arg14[%c2_149, %c0_150] {strides = array<i32: 5, 1>} : memref<18x128xf32, #tpu.memory_space<vmem>>, vector<2x128xf32>
    %c2_151 = arith.constant 2 : index
    %c0_152 = arith.constant 0 : index
    %c0_153 = arith.constant 0 : index
    %142 = vector.load %arg6[%c2_151, %c0_152, %c0_153] : memref<10x128x128xf32, #tpu.memory_space<vmem>>, vector<1x128x128xf32>
    %143 = vector.shape_cast %142 : vector<1x128x128xf32> to vector<128x128xf32>
    %cst_154 = arith.constant dense<0.000000e+00> : vector<2x128xf32>
    %144 = tpu.matmul %141, %143, %cst_154 {dimension_numbers = #tpu.dot_dimension_numbers<[1], [0], [0], [1], [0, 0, 1, 1], [], []>} : vector<2x128xf32>, vector<128x128xf32>, vector<2x128xf32> -> vector<2x128xf32>
    %145 = arith.addf %140, %144 : vector<2x128xf32>
    %c3_155 = arith.constant 3 : index
    %c0_156 = arith.constant 0 : index
    %146 = tpu.strided_load %arg14[%c3_155, %c0_156] {strides = array<i32: 5, 1>} : memref<18x128xf32, #tpu.memory_space<vmem>>, vector<2x128xf32>
    %c3_157 = arith.constant 3 : index
    %c0_158 = arith.constant 0 : index
    %c0_159 = arith.constant 0 : index
    %147 = vector.load %arg6[%c3_157, %c0_158, %c0_159] : memref<10x128x128xf32, #tpu.memory_space<vmem>>, vector<1x128x128xf32>
    %148 = vector.shape_cast %147 : vector<1x128x128xf32> to vector<128x128xf32>
    %cst_160 = arith.constant dense<0.000000e+00> : vector<2x128xf32>
    %149 = tpu.matmul %146, %148, %cst_160 {dimension_numbers = #tpu.dot_dimension_numbers<[1], [0], [0], [1], [0, 0, 1, 1], [], []>} : vector<2x128xf32>, vector<128x128xf32>, vector<2x128xf32> -> vector<2x128xf32>
    %150 = arith.addf %145, %149 : vector<2x128xf32>
    %c4_161 = arith.constant 4 : index
    %c0_162 = arith.constant 0 : index
    %151 = tpu.strided_load %arg14[%c4_161, %c0_162] {strides = array<i32: 5, 1>} : memref<18x128xf32, #tpu.memory_space<vmem>>, vector<2x128xf32>
    %c4_163 = arith.constant 4 : index
    %c0_164 = arith.constant 0 : index
    %c0_165 = arith.constant 0 : index
    %152 = vector.load %arg6[%c4_163, %c0_164, %c0_165] : memref<10x128x128xf32, #tpu.memory_space<vmem>>, vector<1x128x128xf32>
    %153 = vector.shape_cast %152 : vector<1x128x128xf32> to vector<128x128xf32>
    %cst_166 = arith.constant dense<0.000000e+00> : vector<2x128xf32>
    %154 = tpu.matmul %151, %153, %cst_166 {dimension_numbers = #tpu.dot_dimension_numbers<[1], [0], [0], [1], [0, 0, 1, 1], [], []>} : vector<2x128xf32>, vector<128x128xf32>, vector<2x128xf32> -> vector<2x128xf32>
    %155 = arith.addf %150, %154 : vector<2x128xf32>
    %c5_167 = arith.constant 5 : index
    %c0_168 = arith.constant 0 : index
    %156 = tpu.strided_load %arg14[%c5_167, %c0_168] {strides = array<i32: 5, 1>} : memref<18x128xf32, #tpu.memory_space<vmem>>, vector<2x128xf32>
    %c5_169 = arith.constant 5 : index
    %c0_170 = arith.constant 0 : index
    %c0_171 = arith.constant 0 : index
    %157 = vector.load %arg6[%c5_169, %c0_170, %c0_171] : memref<10x128x128xf32, #tpu.memory_space<vmem>>, vector<1x128x128xf32>
    %158 = vector.shape_cast %157 : vector<1x128x128xf32> to vector<128x128xf32>
    %cst_172 = arith.constant dense<0.000000e+00> : vector<2x128xf32>
    %159 = tpu.matmul %156, %158, %cst_172 {dimension_numbers = #tpu.dot_dimension_numbers<[1], [0], [0], [1], [0, 0, 1, 1], [], []>} : vector<2x128xf32>, vector<128x128xf32>, vector<2x128xf32> -> vector<2x128xf32>
    %160 = arith.addf %155, %159 : vector<2x128xf32>
    %c6_173 = arith.constant 6 : index
    %c0_174 = arith.constant 0 : index
    %161 = tpu.strided_load %arg14[%c6_173, %c0_174] {strides = array<i32: 5, 1>} : memref<18x128xf32, #tpu.memory_space<vmem>>, vector<2x128xf32>
    %c6_175 = arith.constant 6 : index
    %c0_176 = arith.constant 0 : index
    %c0_177 = arith.constant 0 : index
    %162 = vector.load %arg6[%c6_175, %c0_176, %c0_177] : memref<10x128x128xf32, #tpu.memory_space<vmem>>, vector<1x128x128xf32>
    %163 = vector.shape_cast %162 : vector<1x128x128xf32> to vector<128x128xf32>
    %cst_178 = arith.constant dense<0.000000e+00> : vector<2x128xf32>
    %164 = tpu.matmul %161, %163, %cst_178 {dimension_numbers = #tpu.dot_dimension_numbers<[1], [0], [0], [1], [0, 0, 1, 1], [], []>} : vector<2x128xf32>, vector<128x128xf32>, vector<2x128xf32> -> vector<2x128xf32>
    %165 = arith.addf %160, %164 : vector<2x128xf32>
    %c7_179 = arith.constant 7 : index
    %c0_180 = arith.constant 0 : index
    %166 = tpu.strided_load %arg14[%c7_179, %c0_180] {strides = array<i32: 5, 1>} : memref<18x128xf32, #tpu.memory_space<vmem>>, vector<2x128xf32>
    %c7_181 = arith.constant 7 : index
    %c0_182 = arith.constant 0 : index
    %c0_183 = arith.constant 0 : index
    %167 = vector.load %arg6[%c7_181, %c0_182, %c0_183] : memref<10x128x128xf32, #tpu.memory_space<vmem>>, vector<1x128x128xf32>
    %168 = vector.shape_cast %167 : vector<1x128x128xf32> to vector<128x128xf32>
    %cst_184 = arith.constant dense<0.000000e+00> : vector<2x128xf32>
    %169 = tpu.matmul %166, %168, %cst_184 {dimension_numbers = #tpu.dot_dimension_numbers<[1], [0], [0], [1], [0, 0, 1, 1], [], []>} : vector<2x128xf32>, vector<128x128xf32>, vector<2x128xf32> -> vector<2x128xf32>
    %170 = arith.addf %165, %169 : vector<2x128xf32>
    %c8_185 = arith.constant 8 : index
    %c0_186 = arith.constant 0 : index
    %171 = tpu.strided_load %arg14[%c8_185, %c0_186] {strides = array<i32: 5, 1>} : memref<18x128xf32, #tpu.memory_space<vmem>>, vector<2x128xf32>
    %c8_187 = arith.constant 8 : index
    %c0_188 = arith.constant 0 : index
    %c0_189 = arith.constant 0 : index
    %172 = vector.load %arg6[%c8_187, %c0_188, %c0_189] : memref<10x128x128xf32, #tpu.memory_space<vmem>>, vector<1x128x128xf32>
    %173 = vector.shape_cast %172 : vector<1x128x128xf32> to vector<128x128xf32>
    %cst_190 = arith.constant dense<0.000000e+00> : vector<2x128xf32>
    %174 = tpu.matmul %171, %173, %cst_190 {dimension_numbers = #tpu.dot_dimension_numbers<[1], [0], [0], [1], [0, 0, 1, 1], [], []>} : vector<2x128xf32>, vector<128x128xf32>, vector<2x128xf32> -> vector<2x128xf32>
    %175 = arith.addf %170, %174 : vector<2x128xf32>
    %c9_191 = arith.constant 9 : index
    %c0_192 = arith.constant 0 : index
    %176 = tpu.strided_load %arg14[%c9_191, %c0_192] {strides = array<i32: 5, 1>} : memref<18x128xf32, #tpu.memory_space<vmem>>, vector<2x128xf32>
    %c9_193 = arith.constant 9 : index
    %c0_194 = arith.constant 0 : index
    %c0_195 = arith.constant 0 : index
    %177 = vector.load %arg6[%c9_193, %c0_194, %c0_195] : memref<10x128x128xf32, #tpu.memory_space<vmem>>, vector<1x128x128xf32>
    %178 = vector.shape_cast %177 : vector<1x128x128xf32> to vector<128x128xf32>
    %cst_196 = arith.constant dense<0.000000e+00> : vector<2x128xf32>
    %179 = tpu.matmul %176, %178, %cst_196 {dimension_numbers = #tpu.dot_dimension_numbers<[1], [0], [0], [1], [0, 0, 1, 1], [], []>} : vector<2x128xf32>, vector<128x128xf32>, vector<2x128xf32> -> vector<2x128xf32>
    %180 = arith.addf %175, %179 : vector<2x128xf32>
    %c0_197 = arith.constant 0 : index
    %c0_198 = arith.constant 0 : index
    %181 = vector.load %arg7[%c0_197, %c0_198] : memref<3x128xf32, #tpu.memory_space<vmem>>, vector<1x128xf32>
    %182 = vector.broadcast %181 : vector<1x128xf32> to vector<2x128xf32>
    %183 = arith.addf %180, %182 : vector<2x128xf32>
    %cst_199 = arith.constant 0.000000e+00 : f32
    %184 = vector.broadcast %cst_199 : f32 to vector<2x128xf32>
    %185 = arith.maximumf %183, %184 : vector<2x128xf32>
    %c1_200 = arith.constant 1 : index
    %c0_201 = arith.constant 0 : index
    %186 = vector.load %arg7[%c1_200, %c0_201] : memref<3x128xf32, #tpu.memory_space<vmem>>, vector<1x128xf32>
    %187 = vector.broadcast %186 : vector<1x128xf32> to vector<2x128xf32>
    %188 = arith.mulf %185, %187 : vector<2x128xf32>
    %c2_202 = arith.constant 2 : index
    %c0_203 = arith.constant 0 : index
    %189 = vector.load %arg7[%c2_202, %c0_203] : memref<3x128xf32, #tpu.memory_space<vmem>>, vector<1x128xf32>
    %190 = vector.broadcast %189 : vector<1x128xf32> to vector<2x128xf32>
    %191 = arith.addf %188, %190 : vector<2x128xf32>
    %c0_204 = arith.constant 0 : index
    %c0_205 = arith.constant 0 : index
    %192 = vector.load %arg9[%c0_204, %c0_205] : memref<1x128xf32, #tpu.memory_space<vmem>>, vector<1x128xf32>
    %193 = vector.extract_strided_slice %191 {offsets = [0, 0], sizes = [1, 128], strides = [1, 1]} : vector<2x128xf32> to vector<1x128xf32>
    %c0_206 = arith.constant 0 : index
    %c0_207 = arith.constant 0 : index
    %c0_208 = arith.constant 0 : index
    %194 = vector.load %arg8[%c0_206, %c0_207, %c0_208] : memref<2x128x128xf32, #tpu.memory_space<vmem>>, vector<1x128x128xf32>
    %195 = vector.shape_cast %194 : vector<1x128x128xf32> to vector<128x128xf32>
    %cst_209 = arith.constant dense<0.000000e+00> : vector<1x128xf32>
    %196 = tpu.matmul %193, %195, %cst_209 {dimension_numbers = #tpu.dot_dimension_numbers<[1], [0], [0], [1], [0, 0, 1, 1], [], []>} : vector<1x128xf32>, vector<128x128xf32>, vector<1x128xf32> -> vector<1x128xf32>
    %197 = arith.addf %192, %196 : vector<1x128xf32>
    %198 = vector.extract_strided_slice %191 {offsets = [1, 0], sizes = [1, 128], strides = [1, 1]} : vector<2x128xf32> to vector<1x128xf32>
    %c1_210 = arith.constant 1 : index
    %c0_211 = arith.constant 0 : index
    %c0_212 = arith.constant 0 : index
    %199 = vector.load %arg8[%c1_210, %c0_211, %c0_212] : memref<2x128x128xf32, #tpu.memory_space<vmem>>, vector<1x128x128xf32>
    %200 = vector.shape_cast %199 : vector<1x128x128xf32> to vector<128x128xf32>
    %cst_213 = arith.constant dense<0.000000e+00> : vector<1x128xf32>
    %201 = tpu.matmul %198, %200, %cst_213 {dimension_numbers = #tpu.dot_dimension_numbers<[1], [0], [0], [1], [0, 0, 1, 1], [], []>} : vector<1x128xf32>, vector<128x128xf32>, vector<1x128xf32> -> vector<1x128xf32>
    %202 = arith.addf %197, %201 : vector<1x128xf32>
    %cst_214 = arith.constant 0.000000e+00 : f32
    %203 = vector.broadcast %cst_214 : f32 to vector<1x128xf32>
    %204 = arith.maximumf %202, %203 : vector<1x128xf32>
    %c0_215 = arith.constant 0 : index
    %c0_216 = arith.constant 0 : index
    %205 = vector.load %arg10[%c0_215, %c0_216] : memref<128x128xf32, #tpu.memory_space<vmem>>, vector<128x128xf32>
    %cst_217 = arith.constant dense<0.000000e+00> : vector<1x128xf32>
    %206 = tpu.matmul %204, %205, %cst_217 {dimension_numbers = #tpu.dot_dimension_numbers<[1], [0], [0], [1], [0, 0, 1, 1], [], []>} : vector<1x128xf32>, vector<128x128xf32>, vector<1x128xf32> -> vector<1x128xf32>
    %c0_218 = arith.constant 0 : index
    %c0_219 = arith.constant 0 : index
    %207 = vector.load %arg11[%c0_218, %c0_219] : memref<1x128xf32, #tpu.memory_space<vmem>>, vector<1x128xf32>
    %208 = arith.addf %206, %207 : vector<1x128xf32>
    %c0_220 = arith.constant 0 : index
    %c0_221 = arith.constant 0 : index
    %c0_222 = arith.constant 0 : index
    %209 = vector.load %arg12[%c0_220, %c0_221, %c0_222] : memref<1x1x128xf32, #tpu.memory_space<vmem>>, vector<1x1x128xf32>
    %210 = vector.shape_cast %209 : vector<1x1x128xf32> to vector<1x128xf32>
    %211 = vector.shape_cast %208 : vector<1x128xf32> to vector<1x1x128xf32>
    tpu.vector_store %arg12[%c0_220, %c0_221, %c0_222], %211 {strides = array<i32>} : memref<1x1x128xf32, #tpu.memory_space<vmem>>, vector<1x1x128xf32>,
    return
  }
  func.func @transform_0(%arg0: i32) -> (i32, i32, i32) {
    %c0_i32 = arith.constant 0 : i32
    %c0_i32_0 = arith.constant 0 : i32
    %c0_i32_1 = arith.constant 0 : i32
    return %arg0, %c0_i32, %c0_i32_0 : i32, i32, i32
  }
  func.func @transform_1(%arg0: i32) -> (i32, i32, i32) {
    %c0_i32 = arith.constant 0 : i32
    %c0_i32_0 = arith.constant 0 : i32
    %c0_i32_1 = arith.constant 0 : i32
    %c0_i32_2 = arith.constant 0 : i32
    return %c0_i32, %c0_i32_0, %c0_i32_1 : i32, i32, i32
  }
  func.func @transform_2(%arg0: i32) -> (i32, i32) {
    %c0_i32 = arith.constant 0 : i32
    %c0_i32_0 = arith.constant 0 : i32
    %c0_i32_1 = arith.constant 0 : i32
    return %c0_i32, %c0_i32_0 : i32, i32
  }
  func.func @transform_3(%arg0: i32) -> (i32, i32, i32) {
    %c0_i32 = arith.constant 0 : i32
    %c0_i32_0 = arith.constant 0 : i32
    %c0_i32_1 = arith.constant 0 : i32
    %c0_i32_2 = arith.constant 0 : i32
    return %c0_i32, %c0_i32_0, %c0_i32_1 : i32, i32, i32
  }
  func.func @transform_4(%arg0: i32) -> (i32, i32) {
    %c0_i32 = arith.constant 0 : i32
    %c0_i32_0 = arith.constant 0 : i32
    %c0_i32_1 = arith.constant 0 : i32
    return %c0_i32, %c0_i32_0 : i32, i32
  }
  func.func @transform_5(%arg0: i32) -> (i32, i32, i32) {
    %c0_i32 = arith.constant 0 : i32
    %c0_i32_0 = arith.constant 0 : i32
    %c0_i32_1 = arith.constant 0 : i32
    %c0_i32_2 = arith.constant 0 : i32
    return %c0_i32, %c0_i32_0, %c0_i32_1 : i32, i32, i32
  }
  func.func @transform_6(%arg0: i32) -> (i32, i32) {
    %c0_i32 = arith.constant 0 : i32
    %c0_i32_0 = arith.constant 0 : i32
    %c0_i32_1 = arith.constant 0 : i32
    return %c0_i32, %c0_i32_0 : i32, i32
  }
  func.func @transform_7(%arg0: i32) -> (i32, i32, i32) {
    %c0_i32 = arith.constant 0 : i32
    %c0_i32_0 = arith.constant 0 : i32
    %c0_i32_1 = arith.constant 0 : i32
    %c0_i32_2 = arith.constant 0 : i32
    return %c0_i32, %c0_i32_0, %c0_i32_1 : i32, i32, i32
  }
  func.func @transform_8(%arg0: i32) -> (i32, i32) {
    %c0_i32 = arith.constant 0 : i32
    %c0_i32_0 = arith.constant 0 : i32
    %c0_i32_1 = arith.constant 0 : i32
    return %c0_i32, %c0_i32_0 : i32, i32
  }
  func.func @transform_9(%arg0: i32) -> (i32, i32) {
    %c0_i32 = arith.constant 0 : i32
    %c0_i32_0 = arith.constant 0 : i32
    %c0_i32_1 = arith.constant 0 : i32
    return %c0_i32, %c0_i32_0 : i32, i32
  }
  func.func @transform_10(%arg0: i32) -> (i32, i32) {
    %c0_i32 = arith.constant 0 : i32
    %c0_i32_0 = arith.constant 0 : i32
    %c0_i32_1 = arith.constant 0 : i32
    return %c0_i32, %c0_i32_0 : i32, i32
  }
  func.func @transform_11(%arg0: i32) -> (i32, i32, i32) {
    %c0_i32 = arith.constant 0 : i32
    %c0_i32_0 = arith.constant 0 : i32
    %c0_i32_1 = arith.constant 0 : i32
    return %arg0, %c0_i32, %c0_i32_0 : i32, i32, i32
  }
}

</mosaic_0001>

<llo_original>
// kernel: cnn_mel_1d_forward.1
$region0: #{cnn_mel_1d_forward.1}
  #allocation0 [shape = 'u32[]', space=smem, size = 0x4, offset = 0x4, fixed_abs, tag = 'smem constant byte address 0x4 - core index']
  #allocation1 [shape = 'u32[72,128]{1,0:T(1,128)}', space=vmem, size = 0x9000, scoped, tag = 'internal scratch']
  #allocation2 [shape = 'f32[99,128]{1,0:T(8,128)}', space=vmem, size = 0xd000, scoped, tag = 'scratch operand']
  #allocation3 [shape = 'f32[18,128]{1,0:T(8,128)}', space=vmem, size = 0x3000, scoped, tag = 'scratch operand']
  %s0 = inlined_call_operand.vmem [shape: f32[2,501,40], index: 0, kind: input, shape index: {}]
  %s1 = inlined_call_operand.hbm [shape: f32[10,40,128], index: 1, kind: input, shape index: {}]
  %s2 = inlined_call_operand.vmem [shape: f32[3,128], index: 2, kind: input, shape index: {}]
  %s3 = inlined_call_operand.vmem [shape: f32[10,128,128], index: 3, kind: input, shape index: {}]
  %s4 = inlined_call_operand.vmem [shape: f32[3,128], index: 4, kind: input, shape index: {}]
  %s5 = inlined_call_operand.hbm [shape: f32[10,128,128], index: 5, kind: input, shape index: {}]
  %s6 = inlined_call_operand.vmem [shape: f32[3,128], index: 6, kind: input, shape index: {}]
  %s7 = inlined_call_operand.hbm [shape: f32[2,128,128], index: 7, kind: input, shape index: {}]
  %s8 = inlined_call_operand.vmem [shape: f32[1,128], index: 8, kind: input, shape index: {}]
  %s9 = inlined_call_operand.hbm [shape: f32[128,128], index: 9, kind: input, shape index: {}]
  %s10 = inlined_call_operand.vmem [shape: f32[1,128], index: 10, kind: input, shape index: {}]
  %s11 = inlined_call_operand.hbm [shape: f32[2,1,128], index: 11, kind: output, shape index: {}]
  %s12 = sld [smem:[#allocation0]]
  $region93: #{cnn_mel_1d_forward.1} parent=0
    _
  %s14 = ssub.s32 1, %s12
  %s15 = scalar_select 0, %s14, %s12
  $region1: #{cnn_mel_1d_forward.1} parent=0
    #allocation4 [shape = 'u8[204800]{0}', space=vmem, size = 0x32000, scoped, tag = 'input window, operand 1, single buffered']
    #allocation5 [shape = 's32[2]{0}', space=sflag, size = 0x8, scoped, tag = 'scoped memory for cnn_mel_1d_forward.1']
    #allocation6 [shape = 's32[2]{0}', space=sflag, size = 0x8, scoped, tag = 'scoped memory for cnn_mel_1d_forward.1']
    #allocation7 [shape = 'u8[655360]{0}', space=vmem, size = 0xa0000, scoped, tag = 'input window, operand 5, single buffered']
    #allocation8 [shape = 's32[1]{0}', space=sflag, size = 0x4, scoped, tag = 'scoped memory for cnn_mel_1d_forward.1']
    #allocation9 [shape = 'u8[131072]{0}', space=vmem, size = 0x20000, scoped, tag = 'input window, operand 7, single buffered']
    #allocation10 [shape = 'u8[65536]{0}', space=vmem, size = 0x10000, scoped, tag = 'input window, operand 9, single buffered']
    #allocation11 [shape = 's32[1]{0}', space=sflag, size = 0x4, scoped, tag = 'scoped memory for cnn_mel_1d_forward.1']
    #allocation12 [shape = 'u8[1024]{0}', space=vmem, size = 0x400, scoped, tag = 'output window, operand 0']
    %16 = vsyncpa [#allocation5], 0
    %17 = vsyncpa [#allocation8], 0
    %18 = vsyncpa [#allocation11], 0
    %19 = vsyncpa [#allocation6], 0
    %s20 = scalar_lea.sflag [#allocation6], 1
    %21 = vsyncpa %s20, 0
    loop: start=0, step=1, limit=4
    $region2: #{cnn_mel_1d_forward.1} parent=1 // loop_pre_header
      _
    $region3: #{cnn_mel_1d_forward.1} parent=1 // loop_header
      %s23 = sphi 0, %s27
      %p24 = scmp.ge.s32.totalorder %s23, 4
      %s33 = sphi 0, %s35
      %s36 = sphi 0, %s33
      %s37 = sphi 0, %s36
      %s53 = sphi 0, %s37
      %s57 = sphi 0, %s57
      %s59 = sphi 0, %s57
      %s60 = sphi 0, %s59
      %s74 = sphi 0, %s60
      %s78 = sphi 0, %s78
      %s80 = sphi 0, %s78
      %s81 = sphi 0, %s80
      %s95 = sphi 0, %s81
      %s99 = sphi 0, %s99
      %s101 = sphi 0, %s99
      %s102 = sphi 0, %s101
      %s116 = sphi 0, %s102
      %s120 = sphi 0, %s120
      %s122 = sphi 0, %s120
      %s123 = sphi 0, %s122
      %s137 = sphi 0, %s123
      %s141 = sphi 0, %s141
      %s143 = sphi 0, %s141
      %s144 = sphi 0, %s143
      %s158 = sphi 0, %s144
      %s162 = sphi 0, %s162
      %s164 = sphi 0, %s162
      %s165 = sphi 0, %s164
      %s179 = sphi 0, %s165
      %s183 = sphi 0, %s183
      %s185 = sphi 0, %s183
      %s186 = sphi 0, %s185
      %s200 = sphi 0, %s186
      %s204 = sphi 0, %s204
      %s206 = sphi 0, %s204
      %s207 = sphi 0, %s206
      %s221 = sphi 0, %s207
      %s225 = sphi 0, %s225
      %s227 = sphi 0, %s225
      %s228 = sphi 0, %s227
      %s242 = sphi 0, %s228
      %s246 = sphi 0, %s246
      %s248 = sphi 0, %s246
      %s249 = sphi 0, %s248
      %s263 = sphi 0, %s249
      %s269 = sphi 0, %s271
      %s272 = sphi 0, %s269
      %s273 = sphi 0, %s272
      %s289 = sphi 0, %s273
    $region4: #{cnn_mel_1d_forward.1} parent=1 // loop_header_branch
      %26 = sbr.rel (%p24) target = $region8
    $region5: #{cnn_mel_1d_forward.1} parent=1 // loop_body
      %s28 = ssub.s32 %s23, 1
      %s29 = ssub.s32 %s23, 2
      %s30 = sadd.s32 %s23, 1
      %s31 = ssub.s32 %s23, %s30
      %p32 = scmp.eq.s32.totalorder %s31, 0
      %s34 = sadd.s32 %s33, 1
      %s35 = scalar_select %p32, %s33, %s34
      %p38 = pneg %p32
      %p39 = scmp.eq.s32.totalorder %s23, 1
      %p40 = por %p38, %p39
      %p41 = scmp.ne.s32.totalorder %s33, %s36
      %p42 = scmp.eq.s32.totalorder %s23, 0
      %p43 = por %p41, %p42
      %p44 = scmp.ne.s32.totalorder %s33, %s36
      %p45 = scmp.eq.s32.totalorder %s28, 1
      %p46 = por %p44, %p45
      %p47 = scmp.ne.s32.totalorder %s36, %s37
      %p48 = scmp.eq.s32.totalorder %s28, 0
      %p49 = por %p47, %p48
      %p50 = scmp.ne.s32.totalorder %s36, %s37
      %p51 = scmp.eq.s32.totalorder %s29, 1
      %p52 = por %p50, %p51
      %p54 = scmp.ne.s32.totalorder %s37, %s53
      %p55 = scmp.eq.s32.totalorder %s29, 0
      %p56 = por %p54, %p55
      %s58 = sadd.s32 %s57, 1
      %p61 = scmp.eq.s32.totalorder %s23, 1
      %p62 = scmp.ne.s32.totalorder %s57, %s59
      %p63 = scmp.eq.s32.totalorder %s23, 0
      %p64 = por %p62, %p63
      %p65 = scmp.ne.s32.totalorder %s57, %s59
      %p66 = scmp.eq.s32.totalorder %s28, 1
      %p67 = por %p65, %p66
      %p68 = scmp.ne.s32.totalorder %s59, %s60
      %p69 = scmp.eq.s32.totalorder %s28, 0
      %p70 = por %p68, %p69
      %p71 = scmp.ne.s32.totalorder %s59, %s60
      %p72 = scmp.eq.s32.totalorder %s29, 1
      %p73 = por %p71, %p72
      %p75 = scmp.ne.s32.totalorder %s60, %s74
      %p76 = scmp.eq.s32.totalorder %s29, 0
      %p77 = por %p75, %p76
      %s79 = sadd.s32 %s78, 1
      %p82 = scmp.eq.s32.totalorder %s23, 1
      %p83 = scmp.ne.s32.totalorder %s78, %s80
      %p84 = scmp.eq.s32.totalorder %s23, 0
      %p85 = por %p83, %p84
      %p86 = scmp.ne.s32.totalorder %s78, %s80
      %p87 = scmp.eq.s32.totalorder %s28, 1
      %p88 = por %p86, %p87
      %p89 = scmp.ne.s32.totalorder %s80, %s81
      %p90 = scmp.eq.s32.totalorder %s28, 0
      %p91 = por %p89, %p90
      %p92 = scmp.ne.s32.totalorder %s80, %s81
      %p93 = scmp.eq.s32.totalorder %s29, 1
      %p94 = por %p92, %p93
      %p96 = scmp.ne.s32.totalorder %s81, %s95
      %p97 = scmp.eq.s32.totalorder %s29, 0
      %p98 = por %p96, %p97
      %s100 = sadd.s32 %s99, 1
      %p103 = scmp.eq.s32.totalorder %s23, 1
      %p104 = scmp.ne.s32.totalorder %s99, %s101
      %p105 = scmp.eq.s32.totalorder %s23, 0
      %p106 = por %p104, %p105
      %p107 = scmp.ne.s32.totalorder %s99, %s101
      %p108 = scmp.eq.s32.totalorder %s28, 1
      %p109 = por %p107, %p108
      %p110 = scmp.ne.s32.totalorder %s101, %s102
      %p111 = scmp.eq.s32.totalorder %s28, 0
      %p112 = por %p110, %p111
      %p113 = scmp.ne.s32.totalorder %s101, %s102
      %p114 = scmp.eq.s32.totalorder %s29, 1
      %p115 = por %p113, %p114
      %p117 = scmp.ne.s32.totalorder %s102, %s116
      %p118 = scmp.eq.s32.totalorder %s29, 0
      %p119 = por %p117, %p118
      %s121 = sadd.s32 %s120, 1
      %p124 = scmp.eq.s32.totalorder %s23, 1
      %p125 = scmp.ne.s32.totalorder %s120, %s122
      %p126 = scmp.eq.s32.totalorder %s23, 0
      %p127 = por %p125, %p126
      %p128 = scmp.ne.s32.totalorder %s120, %s122
      %p129 = scmp.eq.s32.totalorder %s28, 1
      %p130 = por %p128, %p129
      %p131 = scmp.ne.s32.totalorder %s122, %s123
      %p132 = scmp.eq.s32.totalorder %s28, 0
      %p133 = por %p131, %p132
      %p134 = scmp.ne.s32.totalorder %s122, %s123
      %p135 = scmp.eq.s32.totalorder %s29, 1
      %p136 = por %p134, %p135
      %p138 = scmp.ne.s32.totalorder %s123, %s137
      %p139 = scmp.eq.s32.totalorder %s29, 0
      %p140 = por %p138, %p139
      %s142 = sadd.s32 %s141, 1
      %p145 = scmp.eq.s32.totalorder %s23, 1
      %p146 = scmp.ne.s32.totalorder %s141, %s143
      %p147 = scmp.eq.s32.totalorder %s23, 0
      %p148 = por %p146, %p147
      %p149 = scmp.ne.s32.totalorder %s141, %s143
      %p150 = scmp.eq.s32.totalorder %s28, 1
      %p151 = por %p149, %p150
      %p152 = scmp.ne.s32.totalorder %s143, %s144
      %p153 = scmp.eq.s32.totalorder %s28, 0
      %p154 = por %p152, %p153
      %p155 = scmp.ne.s32.totalorder %s143, %s144
      %p156 = scmp.eq.s32.totalorder %s29, 1
      %p157 = por %p155, %p156
      %p159 = scmp.ne.s32.totalorder %s144, %s158
      %p160 = scmp.eq.s32.totalorder %s29, 0
      %p161 = por %p159, %p160
      %s163 = sadd.s32 %s162, 1
      %p166 = scmp.eq.s32.totalorder %s23, 1
      %p167 = scmp.ne.s32.totalorder %s162, %s164
      %p168 = scmp.eq.s32.totalorder %s23, 0
      %p169 = por %p167, %p168
      %p170 = scmp.ne.s32.totalorder %s162, %s164
      %p171 = scmp.eq.s32.totalorder %s28, 1
      %p172 = por %p170, %p171
      %p173 = scmp.ne.s32.totalorder %s164, %s165
      %p174 = scmp.eq.s32.totalorder %s28, 0
      %p175 = por %p173, %p174
      %p176 = scmp.ne.s32.totalorder %s164, %s165
      %p177 = scmp.eq.s32.totalorder %s29, 1
      %p178 = por %p176, %p177
      %p180 = scmp.ne.s32.totalorder %s165, %s179
      %p181 = scmp.eq.s32.totalorder %s29, 0
      %p182 = por %p180, %p181
      %s184 = sadd.s32 %s183, 1
      %p187 = scmp.eq.s32.totalorder %s23, 1
      %p188 = scmp.ne.s32.totalorder %s183, %s185
      %p189 = scmp.eq.s32.totalorder %s23, 0
      %p190 = por %p188, %p189
      %p191 = scmp.ne.s32.totalorder %s183, %s185
      %p192 = scmp.eq.s32.totalorder %s28, 1
      %p193 = por %p191, %p192
      %p194 = scmp.ne.s32.totalorder %s185, %s186
      %p195 = scmp.eq.s32.totalorder %s28, 0
      %p196 = por %p194, %p195
      %p197 = scmp.ne.s32.totalorder %s185, %s186
      %p198 = scmp.eq.s32.totalorder %s29, 1
      %p199 = por %p197, %p198
      %p201 = scmp.ne.s32.totalorder %s186, %s200
      %p202 = scmp.eq.s32.totalorder %s29, 0
      %p203 = por %p201, %p202
      %s205 = sadd.s32 %s204, 1
      %p208 = scmp.eq.s32.totalorder %s23, 1
      %p209 = scmp.ne.s32.totalorder %s204, %s206
      %p210 = scmp.eq.s32.totalorder %s23, 0
      %p211 = por %p209, %p210
      %p212 = scmp.ne.s32.totalorder %s204, %s206
      %p213 = scmp.eq.s32.totalorder %s28, 1
      %p214 = por %p212, %p213
      %p215 = scmp.ne.s32.totalorder %s206, %s207
      %p216 = scmp.eq.s32.totalorder %s28, 0
      %p217 = por %p215, %p216
      %p218 = scmp.ne.s32.totalorder %s206, %s207
      %p219 = scmp.eq.s32.totalorder %s29, 1
      %p220 = por %p218, %p219
      %p222 = scmp.ne.s32.totalorder %s207, %s221
      %p223 = scmp.eq.s32.totalorder %s29, 0
      %p224 = por %p222, %p223
      %s226 = sadd.s32 %s225, 1
      %p229 = scmp.eq.s32.totalorder %s23, 1
      %p230 = scmp.ne.s32.totalorder %s225, %s227
      %p231 = scmp.eq.s32.totalorder %s23, 0
      %p232 = por %p230, %p231
      %p233 = scmp.ne.s32.totalorder %s225, %s227
      %p234 = scmp.eq.s32.totalorder %s28, 1
      %p235 = por %p233, %p234
      %p236 = scmp.ne.s32.totalorder %s227, %s228
      %p237 = scmp.eq.s32.totalorder %s28, 0
      %p238 = por %p236, %p237
      %p239 = scmp.ne.s32.totalorder %s227, %s228
      %p240 = scmp.eq.s32.totalorder %s29, 1
      %p241 = por %p239, %p240
      %p243 = scmp.ne.s32.totalorder %s228, %s242
      %p244 = scmp.eq.s32.totalorder %s29, 0
      %p245 = por %p243, %p244
      %s247 = sadd.s32 %s246, 1
      %p250 = scmp.eq.s32.totalorder %s23, 1
      %p251 = scmp.ne.s32.totalorder %s246, %s248
      %p252 = scmp.eq.s32.totalorder %s23, 0
      %p253 = por %p251, %p252
      %p254 = scmp.ne.s32.totalorder %s246, %s248
      %p255 = scmp.eq.s32.totalorder %s28, 1
      %p256 = por %p254, %p255
      %p257 = scmp.ne.s32.totalorder %s248, %s249
      %p258 = scmp.eq.s32.totalorder %s28, 0
      %p259 = por %p257, %p258
      %p260 = scmp.ne.s32.totalorder %s248, %s249
      %p261 = scmp.eq.s32.totalorder %s29, 1
      %p262 = por %p260, %p261
      %p264 = scmp.ne.s32.totalorder %s249, %s263
      %p265 = scmp.eq.s32.totalorder %s29, 0
      %p266 = por %p264, %p265
      %s267 = ssub.s32 %s23, %s30
      %p268 = scmp.eq.s32.totalorder %s267, 0
      %s270 = sadd.s32 %s269, 1
      %s271 = scalar_select %p268, %s269, %s270
      %p274 = pneg %p268
      %p275 = scmp.eq.s32.totalorder %s23, 1
      %p276 = por %p274, %p275
      %p277 = scmp.ne.s32.totalorder %s269, %s272
      %p278 = scmp.eq.s32.totalorder %s23, 0
      %p279 = por %p277, %p278
      %p280 = scmp.ne.s32.totalorder %s269, %s272
      %p281 = scmp.eq.s32.totalorder %s28, 1
      %p282 = por %p280, %p281
      %p283 = scmp.ne.s32.totalorder %s272, %s273
      %p284 = scmp.eq.s32.totalorder %s28, 0
      %p285 = por %p283, %p284
      %p286 = scmp.ne.s32.totalorder %s272, %s273
      %p287 = scmp.eq.s32.totalorder %s29, 1
      %p288 = por %p286, %p287
      %p290 = scmp.ne.s32.totalorder %s273, %s289
      %p291 = scmp.eq.s32.totalorder %s29, 0
      %p292 = por %p290, %p291
      %p293 = scmp.le.s32.totalorder 1, %s23
      %p294 = scmp.lt.s32.totalorder %s23, 3
      %p295 = pnand %p293, %p294
      %p296 = pneg %p295
      // Predicated region
      $region9: #{cnn_mel_1d_forward.1} parent=5 // pred_check
        _
      $region10: #{cnn_mel_1d_forward.1} parent=5 // pred_check_branch
        %298 = sbr.rel (%p295) target = $region12
      $region11: #{cnn_mel_1d_forward.1} parent=5 // pred_region
        %s299 = ssub.s32 %s23, 1
        // Predicated region
        $region13: #{cnn_mel_1d_forward.1} parent=11 // pred_check
          %p300 = pneg %p70
        $region14: #{cnn_mel_1d_forward.1} parent=11 // pred_check_branch
          %302 = sbr.rel (%p300) target = $region16
        $region15: #{cnn_mel_1d_forward.1} parent=11 // pred_region
          %304 = vsyncadd [#allocation5], 0
          %s305 = sshll.u32 %s1, 4
          %s306 = int_to_ptr.hbm [resolvable:$true] %s305
          %s307 = sshll.u32 [#allocation4], 4
          %s308 = int_to_ptr.vmem [resolvable:$true] %s307
          %313 = dma.hbm_to_vmem [thread:$0]  %s306, 6400, %s308, [#allocation5], 128, 128, 8
        $region16: #{cnn_mel_1d_forward.1} parent=11 // pred_fallthru
          _
        // Predicated region
        $region17: #{cnn_mel_1d_forward.1} parent=11 // pred_check
          %p314 = pneg %p91
        $region18: #{cnn_mel_1d_forward.1} parent=11 // pred_check_branch
          %316 = sbr.rel (%p314) target = $region20
        $region19: #{cnn_mel_1d_forward.1} parent=11 // pred_region
          _
        $region20: #{cnn_mel_1d_forward.1} parent=11 // pred_fallthru
          _
        // Predicated region
        $region21: #{cnn_mel_1d_forward.1} parent=11 // pred_check
          %p317 = pneg %p112
        $region22: #{cnn_mel_1d_forward.1} parent=11 // pred_check_branch
          %319 = sbr.rel (%p317) target = $region24
        $region23: #{cnn_mel_1d_forward.1} parent=11 // pred_region
          _
        $region24: #{cnn_mel_1d_forward.1} parent=11 // pred_fallthru
          _
        // Predicated region
        $region25: #{cnn_mel_1d_forward.1} parent=11 // pred_check
          %p320 = pneg %p133
        $region26: #{cnn_mel_1d_forward.1} parent=11 // pred_check_branch
          %322 = sbr.rel (%p320) target = $region28
        $region27: #{cnn_mel_1d_forward.1} parent=11 // pred_region
          _
        $region28: #{cnn_mel_1d_forward.1} parent=11 // pred_fallthru
          _
        // Predicated region
        $region29: #{cnn_mel_1d_forward.1} parent=11 // pred_check
          %p323 = pneg %p154
        $region30: #{cnn_mel_1d_forward.1} parent=11 // pred_check_branch
          %325 = sbr.rel (%p323) target = $region32
        $region31: #{cnn_mel_1d_forward.1} parent=11 // pred_region
          %327 = vsyncadd [#allocation8], 0
          %s328 = sshll.u32 %s5, 4
          %s329 = int_to_ptr.hbm [resolvable:$true] %s328
          %s330 = sshll.u32 [#allocation7], 4
          %s331 = int_to_ptr.vmem [resolvable:$true] %s330
          %336 = dma.hbm_to_vmem [thread:$0]  %s329, 20480, %s331, [#allocation8], 128, 128, 8
        $region32: #{cnn_mel_1d_forward.1} parent=11 // pred_fallthru
          _
        // Predicated region
        $region33: #{cnn_mel_1d_forward.1} parent=11 // pred_check
          %p337 = pneg %p175
        $region34: #{cnn_mel_1d_forward.1} parent=11 // pred_check_branch
          %339 = sbr.rel (%p337) target = $region36
        $region35: #{cnn_mel_1d_forward.1} parent=11 // pred_region
          _
        $region36: #{cnn_mel_1d_forward.1} parent=11 // pred_fallthru
          _
        // Predicated region
        $region37: #{cnn_mel_1d_forward.1} parent=11 // pred_check
          %p340 = pneg %p196
        $region38: #{cnn_mel_1d_forward.1} parent=11 // pred_check_branch
          %342 = sbr.rel (%p340) target = $region40
        $region39: #{cnn_mel_1d_forward.1} parent=11 // pred_region
          %344 = vsyncadd [#allocation8], 0
          %s345 = sshll.u32 %s7, 4
          %s346 = int_to_ptr.hbm [resolvable:$true] %s345
          %s347 = sshll.u32 [#allocation9], 4
          %s348 = int_to_ptr.vmem [resolvable:$true] %s347
          %353 = dma.hbm_to_vmem [thread:$0]  %s346, 4096, %s348, [#allocation8], 128, 128, 8
        $region40: #{cnn_mel_1d_forward.1} parent=11 // pred_fallthru
          _
        // Predicated region
        $region41: #{cnn_mel_1d_forward.1} parent=11 // pred_check
          %p354 = pneg %p217
        $region42: #{cnn_mel_1d_forward.1} parent=11 // pred_check_branch
          %356 = sbr.rel (%p354) target = $region44
        $region43: #{cnn_mel_1d_forward.1} parent=11 // pred_region
          _
        $region44: #{cnn_mel_1d_forward.1} parent=11 // pred_fallthru
          _
        // Predicated region
        $region45: #{cnn_mel_1d_forward.1} parent=11 // pred_check
          %p357 = pneg %p238
        $region46: #{cnn_mel_1d_forward.1} parent=11 // pred_check_branch
          %359 = sbr.rel (%p357) target = $region48
        $region47: #{cnn_mel_1d_forward.1} parent=11 // pred_region
          %361 = vsyncadd [#allocation11], 0
          %s362 = sshll.u32 %s9, 4
          %s363 = int_to_ptr.hbm [resolvable:$true] %s362
          %s364 = sshll.u32 [#allocation10], 4
          %s365 = int_to_ptr.vmem [resolvable:$true] %s364
          %370 = dma.hbm_to_vmem [thread:$0]  %s363, 2048, %s365, [#allocation11], 128, 128, 8
        $region48: #{cnn_mel_1d_forward.1} parent=11 // pred_fallthru
          _
        // Predicated region
        $region49: #{cnn_mel_1d_forward.1} parent=11 // pred_check
          %p371 = pneg %p259
        $region50: #{cnn_mel_1d_forward.1} parent=11 // pred_check_branch
          %373 = sbr.rel (%p371) target = $region52
        $region51: #{cnn_mel_1d_forward.1} parent=11 // pred_region
          _
        $region52: #{cnn_mel_1d_forward.1} parent=11 // pred_fallthru
          _
      $region12: #{cnn_mel_1d_forward.1} parent=5 // pred_fallthru
        _
      %p374 = scmp.lt.s32.totalorder %s23, 2
      // Predicated region
      $region53: #{cnn_mel_1d_forward.1} parent=5 // pred_check
        %p375 = pneg %p374
      $region54: #{cnn_mel_1d_forward.1} parent=5 // pred_check_branch
        %377 = sbr.rel (%p375) target = $region56
      $region55: #{cnn_mel_1d_forward.1} parent=5 // pred_region
        // Predicated region
        $region57: #{cnn_mel_1d_forward.1} parent=55 // pred_check
          %p378 = pneg %p43
        $region58: #{cnn_mel_1d_forward.1} parent=55 // pred_check_branch
          %380 = sbr.rel (%p378) target = $region60
        $region59: #{cnn_mel_1d_forward.1} parent=55 // pred_region
          %p381 = scmp.lt.s32.totalorder %s23, 1
          %s382 = scalar_select %p381, %s23, 1
          %s383 = smul.addr %s382, 63
          %s384 = smul.addr %s383, 8
          %s385 = scalar_lea.vmem %s0, %s384
        $region60: #{cnn_mel_1d_forward.1} parent=55 // pred_fallthru
          _
      $region56: #{cnn_mel_1d_forward.1} parent=5 // pred_fallthru
        _
      %p386 = scmp.le.s32.totalorder 1, %s23
      %p387 = scmp.lt.s32.totalorder %s23, 3
      %p388 = pnand %p386, %p387
      %p389 = pneg %p388
      // Predicated region
      $region61: #{cnn_mel_1d_forward.1} parent=5 // pred_check
        _
      $region62: #{cnn_mel_1d_forward.1} parent=5 // pred_check_branch
        %391 = sbr.rel (%p388) target = $region64
      $region63: #{cnn_mel_1d_forward.1} parent=5 // pred_region
        %s392 = ssub.s32 %s23, 1
        // Predicated region
        $region65: #{cnn_mel_1d_forward.1} parent=63 // pred_check
          %p393 = pneg %p70
        $region66: #{cnn_mel_1d_forward.1} parent=63 // pred_check_branch
          %395 = sbr.rel (%p393) target = $region68
        $region67: #{cnn_mel_1d_forward.1} parent=63 // pred_region
          %397 = dma.done [#allocation5], 6400
        $region68: #{cnn_mel_1d_forward.1} parent=63 // pred_fallthru
          _
        // Predicated region
        $region69: #{cnn_mel_1d_forward.1} parent=63 // pred_check
          %p398 = pneg %p154
        $region70: #{cnn_mel_1d_forward.1} parent=63 // pred_check_branch
          %400 = sbr.rel (%p398) target = $region72
        $region71: #{cnn_mel_1d_forward.1} parent=63 // pred_region
          %402 = dma.done [#allocation8], 20480
        $region72: #{cnn_mel_1d_forward.1} parent=63 // pred_fallthru
          _
        // Predicated region
        $region73: #{cnn_mel_1d_forward.1} parent=63 // pred_check
          %p403 = pneg %p196
        $region74: #{cnn_mel_1d_forward.1} parent=63 // pred_check_branch
          %405 = sbr.rel (%p403) target = $region76
        $region75: #{cnn_mel_1d_forward.1} parent=63 // pred_region
          %407 = dma.done [#allocation8], 4096
        $region76: #{cnn_mel_1d_forward.1} parent=63 // pred_fallthru
          _
        // Predicated region
        $region77: #{cnn_mel_1d_forward.1} parent=63 // pred_check
          %p408 = pneg %p238
        $region78: #{cnn_mel_1d_forward.1} parent=63 // pred_check_branch
          %410 = sbr.rel (%p408) target = $region80
        $region79: #{cnn_mel_1d_forward.1} parent=63 // pred_region
          %412 = dma.done [#allocation11], 2048
        $region80: #{cnn_mel_1d_forward.1} parent=63 // pred_fallthru
          _
        %p413 = scmp.lt.s32.totalorder %s28, 1
        %s414 = scalar_select %p413, %s28, 1
        %s415 = smul.addr %s414, 63
        %s416 = smul.addr %s415, 8
        %s417 = scalar_lea.vmem %s0, %s416
        %p418 = pneg %p49
        %p419 = pneg %p46
        %p420 = pneg %p70
        %p421 = pneg %p67
        %p422 = pneg %p91
        %p423 = pneg %p88
        %p424 = pneg %p112
        %p425 = pneg %p109
        %p426 = pneg %p133
        %p427 = pneg %p130
        %p428 = pneg %p154
        %p429 = pneg %p151
        %p430 = pneg %p175
        %p431 = pneg %p172
        %p432 = pneg %p196
        %p433 = pneg %p193
        %p434 = pneg %p217
        %p435 = pneg %p214
        %p436 = pneg %p238
        %p437 = pneg %p235
        %p438 = pneg %p259
        %p439 = pneg %p256
        %p440 = pneg %p285
        %p441 = pneg %p282
        %s442 = sand.u32 %s272, 1
        %s443 = scalar_lea.sflag [#allocation6], %s442
        %s444 = sand.u32 %s272, 1
        %s445 = scalar_lea.vmem [#allocation12], %s444
        %p446 = scmp.lt.s32.totalorder %s28, 1
        %s447 = scalar_select %p446, %s28, 1
        %s448 = smul.addr %s447, 63
        %s449 = smul.addr %s448, 8
        %s450 = scalar_lea.vmem %s0, %s449
        %v451 = vld [vmem:[%s450] ss:$5 sm:$0xff]
        %s452 = scalar_lea.vmem %s450, 40
        %v453 = vld [vmem:[%s452] ss:$5 sm:$0xff]
        %s454 = scalar_lea.vmem %s450, 80
        %v455 = vld [vmem:[%s454] ss:$5 sm:$0xff]
        %s456 = scalar_lea.vmem %s450, 120
        %v457 = vld [vmem:[%s456] ss:$5 sm:$0xff]
        %s458 = scalar_lea.vmem %s450, 160
        %v459 = vld [vmem:[%s458] ss:$5 sm:$0xff]
        %s460 = scalar_lea.vmem %s450, 200
        %v461 = vld [vmem:[%s460] ss:$5 sm:$0xff]
        %s462 = scalar_lea.vmem %s450, 240
        %v463 = vld [vmem:[%s462] ss:$5 sm:$0xff]
        %s464 = scalar_lea.vmem %s450, 280
        %v465 = vld [vmem:[%s464] ss:$5 sm:$0xff]
        %s466 = scalar_lea.vmem %s450, 320
        %v467 = vld [vmem:[%s466] ss:$5 sm:$0xff]
        %s468 = scalar_lea.vmem %s450, 360
        %v469 = vld [vmem:[%s468] ss:$5 sm:$0xff]
        %s470 = scalar_lea.vmem %s450, 400
        %v471 = vld [vmem:[%s470] ss:$5 sm:$0xff]
        %s472 = scalar_lea.vmem %s450, 440
        %v473 = vld [vmem:[%s472] ss:$5 sm:$0xff]
        %s474 = scalar_lea.vmem %s450, 480
        %v475 = vld [vmem:[%s474] ss:$5 sm:$0x7]
        %v476 = vld [vmem:[#allocation4] sm:$0xff]
        %v477 = vld [vmem:[#allocation4 + $0x8] sm:$0xff]
        %v478 = vld [vmem:[#allocation4 + $0x10] sm:$0xff]
        %v479 = vld [vmem:[#allocation4 + $0x18] sm:$0xff]
        %v480 = vld [vmem:[#allocation4 + $0x20] sm:$0xff]
        %s481 = scalar_lea.vmem %s450, 1
        %v482 = vld [vmem:[%s481] ss:$5 sm:$0xff]
        %s483 = scalar_lea.vmem %s450, 41
        %v484 = vld [vmem:[%s483] ss:$5 sm:$0xff]
        %s485 = scalar_lea.vmem %s450, 81
        %v486 = vld [vmem:[%s485] ss:$5 sm:$0xff]
        %s487 = scalar_lea.vmem %s450, 121
        %v488 = vld [vmem:[%s487] ss:$5 sm:$0xff]
        %s489 = scalar_lea.vmem %s450, 161
        %v490 = vld [vmem:[%s489] ss:$5 sm:$0xff]
        %s491 = scalar_lea.vmem %s450, 201
        %v492 = vld [vmem:[%s491] ss:$5 sm:$0xff]
        %s493 = scalar_lea.vmem %s450, 241
        %v494 = vld [vmem:[%s493] ss:$5 sm:$0xff]
        %s495 = scalar_lea.vmem %s450, 281
        %v496 = vld [vmem:[%s495] ss:$5 sm:$0xff]
        %s497 = scalar_lea.vmem %s450, 321
        %v498 = vld [vmem:[%s497] ss:$5 sm:$0xff]
        %s499 = scalar_lea.vmem %s450, 361
        %v500 = vld [vmem:[%s499] ss:$5 sm:$0xff]
        %s501 = scalar_lea.vmem %s450, 401
        %v502 = vld [vmem:[%s501] ss:$5 sm:$0xff]
        %s503 = scalar_lea.vmem %s450, 441
        %v504 = vld [vmem:[%s503] ss:$5 sm:$0xff]
        %s505 = scalar_lea.vmem %s450, 481
        %v506 = vld [vmem:[%s505] ss:$5 sm:$0x7]
        %s507 = scalar_lea.vmem [#allocation4], 40
        %v508 = vld [vmem:[%s507] sm:$0xff]
        %v509 = vld [vmem:[%s507 + $0x8] sm:$0xff]
        %v510 = vld [vmem:[%s507 + $0x10] sm:$0xff]
        %v511 = vld [vmem:[%s507 + $0x18] sm:$0xff]
        %v512 = vld [vmem:[%s507 + $0x20] sm:$0xff]
        %vm513 = vcmask 326656
        %v515 = vsel %vm513, %v482, 0
        %v518 = vsel %vm513, %v484, 0
        %v521 = vsel %vm513, %v486, 0
        %v524 = vsel %vm513, %v488, 0
        %v527 = vsel %vm513, %v490, 0
        %v530 = vsel %vm513, %v492, 0
        %v533 = vsel %vm513, %v494, 0
        %v536 = vsel %vm513, %v496, 0
        %v539 = vsel %vm513, %v498, 0
        %v542 = vsel %vm513, %v500, 0
        %v545 = vsel %vm513, %v502, 0
        %v548 = vsel %vm513, %v504, 0
        %v551 = vsel %vm513, %v506, 0
        %553 = vmatpush.msra.mxu0 0.0
        %554 = vmatpush.msra.mxu0 0.0
        %555 = vmatpush.msra.mxu0 0.0
        %556 = vmatpush.msra.mxu0 0.0
        %557 = vmatpush.msra.mxu0 0.0
        %558 = vmatpush.msra.mxu0 0.0
        %559 = vmatpush.msra.mxu0 0.0
        %560 = vmatpush.msra.mxu0 0.0
        %561 = vmatpush.msra.mxu0 0.0
        %562 = vmatpush.msra.mxu0 0.0
        %563 = vmatpush.msra.mxu0 0.0
        %564 = vmatpush.msra.mxu0 %v512
        %565 = vmatpush.msra.mxu0 %v511
        %566 = vmatpush.msra.mxu0 %v510
        %567 = vmatpush.msra.mxu0 %v509
        %568 = vmatpush.msra.mxu0 %v508
        %569 = vmatmul.f32.gmra.mxu0 %v515
        %v570 = vpop.f32.mrf.mxu0
        %v571 = vadd.f32 0.0, %v570
        %572 = vmatmul.f32.gmra.mxu0 %v518
        %v573 = vpop.f32.mrf.mxu0
        %v574 = vadd.f32 0.0, %v573
        %575 = vmatmul.f32.gmra.mxu0 %v521
        %v576 = vpop.f32.mrf.mxu0
        %v577 = vadd.f32 0.0, %v576
        %578 = vmatmul.f32.gmra.mxu0 %v524
        %v579 = vpop.f32.mrf.mxu0
        %v580 = vadd.f32 0.0, %v579
        %581 = vmatmul.f32.gmra.mxu0 %v527
        %v582 = vpop.f32.mrf.mxu0
        %v583 = vadd.f32 0.0, %v582
        %584 = vmatmul.f32.gmra.mxu0 %v530
        %v585 = vpop.f32.mrf.mxu0
        %v586 = vadd.f32 0.0, %v585
        %587 = vmatmul.f32.gmra.mxu0 %v533
        %v588 = vpop.f32.mrf.mxu0
        %v589 = vadd.f32 0.0, %v588
        %590 = vmatmul.f32.gmra.mxu0 %v536
        %v591 = vpop.f32.mrf.mxu0
        %v592 = vadd.f32 0.0, %v591
        %593 = vmatmul.f32.gmra.mxu0 %v539
        %v594 = vpop.f32.mrf.mxu0
        %v595 = vadd.f32 0.0, %v594
        %596 = vmatmul.f32.gmra.mxu0 %v542
        %v597 = vpop.f32.mrf.mxu0
        %v598 = vadd.f32 0.0, %v597
        %599 = vmatmul.f32.gmra.mxu0 %v545
        %v600 = vpop.f32.mrf.mxu0
        %v601 = vadd.f32 0.0, %v600
        %602 = vmatmul.f32.gmra.mxu0 %v548
        %v603 = vpop.f32.mrf.mxu0
        %v604 = vadd.f32 0.0, %v603
        %605 = vmatmul.f32.gmra.mxu0 %v551
        %v606 = vpop.f32.mrf.mxu0
        %v607 = vadd.f32 0.0, %v606
        %608 = vdwg.mxu0
        %v610 = vsel %vm513, %v451, 0
        %v613 = vsel %vm513, %v453, 0
        %v616 = vsel %vm513, %v455, 0
        %v619 = vsel %vm513, %v457, 0
        %v622 = vsel %vm513, %v459, 0
        %v625 = vsel %vm513, %v461, 0
        %v628 = vsel %vm513, %v463, 0
        %v631 = vsel %vm513, %v465, 0
        %v634 = vsel %vm513, %v467, 0
        %v637 = vsel %vm513, %v469, 0
        %v640 = vsel %vm513, %v471, 0
        %v643 = vsel %vm513, %v473, 0
        %v646 = vsel %vm513, %v475, 0
        %648 = vmatpush.msra.mxu0 0.0
        %649 = vmatpush.msra.mxu0 0.0
        %650 = vmatpush.msra.mxu0 0.0
        %651 = vmatpush.msra.mxu0 0.0
        %652 = vmatpush.msra.mxu0 0.0
        %653 = vmatpush.msra.mxu0 0.0
        %654 = vmatpush.msra.mxu0 0.0
        %655 = vmatpush.msra.mxu0 0.0
        %656 = vmatpush.msra.mxu0 0.0
        %657 = vmatpush.msra.mxu0 0.0
        %658 = vmatpush.msra.mxu0 0.0
        %659 = vmatpush.msra.mxu0 %v480
        %660 = vmatpush.msra.mxu0 %v479
        %661 = vmatpush.msra.mxu0 %v478
        %662 = vmatpush.msra.mxu0 %v477
        %663 = vmatpush.msra.mxu0 %v476
        %664 = vmatmul.f32.gmra.mxu0 %v610
        %v665 = vpop.f32.mrf.mxu0
        %v666 = vadd.f32 %v571, %v665
        %667 = vmatmul.f32.gmra.mxu0 %v613
        %v668 = vpop.f32.mrf.mxu0
        %v669 = vadd.f32 %v574, %v668
        %670 = vmatmul.f32.gmra.mxu0 %v616
        %v671 = vpop.f32.mrf.mxu0
        %v672 = vadd.f32 %v577, %v671
        %673 = vmatmul.f32.gmra.mxu0 %v619
        %v674 = vpop.f32.mrf.mxu0
        %v675 = vadd.f32 %v580, %v674
        %676 = vmatmul.f32.gmra.mxu0 %v622
        %v677 = vpop.f32.mrf.mxu0
        %v678 = vadd.f32 %v583, %v677
        %679 = vmatmul.f32.gmra.mxu0 %v625
        %v680 = vpop.f32.mrf.mxu0
        %v681 = vadd.f32 %v586, %v680
        %682 = vmatmul.f32.gmra.mxu0 %v628
        %v683 = vpop.f32.mrf.mxu0
        %v684 = vadd.f32 %v589, %v683
        %685 = vmatmul.f32.gmra.mxu0 %v631
        %v686 = vpop.f32.mrf.mxu0
        %v687 = vadd.f32 %v592, %v686
        %688 = vmatmul.f32.gmra.mxu0 %v634
        %v689 = vpop.f32.mrf.mxu0
        %v690 = vadd.f32 %v595, %v689
        %691 = vmatmul.f32.gmra.mxu0 %v637
        %v692 = vpop.f32.mrf.mxu0
        %v693 = vadd.f32 %v598, %v692
        %694 = vmatmul.f32.gmra.mxu0 %v640
        %v695 = vpop.f32.mrf.mxu0
        %v696 = vadd.f32 %v601, %v695
        %697 = vmatmul.f32.gmra.mxu0 %v643
        %v698 = vpop.f32.mrf.mxu0
        %v699 = vadd.f32 %v604, %v698
        %700 = vmatmul.f32.gmra.mxu0 %v646
        %v701 = vpop.f32.mrf.mxu0
        %v702 = vadd.f32 %v607, %v701
        %703 = vdwg.mxu0
        %s704 = scalar_lea.vmem %s450, 2
        %v705 = vld [vmem:[%s704] ss:$5 sm:$0xff]
        %s706 = scalar_lea.vmem %s450, 42
        %v707 = vld [vmem:[%s706] ss:$5 sm:$0xff]
        %s708 = scalar_lea.vmem %s450, 82
        %v709 = vld [vmem:[%s708] ss:$5 sm:$0xff]
        %s710 = scalar_lea.vmem %s450, 122
        %v711 = vld [vmem:[%s710] ss:$5 sm:$0xff]
        %s712 = scalar_lea.vmem %s450, 162
        %v713 = vld [vmem:[%s712] ss:$5 sm:$0xff]
        %s714 = scalar_lea.vmem %s450, 202
        %v715 = vld [vmem:[%s714] ss:$5 sm:$0xff]
        %s716 = scalar_lea.vmem %s450, 242
        %v717 = vld [vmem:[%s716] ss:$5 sm:$0xff]
        %s718 = scalar_lea.vmem %s450, 282
        %v719 = vld [vmem:[%s718] ss:$5 sm:$0xff]
        %s720 = scalar_lea.vmem %s450, 322
        %v721 = vld [vmem:[%s720] ss:$5 sm:$0xff]
        %s722 = scalar_lea.vmem %s450, 362
        %v723 = vld [vmem:[%s722] ss:$5 sm:$0xff]
        %s724 = scalar_lea.vmem %s450, 402
        %v725 = vld [vmem:[%s724] ss:$5 sm:$0xff]
        %s726 = scalar_lea.vmem %s450, 442
        %v727 = vld [vmem:[%s726] ss:$5 sm:$0xff]
        %s728 = scalar_lea.vmem %s450, 482
        %v729 = vld [vmem:[%s728] ss:$5 sm:$0x7]
        %s730 = scalar_lea.vmem [#allocation4], 80
        %v731 = vld [vmem:[%s730] sm:$0xff]
        %v732 = vld [vmem:[%s730 + $0x8] sm:$0xff]
        %v733 = vld [vmem:[%s730 + $0x10] sm:$0xff]
        %v734 = vld [vmem:[%s730 + $0x18] sm:$0xff]
        %v735 = vld [vmem:[%s730 + $0x20] sm:$0xff]
        %v737 = vsel %vm513, %v705, 0
        %v740 = vsel %vm513, %v707, 0
        %v743 = vsel %vm513, %v709, 0
        %v746 = vsel %vm513, %v711, 0
        %v749 = vsel %vm513, %v713, 0
        %v752 = vsel %vm513, %v715, 0
        %v755 = vsel %vm513, %v717, 0
        %v758 = vsel %vm513, %v719, 0
        %v761 = vsel %vm513, %v721, 0
        %v764 = vsel %vm513, %v723, 0
        %v767 = vsel %vm513, %v725, 0
        %v770 = vsel %vm513, %v727, 0
        %v773 = vsel %vm513, %v729, 0
        %775 = vmatpush.msra.mxu0 0.0
        %776 = vmatpush.msra.mxu0 0.0
        %777 = vmatpush.msra.mxu0 0.0
        %778 = vmatpush.msra.mxu0 0.0
        %779 = vmatpush.msra.mxu0 0.0
        %780 = vmatpush.msra.mxu0 0.0
        %781 = vmatpush.msra.mxu0 0.0
        %782 = vmatpush.msra.mxu0 0.0
        %783 = vmatpush.msra.mxu0 0.0
        %784 = vmatpush.msra.mxu0 0.0
        %785 = vmatpush.msra.mxu0 0.0
        %786 = vmatpush.msra.mxu0 %v735
        %787 = vmatpush.msra.mxu0 %v734
        %788 = vmatpush.msra.mxu0 %v733
        %789 = vmatpush.msra.mxu0 %v732
        %790 = vmatpush.msra.mxu0 %v731
        %791 = vmatmul.f32.gmra.mxu0 %v737
        %v792 = vpop.f32.mrf.mxu0
        %v793 = vadd.f32 0.0, %v792
        %794 = vmatmul.f32.gmra.mxu0 %v740
        %v795 = vpop.f32.mrf.mxu0
        %v796 = vadd.f32 0.0, %v795
        %797 = vmatmul.f32.gmra.mxu0 %v743
        %v798 = vpop.f32.mrf.mxu0
        %v799 = vadd.f32 0.0, %v798
        %800 = vmatmul.f32.gmra.mxu0 %v746
        %v801 = vpop.f32.mrf.mxu0
        %v802 = vadd.f32 0.0, %v801
        %803 = vmatmul.f32.gmra.mxu0 %v749
        %v804 = vpop.f32.mrf.mxu0
        %v805 = vadd.f32 0.0, %v804
        %806 = vmatmul.f32.gmra.mxu0 %v752
        %v807 = vpop.f32.mrf.mxu0
        %v808 = vadd.f32 0.0, %v807
        %809 = vmatmul.f32.gmra.mxu0 %v755
        %v810 = vpop.f32.mrf.mxu0
        %v811 = vadd.f32 0.0, %v810
        %812 = vmatmul.f32.gmra.mxu0 %v758
        %v813 = vpop.f32.mrf.mxu0
        %v814 = vadd.f32 0.0, %v813
        %815 = vmatmul.f32.gmra.mxu0 %v761
        %v816 = vpop.f32.mrf.mxu0
        %v817 = vadd.f32 0.0, %v816
        %818 = vmatmul.f32.gmra.mxu0 %v764
        %v819 = vpop.f32.mrf.mxu0
        %v820 = vadd.f32 0.0, %v819
        %821 = vmatmul.f32.gmra.mxu0 %v767
        %v822 = vpop.f32.mrf.mxu0
        %v823 = vadd.f32 0.0, %v822
        %824 = vmatmul.f32.gmra.mxu0 %v770
        %v825 = vpop.f32.mrf.mxu0
        %v826 = vadd.f32 0.0, %v825
        %827 = vmatmul.f32.gmra.mxu0 %v773
        %v828 = vpop.f32.mrf.mxu0
        %v829 = vadd.f32 0.0, %v828
        %830 = vdwg.mxu0
        %v831 = vadd.f32 %v666, %v793
        %v832 = vadd.f32 %v669, %v796
        %v833 = vadd.f32 %v672, %v799
        %v834 = vadd.f32 %v675, %v802
        %v835 = vadd.f32 %v678, %v805
        %v836 = vadd.f32 %v681, %v808
        %v837 = vadd.f32 %v684, %v811
        %v838 = vadd.f32 %v687, %v814
        %v839 = vadd.f32 %v690, %v817
        %v840 = vadd.f32 %v693, %v820
        %v841 = vadd.f32 %v696, %v823
        %v842 = vadd.f32 %v699, %v826
        %v843 = vadd.f32 %v702, %v829
        %s844 = scalar_lea.vmem %s450, 3
        %v845 = vld [vmem:[%s844] ss:$5 sm:$0xff]
        %s846 = scalar_lea.vmem %s450, 43
        %v847 = vld [vmem:[%s846] ss:$5 sm:$0xff]
        %s848 = scalar_lea.vmem %s450, 83
        %v849 = vld [vmem:[%s848] ss:$5 sm:$0xff]
        %s850 = scalar_lea.vmem %s450, 123
        %v851 = vld [vmem:[%s850] ss:$5 sm:$0xff]
        %s852 = scalar_lea.vmem %s450, 163
        %v853 = vld [vmem:[%s852] ss:$5 sm:$0xff]
        %s854 = scalar_lea.vmem %s450, 203
        %v855 = vld [vmem:[%s854] ss:$5 sm:$0xff]
        %s856 = scalar_lea.vmem %s450, 243
        %v857 = vld [vmem:[%s856] ss:$5 sm:$0xff]
        %s858 = scalar_lea.vmem %s450, 283
        %v859 = vld [vmem:[%s858] ss:$5 sm:$0xff]
        %s860 = scalar_lea.vmem %s450, 323
        %v861 = vld [vmem:[%s860] ss:$5 sm:$0xff]
        %s862 = scalar_lea.vmem %s450, 363
        %v863 = vld [vmem:[%s862] ss:$5 sm:$0xff]
        %s864 = scalar_lea.vmem %s450, 403
        %v865 = vld [vmem:[%s864] ss:$5 sm:$0xff]
        %s866 = scalar_lea.vmem %s450, 443
        %v867 = vld [vmem:[%s866] ss:$5 sm:$0xff]
        %s868 = scalar_lea.vmem %s450, 483
        %v869 = vld [vmem:[%s868] ss:$5 sm:$0x7]
        %s870 = scalar_lea.vmem [#allocation4], 120
        %v871 = vld [vmem:[%s870] sm:$0xff]
        %v872 = vld [vmem:[%s870 + $0x8] sm:$0xff]
        %v873 = vld [vmem:[%s870 + $0x10] sm:$0xff]
        %v874 = vld [vmem:[%s870 + $0x18] sm:$0xff]
        %v875 = vld [vmem:[%s870 + $0x20] sm:$0xff]
        %v877 = vsel %vm513, %v845, 0
        %v880 = vsel %vm513, %v847, 0
        %v883 = vsel %vm513, %v849, 0
        %v886 = vsel %vm513, %v851, 0
        %v889 = vsel %vm513, %v853, 0
        %v892 = vsel %vm513, %v855, 0
        %v895 = vsel %vm513, %v857, 0
        %v898 = vsel %vm513, %v859, 0
        %v901 = vsel %vm513, %v861, 0
        %v904 = vsel %vm513, %v863, 0
        %v907 = vsel %vm513, %v865, 0
        %v910 = vsel %vm513, %v867, 0
        %v913 = vsel %vm513, %v869, 0
        %915 = vmatpush.msra.mxu0 0.0
        %916 = vmatpush.msra.mxu0 0.0
        %917 = vmatpush.msra.mxu0 0.0
        %918 = vmatpush.msra.mxu0 0.0
        %919 = vmatpush.msra.mxu0 0.0
        %920 = vmatpush.msra.mxu0 0.0
        %921 = vmatpush.msra.mxu0 0.0
        %922 = vmatpush.msra.mxu0 0.0
        %923 = vmatpush.msra.mxu0 0.0
        %924 = vmatpush.msra.mxu0 0.0
        %925 = vmatpush.msra.mxu0 0.0
        %926 = vmatpush.msra.mxu0 %v875
        %927 = vmatpush.msra.mxu0 %v874
        %928 = vmatpush.msra.mxu0 %v873
        %929 = vmatpush.msra.mxu0 %v872
        %930 = vmatpush.msra.mxu0 %v871
        %931 = vmatmul.f32.gmra.mxu0 %v877
        %v932 = vpop.f32.mrf.mxu0
        %v933 = vadd.f32 0.0, %v932
        %934 = vmatmul.f32.gmra.mxu0 %v880
        %v935 = vpop.f32.mrf.mxu0
        %v936 = vadd.f32 0.0, %v935
        %937 = vmatmul.f32.gmra.mxu0 %v883
        %v938 = vpop.f32.mrf.mxu0
        %v939 = vadd.f32 0.0, %v938
        %940 = vmatmul.f32.gmra.mxu0 %v886
        %v941 = vpop.f32.mrf.mxu0
        %v942 = vadd.f32 0.0, %v941
        %943 = vmatmul.f32.gmra.mxu0 %v889
        %v944 = vpop.f32.mrf.mxu0
        %v945 = vadd.f32 0.0, %v944
        %946 = vmatmul.f32.gmra.mxu0 %v892
        %v947 = vpop.f32.mrf.mxu0
        %v948 = vadd.f32 0.0, %v947
        %949 = vmatmul.f32.gmra.mxu0 %v895
        %v950 = vpop.f32.mrf.mxu0
        %v951 = vadd.f32 0.0, %v950
        %952 = vmatmul.f32.gmra.mxu0 %v898
        %v953 = vpop.f32.mrf.mxu0
        %v954 = vadd.f32 0.0, %v953
        %955 = vmatmul.f32.gmra.mxu0 %v901
        %v956 = vpop.f32.mrf.mxu0
        %v957 = vadd.f32 0.0, %v956
        %958 = vmatmul.f32.gmra.mxu0 %v904
        %v959 = vpop.f32.mrf.mxu0
        %v960 = vadd.f32 0.0, %v959
        %961 = vmatmul.f32.gmra.mxu0 %v907
        %v962 = vpop.f32.mrf.mxu0
        %v963 = vadd.f32 0.0, %v962
        %964 = vmatmul.f32.gmra.mxu0 %v910
        %v965 = vpop.f32.mrf.mxu0
        %v966 = vadd.f32 0.0, %v965
        %967 = vmatmul.f32.gmra.mxu0 %v913
        %v968 = vpop.f32.mrf.mxu0
        %v969 = vadd.f32 0.0, %v968
        %970 = vdwg.mxu0
        %v971 = vadd.f32 %v831, %v933
        %v972 = vadd.f32 %v832, %v936
        %v973 = vadd.f32 %v833, %v939
        %v974 = vadd.f32 %v834, %v942
        %v975 = vadd.f32 %v835, %v945
        %v976 = vadd.f32 %v836, %v948
        %v977 = vadd.f32 %v837, %v951
        %v978 = vadd.f32 %v838, %v954
        %v979 = vadd.f32 %v839, %v957
        %v980 = vadd.f32 %v840, %v960
        %v981 = vadd.f32 %v841, %v963
        %v982 = vadd.f32 %v842, %v966
        %v983 = vadd.f32 %v843, %v969
        %s984 = scalar_lea.vmem %s450, 4
        %v985 = vld [vmem:[%s984] ss:$5 sm:$0xff]
        %s986 = scalar_lea.vmem %s450, 44
        %v987 = vld [vmem:[%s986] ss:$5 sm:$0xff]
        %s988 = scalar_lea.vmem %s450, 84
        %v989 = vld [vmem:[%s988] ss:$5 sm:$0xff]
        %s990 = scalar_lea.vmem %s450, 124
        %v991 = vld [vmem:[%s990] ss:$5 sm:$0xff]
        %s992 = scalar_lea.vmem %s450, 164
        %v993 = vld [vmem:[%s992] ss:$5 sm:$0xff]
        %s994 = scalar_lea.vmem %s450, 204
        %v995 = vld [vmem:[%s994] ss:$5 sm:$0xff]
        %s996 = scalar_lea.vmem %s450, 244
        %v997 = vld [vmem:[%s996] ss:$5 sm:$0xff]
        %s998 = scalar_lea.vmem %s450, 284
        %v999 = vld [vmem:[%s998] ss:$5 sm:$0xff]
        %s1000 = scalar_lea.vmem %s450, 324
        %v1001 = vld [vmem:[%s1000] ss:$5 sm:$0xff]
        %s1002 = scalar_lea.vmem %s450, 364
        %v1003 = vld [vmem:[%s1002] ss:$5 sm:$0xff]
        %s1004 = scalar_lea.vmem %s450, 404
        %v1005 = vld [vmem:[%s1004] ss:$5 sm:$0xff]
        %s1006 = scalar_lea.vmem %s450, 444
        %v1007 = vld [vmem:[%s1006] ss:$5 sm:$0xff]
        %s1008 = scalar_lea.vmem %s450, 484
        %v1009 = vld [vmem:[%s1008] ss:$5 sm:$0x7]
        %s1010 = scalar_lea.vmem [#allocation4], 160
        %v1011 = vld [vmem:[%s1010] sm:$0xff]
        %v1012 = vld [vmem:[%s1010 + $0x8] sm:$0xff]
        %v1013 = vld [vmem:[%s1010 + $0x10] sm:$0xff]
        %v1014 = vld [vmem:[%s1010 + $0x18] sm:$0xff]
        %v1015 = vld [vmem:[%s1010 + $0x20] sm:$0xff]
        %v1017 = vsel %vm513, %v985, 0
        %v1020 = vsel %vm513, %v987, 0
        %v1023 = vsel %vm513, %v989, 0
        %v1026 = vsel %vm513, %v991, 0
        %v1029 = vsel %vm513, %v993, 0
        %v1032 = vsel %vm513, %v995, 0
        %v1035 = vsel %vm513, %v997, 0
        %v1038 = vsel %vm513, %v999, 0
        %v1041 = vsel %vm513, %v1001, 0
        %v1044 = vsel %vm513, %v1003, 0
        %v1047 = vsel %vm513, %v1005, 0
        %v1050 = vsel %vm513, %v1007, 0
        %v1053 = vsel %vm513, %v1009, 0
        %1055 = vmatpush.msra.mxu0 0.0
        %1056 = vmatpush.msra.mxu0 0.0
        %1057 = vmatpush.msra.mxu0 0.0
        %1058 = vmatpush.msra.mxu0 0.0
        %1059 = vmatpush.msra.mxu0 0.0
        %1060 = vmatpush.msra.mxu0 0.0
        %1061 = vmatpush.msra.mxu0 0.0
        %1062 = vmatpush.msra.mxu0 0.0
        %1063 = vmatpush.msra.mxu0 0.0
        %1064 = vmatpush.msra.mxu0 0.0
        %1065 = vmatpush.msra.mxu0 0.0
        %1066 = vmatpush.msra.mxu0 %v1015
        %1067 = vmatpush.msra.mxu0 %v1014
        %1068 = vmatpush.msra.mxu0 %v1013
        %1069 = vmatpush.msra.mxu0 %v1012
        %1070 = vmatpush.msra.mxu0 %v1011
        %1071 = vmatmul.f32.gmra.mxu0 %v1017
        %v1072 = vpop.f32.mrf.mxu0
        %v1073 = vadd.f32 0.0, %v1072
        %1074 = vmatmul.f32.gmra.mxu0 %v1020
        %v1075 = vpop.f32.mrf.mxu0
        %v1076 = vadd.f32 0.0, %v1075
        %1077 = vmatmul.f32.gmra.mxu0 %v1023
        %v1078 = vpop.f32.mrf.mxu0
        %v1079 = vadd.f32 0.0, %v1078
        %1080 = vmatmul.f32.gmra.mxu0 %v1026
        %v1081 = vpop.f32.mrf.mxu0
        %v1082 = vadd.f32 0.0, %v1081
        %1083 = vmatmul.f32.gmra.mxu0 %v1029
        %v1084 = vpop.f32.mrf.mxu0
        %v1085 = vadd.f32 0.0, %v1084
        %1086 = vmatmul.f32.gmra.mxu0 %v1032
        %v1087 = vpop.f32.mrf.mxu0
        %v1088 = vadd.f32 0.0, %v1087
        %1089 = vmatmul.f32.gmra.mxu0 %v1035
        %v1090 = vpop.f32.mrf.mxu0
        %v1091 = vadd.f32 0.0, %v1090
        %1092 = vmatmul.f32.gmra.mxu0 %v1038
        %v1093 = vpop.f32.mrf.mxu0
        %v1094 = vadd.f32 0.0, %v1093
        %1095 = vmatmul.f32.gmra.mxu0 %v1041
        %v1096 = vpop.f32.mrf.mxu0
        %v1097 = vadd.f32 0.0, %v1096
        %1098 = vmatmul.f32.gmra.mxu0 %v1044
        %v1099 = vpop.f32.mrf.mxu0
        %v1100 = vadd.f32 0.0, %v1099
        %1101 = vmatmul.f32.gmra.mxu0 %v1047
        %v1102 = vpop.f32.mrf.mxu0
        %v1103 = vadd.f32 0.0, %v1102
        %1104 = vmatmul.f32.gmra.mxu0 %v1050
        %v1105 = vpop.f32.mrf.mxu0
        %v1106 = vadd.f32 0.0, %v1105
        %1107 = vmatmul.f32.gmra.mxu0 %v1053
        %v1108 = vpop.f32.mrf.mxu0
        %v1109 = vadd.f32 0.0, %v1108
        %1110 = vdwg.mxu0
        %v1111 = vadd.f32 %v971, %v1073
        %v1112 = vadd.f32 %v972, %v1076
        %v1113 = vadd.f32 %v973, %v1079
        %v1114 = vadd.f32 %v974, %v1082
        %v1115 = vadd.f32 %v975, %v1085
        %v1116 = vadd.f32 %v976, %v1088
        %v1117 = vadd.f32 %v977, %v1091
        %v1118 = vadd.f32 %v978, %v1094
        %v1119 = vadd.f32 %v979, %v1097
        %v1120 = vadd.f32 %v980, %v1100
        %v1121 = vadd.f32 %v981, %v1103
        %v1122 = vadd.f32 %v982, %v1106
        %v1123 = vadd.f32 %v983, %v1109
        %s1124 = scalar_lea.vmem %s450, 5
        %v1125 = vld [vmem:[%s1124] ss:$5 sm:$0xff]
        %s1126 = scalar_lea.vmem %s450, 45
        %v1127 = vld [vmem:[%s1126] ss:$5 sm:$0xff]
        %s1128 = scalar_lea.vmem %s450, 85
        %v1129 = vld [vmem:[%s1128] ss:$5 sm:$0xff]
        %s1130 = scalar_lea.vmem %s450, 125
        %v1131 = vld [vmem:[%s1130] ss:$5 sm:$0xff]
        %s1132 = scalar_lea.vmem %s450, 165
        %v1133 = vld [vmem:[%s1132] ss:$5 sm:$0xff]
        %s1134 = scalar_lea.vmem %s450, 205
        %v1135 = vld [vmem:[%s1134] ss:$5 sm:$0xff]
        %s1136 = scalar_lea.vmem %s450, 245
        %v1137 = vld [vmem:[%s1136] ss:$5 sm:$0xff]
        %s1138 = scalar_lea.vmem %s450, 285
        %v1139 = vld [vmem:[%s1138] ss:$5 sm:$0xff]
        %s1140 = scalar_lea.vmem %s450, 325
        %v1141 = vld [vmem:[%s1140] ss:$5 sm:$0xff]
        %s1142 = scalar_lea.vmem %s450, 365
        %v1143 = vld [vmem:[%s1142] ss:$5 sm:$0xff]
        %s1144 = scalar_lea.vmem %s450, 405
        %v1145 = vld [vmem:[%s1144] ss:$5 sm:$0xff]
        %s1146 = scalar_lea.vmem %s450, 445
        %v1147 = vld [vmem:[%s1146] ss:$5 sm:$0xff]
        %s1148 = scalar_lea.vmem %s450, 485
        %v1149 = vld [vmem:[%s1148] ss:$5 sm:$0x7]
        %s1150 = scalar_lea.vmem [#allocation4], 200
        %v1151 = vld [vmem:[%s1150] sm:$0xff]
        %v1152 = vld [vmem:[%s1150 + $0x8] sm:$0xff]
        %v1153 = vld [vmem:[%s1150 + $0x10] sm:$0xff]
        %v1154 = vld [vmem:[%s1150 + $0x18] sm:$0xff]
        %v1155 = vld [vmem:[%s1150 + $0x20] sm:$0xff]
        %v1157 = vsel %vm513, %v1125, 0
        %v1160 = vsel %vm513, %v1127, 0
        %v1163 = vsel %vm513, %v1129, 0
        %v1166 = vsel %vm513, %v1131, 0
        %v1169 = vsel %vm513, %v1133, 0
        %v1172 = vsel %vm513, %v1135, 0
        %v1175 = vsel %vm513, %v1137, 0
        %v1178 = vsel %vm513, %v1139, 0
        %v1181 = vsel %vm513, %v1141, 0
        %v1184 = vsel %vm513, %v1143, 0
        %v1187 = vsel %vm513, %v1145, 0
        %v1190 = vsel %vm513, %v1147, 0
        %v1193 = vsel %vm513, %v1149, 0
        %1195 = vmatpush.msra.mxu0 0.0
        %1196 = vmatpush.msra.mxu0 0.0
        %1197 = vmatpush.msra.mxu0 0.0
        %1198 = vmatpush.msra.mxu0 0.0
        %1199 = vmatpush.msra.mxu0 0.0
        %1200 = vmatpush.msra.mxu0 0.0
        %1201 = vmatpush.msra.mxu0 0.0
        %1202 = vmatpush.msra.mxu0 0.0
        %1203 = vmatpush.msra.mxu0 0.0
        %1204 = vmatpush.msra.mxu0 0.0
        %1205 = vmatpush.msra.mxu0 0.0
        %1206 = vmatpush.msra.mxu0 %v1155
        %1207 = vmatpush.msra.mxu0 %v1154
        %1208 = vmatpush.msra.mxu0 %v1153
        %1209 = vmatpush.msra.mxu0 %v1152
        %1210 = vmatpush.msra.mxu0 %v1151
        %1211 = vmatmul.f32.gmra.mxu0 %v1157
        %v1212 = vpop.f32.mrf.mxu0
        %v1213 = vadd.f32 0.0, %v1212
        %1214 = vmatmul.f32.gmra.mxu0 %v1160
        %v1215 = vpop.f32.mrf.mxu0
        %v1216 = vadd.f32 0.0, %v1215
        %1217 = vmatmul.f32.gmra.mxu0 %v1163
        %v1218 = vpop.f32.mrf.mxu0
        %v1219 = vadd.f32 0.0, %v1218
        %1220 = vmatmul.f32.gmra.mxu0 %v1166
        %v1221 = vpop.f32.mrf.mxu0
        %v1222 = vadd.f32 0.0, %v1221
        %1223 = vmatmul.f32.gmra.mxu0 %v1169
        %v1224 = vpop.f32.mrf.mxu0
        %v1225 = vadd.f32 0.0, %v1224
        %1226 = vmatmul.f32.gmra.mxu0 %v1172
        %v1227 = vpop.f32.mrf.mxu0
        %v1228 = vadd.f32 0.0, %v1227
        %1229 = vmatmul.f32.gmra.mxu0 %v1175
        %v1230 = vpop.f32.mrf.mxu0
        %v1231 = vadd.f32 0.0, %v1230
        %1232 = vmatmul.f32.gmra.mxu0 %v1178
        %v1233 = vpop.f32.mrf.mxu0
        %v1234 = vadd.f32 0.0, %v1233
        %1235 = vmatmul.f32.gmra.mxu0 %v1181
        %v1236 = vpop.f32.mrf.mxu0
        %v1237 = vadd.f32 0.0, %v1236
        %1238 = vmatmul.f32.gmra.mxu0 %v1184
        %v1239 = vpop.f32.mrf.mxu0
        %v1240 = vadd.f32 0.0, %v1239
        %1241 = vmatmul.f32.gmra.mxu0 %v1187
        %v1242 = vpop.f32.mrf.mxu0
        %v1243 = vadd.f32 0.0, %v1242
        %1244 = vmatmul.f32.gmra.mxu0 %v1190
        %v1245 = vpop.f32.mrf.mxu0
        %v1246 = vadd.f32 0.0, %v1245
        %1247 = vmatmul.f32.gmra.mxu0 %v1193
        %v1248 = vpop.f32.mrf.mxu0
        %v1249 = vadd.f32 0.0, %v1248
        %1250 = vdwg.mxu0
        %v1251 = vadd.f32 %v1111, %v1213
        %v1252 = vadd.f32 %v1112, %v1216
        %v1253 = vadd.f32 %v1113, %v1219
        %v1254 = vadd.f32 %v1114, %v1222
        %v1255 = vadd.f32 %v1115, %v1225
        %v1256 = vadd.f32 %v1116, %v1228
        %v1257 = vadd.f32 %v1117, %v1231
        %v1258 = vadd.f32 %v1118, %v1234
        %v1259 = vadd.f32 %v1119, %v1237
        %v1260 = vadd.f32 %v1120, %v1240
        %v1261 = vadd.f32 %v1121, %v1243
        %v1262 = vadd.f32 %v1122, %v1246
        %v1263 = vadd.f32 %v1123, %v1249
        %s1264 = scalar_lea.vmem %s450, 6
        %v1265 = vld [vmem:[%s1264] ss:$5 sm:$0xff]
        %s1266 = scalar_lea.vmem %s450, 46
        %v1267 = vld [vmem:[%s1266] ss:$5 sm:$0xff]
        %s1268 = scalar_lea.vmem %s450, 86
        %v1269 = vld [vmem:[%s1268] ss:$5 sm:$0xff]
        %s1270 = scalar_lea.vmem %s450, 126
        %v1271 = vld [vmem:[%s1270] ss:$5 sm:$0xff]
        %s1272 = scalar_lea.vmem %s450, 166
        %v1273 = vld [vmem:[%s1272] ss:$5 sm:$0xff]
        %s1274 = scalar_lea.vmem %s450, 206
        %v1275 = vld [vmem:[%s1274] ss:$5 sm:$0xff]
        %s1276 = scalar_lea.vmem %s450, 246
        %v1277 = vld [vmem:[%s1276] ss:$5 sm:$0xff]
        %s1278 = scalar_lea.vmem %s450, 286
        %v1279 = vld [vmem:[%s1278] ss:$5 sm:$0xff]
        %s1280 = scalar_lea.vmem %s450, 326
        %v1281 = vld [vmem:[%s1280] ss:$5 sm:$0xff]
        %s1282 = scalar_lea.vmem %s450, 366
        %v1283 = vld [vmem:[%s1282] ss:$5 sm:$0xff]
        %s1284 = scalar_lea.vmem %s450, 406
        %v1285 = vld [vmem:[%s1284] ss:$5 sm:$0xff]
        %s1286 = scalar_lea.vmem %s450, 446
        %v1287 = vld [vmem:[%s1286] ss:$5 sm:$0xff]
        %s1288 = scalar_lea.vmem %s450, 486
        %v1289 = vld [vmem:[%s1288] ss:$5 sm:$0x7]
        %s1290 = scalar_lea.vmem [#allocation4], 240
        %v1291 = vld [vmem:[%s1290] sm:$0xff]
        %v1292 = vld [vmem:[%s1290 + $0x8] sm:$0xff]
        %v1293 = vld [vmem:[%s1290 + $0x10] sm:$0xff]
        %v1294 = vld [vmem:[%s1290 + $0x18] sm:$0xff]
        %v1295 = vld [vmem:[%s1290 + $0x20] sm:$0xff]
        %v1297 = vsel %vm513, %v1265, 0
        %v1300 = vsel %vm513, %v1267, 0
        %v1303 = vsel %vm513, %v1269, 0
        %v1306 = vsel %vm513, %v1271, 0
        %v1309 = vsel %vm513, %v1273, 0
        %v1312 = vsel %vm513, %v1275, 0
        %v1315 = vsel %vm513, %v1277, 0
        %v1318 = vsel %vm513, %v1279, 0
        %v1321 = vsel %vm513, %v1281, 0
        %v1324 = vsel %vm513, %v1283, 0
        %v1327 = vsel %vm513, %v1285, 0
        %v1330 = vsel %vm513, %v1287, 0
        %v1333 = vsel %vm513, %v1289, 0
        %1335 = vmatpush.msra.mxu0 0.0
        %1336 = vmatpush.msra.mxu0 0.0
        %1337 = vmatpush.msra.mxu0 0.0
        %1338 = vmatpush.msra.mxu0 0.0
        %1339 = vmatpush.msra.mxu0 0.0
        %1340 = vmatpush.msra.mxu0 0.0
        %1341 = vmatpush.msra.mxu0 0.0
        %1342 = vmatpush.msra.mxu0 0.0
        %1343 = vmatpush.msra.mxu0 0.0
        %1344 = vmatpush.msra.mxu0 0.0
        %1345 = vmatpush.msra.mxu0 0.0
        %1346 = vmatpush.msra.mxu0 %v1295
        %1347 = vmatpush.msra.mxu0 %v1294
        %1348 = vmatpush.msra.mxu0 %v1293
        %1349 = vmatpush.msra.mxu0 %v1292
        %1350 = vmatpush.msra.mxu0 %v1291
        %1351 = vmatmul.f32.gmra.mxu0 %v1297
        %v1352 = vpop.f32.mrf.mxu0
        %v1353 = vadd.f32 0.0, %v1352
        %1354 = vmatmul.f32.gmra.mxu0 %v1300
        %v1355 = vpop.f32.mrf.mxu0
        %v1356 = vadd.f32 0.0, %v1355
        %1357 = vmatmul.f32.gmra.mxu0 %v1303
        %v1358 = vpop.f32.mrf.mxu0
        %v1359 = vadd.f32 0.0, %v1358
        %1360 = vmatmul.f32.gmra.mxu0 %v1306
        %v1361 = vpop.f32.mrf.mxu0
        %v1362 = vadd.f32 0.0, %v1361
        %1363 = vmatmul.f32.gmra.mxu0 %v1309
        %v1364 = vpop.f32.mrf.mxu0
        %v1365 = vadd.f32 0.0, %v1364
        %1366 = vmatmul.f32.gmra.mxu0 %v1312
        %v1367 = vpop.f32.mrf.mxu0
        %v1368 = vadd.f32 0.0, %v1367
        %1369 = vmatmul.f32.gmra.mxu0 %v1315
        %v1370 = vpop.f32.mrf.mxu0
        %v1371 = vadd.f32 0.0, %v1370
        %1372 = vmatmul.f32.gmra.mxu0 %v1318
        %v1373 = vpop.f32.mrf.mxu0
        %v1374 = vadd.f32 0.0, %v1373
        %1375 = vmatmul.f32.gmra.mxu0 %v1321
        %v1376 = vpop.f32.mrf.mxu0
        %v1377 = vadd.f32 0.0, %v1376
        %1378 = vmatmul.f32.gmra.mxu0 %v1324
        %v1379 = vpop.f32.mrf.mxu0
        %v1380 = vadd.f32 0.0, %v1379
        %1381 = vmatmul.f32.gmra.mxu0 %v1327
        %v1382 = vpop.f32.mrf.mxu0
        %v1383 = vadd.f32 0.0, %v1382
        %1384 = vmatmul.f32.gmra.mxu0 %v1330
        %v1385 = vpop.f32.mrf.mxu0
        %v1386 = vadd.f32 0.0, %v1385
        %1387 = vmatmul.f32.gmra.mxu0 %v1333
        %v1388 = vpop.f32.mrf.mxu0
        %v1389 = vadd.f32 0.0, %v1388
        %1390 = vdwg.mxu0
        %v1391 = vadd.f32 %v1251, %v1353
        %v1392 = vadd.f32 %v1252, %v1356
        %v1393 = vadd.f32 %v1253, %v1359
        %v1394 = vadd.f32 %v1254, %v1362
        %v1395 = vadd.f32 %v1255, %v1365
        %v1396 = vadd.f32 %v1256, %v1368
        %v1397 = vadd.f32 %v1257, %v1371
        %v1398 = vadd.f32 %v1258, %v1374
        %v1399 = vadd.f32 %v1259, %v1377
        %v1400 = vadd.f32 %v1260, %v1380
        %v1401 = vadd.f32 %v1261, %v1383
        %v1402 = vadd.f32 %v1262, %v1386
        %v1403 = vadd.f32 %v1263, %v1389
        %s1404 = scalar_lea.vmem %s450, 7
        %v1405 = vld [vmem:[%s1404] ss:$5 sm:$0xff]
        %s1406 = scalar_lea.vmem %s450, 47
        %v1407 = vld [vmem:[%s1406] ss:$5 sm:$0xff]
        %s1408 = scalar_lea.vmem %s450, 87
        %v1409 = vld [vmem:[%s1408] ss:$5 sm:$0xff]
        %s1410 = scalar_lea.vmem %s450, 127
        %v1411 = vld [vmem:[%s1410] ss:$5 sm:$0xff]
        %s1412 = scalar_lea.vmem %s450, 167
        %v1413 = vld [vmem:[%s1412] ss:$5 sm:$0xff]
        %s1414 = scalar_lea.vmem %s450, 207
        %v1415 = vld [vmem:[%s1414] ss:$5 sm:$0xff]
        %s1416 = scalar_lea.vmem %s450, 247
        %v1417 = vld [vmem:[%s1416] ss:$5 sm:$0xff]
        %s1418 = scalar_lea.vmem %s450, 287
        %v1419 = vld [vmem:[%s1418] ss:$5 sm:$0xff]
        %s1420 = scalar_lea.vmem %s450, 327
        %v1421 = vld [vmem:[%s1420] ss:$5 sm:$0xff]
        %s1422 = scalar_lea.vmem %s450, 367
        %v1423 = vld [vmem:[%s1422] ss:$5 sm:$0xff]
        %s1424 = scalar_lea.vmem %s450, 407
        %v1425 = vld [vmem:[%s1424] ss:$5 sm:$0xff]
        %s1426 = scalar_lea.vmem %s450, 447
        %v1427 = vld [vmem:[%s1426] ss:$5 sm:$0xff]
        %s1428 = scalar_lea.vmem %s450, 487
        %v1429 = vld [vmem:[%s1428] ss:$5 sm:$0x7]
        %s1430 = scalar_lea.vmem [#allocation4], 280
        %v1431 = vld [vmem:[%s1430] sm:$0xff]
        %v1432 = vld [vmem:[%s1430 + $0x8] sm:$0xff]
        %v1433 = vld [vmem:[%s1430 + $0x10] sm:$0xff]
        %v1434 = vld [vmem:[%s1430 + $0x18] sm:$0xff]
        %v1435 = vld [vmem:[%s1430 + $0x20] sm:$0xff]
        %v1437 = vsel %vm513, %v1405, 0
        %v1440 = vsel %vm513, %v1407, 0
        %v1443 = vsel %vm513, %v1409, 0
        %v1446 = vsel %vm513, %v1411, 0
        %v1449 = vsel %vm513, %v1413, 0
        %v1452 = vsel %vm513, %v1415, 0
        %v1455 = vsel %vm513, %v1417, 0
        %v1458 = vsel %vm513, %v1419, 0
        %v1461 = vsel %vm513, %v1421, 0
        %v1464 = vsel %vm513, %v1423, 0
        %v1467 = vsel %vm513, %v1425, 0
        %v1470 = vsel %vm513, %v1427, 0
        %v1473 = vsel %vm513, %v1429, 0
        %1475 = vmatpush.msra.mxu0 0.0
        %1476 = vmatpush.msra.mxu0 0.0
        %1477 = vmatpush.msra.mxu0 0.0
        %1478 = vmatpush.msra.mxu0 0.0
        %1479 = vmatpush.msra.mxu0 0.0
        %1480 = vmatpush.msra.mxu0 0.0
        %1481 = vmatpush.msra.mxu0 0.0
        %1482 = vmatpush.msra.mxu0 0.0
        %1483 = vmatpush.msra.mxu0 0.0
        %1484 = vmatpush.msra.mxu0 0.0
        %1485 = vmatpush.msra.mxu0 0.0
        %1486 = vmatpush.msra.mxu0 %v1435
        %1487 = vmatpush.msra.mxu0 %v1434
        %1488 = vmatpush.msra.mxu0 %v1433
        %1489 = vmatpush.msra.mxu0 %v1432
        %1490 = vmatpush.msra.mxu0 %v1431
        %1491 = vmatmul.f32.gmra.mxu0 %v1437
        %v1492 = vpop.f32.mrf.mxu0
        %v1493 = vadd.f32 0.0, %v1492
        %1494 = vmatmul.f32.gmra.mxu0 %v1440
        %v1495 = vpop.f32.mrf.mxu0
        %v1496 = vadd.f32 0.0, %v1495
        %1497 = vmatmul.f32.gmra.mxu0 %v1443
        %v1498 = vpop.f32.mrf.mxu0
        %v1499 = vadd.f32 0.0, %v1498
        %1500 = vmatmul.f32.gmra.mxu0 %v1446
        %v1501 = vpop.f32.mrf.mxu0
        %v1502 = vadd.f32 0.0, %v1501
        %1503 = vmatmul.f32.gmra.mxu0 %v1449
        %v1504 = vpop.f32.mrf.mxu0
        %v1505 = vadd.f32 0.0, %v1504
        %1506 = vmatmul.f32.gmra.mxu0 %v1452
        %v1507 = vpop.f32.mrf.mxu0
        %v1508 = vadd.f32 0.0, %v1507
        %1509 = vmatmul.f32.gmra.mxu0 %v1455
        %v1510 = vpop.f32.mrf.mxu0
        %v1511 = vadd.f32 0.0, %v1510
        %1512 = vmatmul.f32.gmra.mxu0 %v1458
        %v1513 = vpop.f32.mrf.mxu0
        %v1514 = vadd.f32 0.0, %v1513
        %1515 = vmatmul.f32.gmra.mxu0 %v1461
        %v1516 = vpop.f32.mrf.mxu0
        %v1517 = vadd.f32 0.0, %v1516
        %1518 = vmatmul.f32.gmra.mxu0 %v1464
        %v1519 = vpop.f32.mrf.mxu0
        %v1520 = vadd.f32 0.0, %v1519
        %1521 = vmatmul.f32.gmra.mxu0 %v1467
        %v1522 = vpop.f32.mrf.mxu0
        %v1523 = vadd.f32 0.0, %v1522
        %1524 = vmatmul.f32.gmra.mxu0 %v1470
        %v1525 = vpop.f32.mrf.mxu0
        %v1526 = vadd.f32 0.0, %v1525
        %1527 = vmatmul.f32.gmra.mxu0 %v1473
        %v1528 = vpop.f32.mrf.mxu0
        %v1529 = vadd.f32 0.0, %v1528
        %1530 = vdwg.mxu0
        %v1531 = vadd.f32 %v1391, %v1493
        %v1532 = vadd.f32 %v1392, %v1496
        %v1533 = vadd.f32 %v1393, %v1499
        %v1534 = vadd.f32 %v1394, %v1502
        %v1535 = vadd.f32 %v1395, %v1505
        %v1536 = vadd.f32 %v1396, %v1508
        %v1537 = vadd.f32 %v1397, %v1511
        %v1538 = vadd.f32 %v1398, %v1514
        %v1539 = vadd.f32 %v1399, %v1517
        %v1540 = vadd.f32 %v1400, %v1520
        %v1541 = vadd.f32 %v1401, %v1523
        %v1542 = vadd.f32 %v1402, %v1526
        %v1543 = vadd.f32 %v1403, %v1529
        %s1544 = scalar_lea.vmem %s450, 8
        %v1545 = vld [vmem:[%s1544] ss:$5 sm:$0xff]
        %s1546 = scalar_lea.vmem %s450, 48
        %v1547 = vld [vmem:[%s1546] ss:$5 sm:$0xff]
        %s1548 = scalar_lea.vmem %s450, 88
        %v1549 = vld [vmem:[%s1548] ss:$5 sm:$0xff]
        %s1550 = scalar_lea.vmem %s450, 128
        %v1551 = vld [vmem:[%s1550] ss:$5 sm:$0xff]
        %s1552 = scalar_lea.vmem %s450, 168
        %v1553 = vld [vmem:[%s1552] ss:$5 sm:$0xff]
        %s1554 = scalar_lea.vmem %s450, 208
        %v1555 = vld [vmem:[%s1554] ss:$5 sm:$0xff]
        %s1556 = scalar_lea.vmem %s450, 248
        %v1557 = vld [vmem:[%s1556] ss:$5 sm:$0xff]
        %s1558 = scalar_lea.vmem %s450, 288
        %v1559 = vld [vmem:[%s1558] ss:$5 sm:$0xff]
        %s1560 = scalar_lea.vmem %s450, 328
        %v1561 = vld [vmem:[%s1560] ss:$5 sm:$0xff]
        %s1562 = scalar_lea.vmem %s450, 368
        %v1563 = vld [vmem:[%s1562] ss:$5 sm:$0xff]
        %s1564 = scalar_lea.vmem %s450, 408
        %v1565 = vld [vmem:[%s1564] ss:$5 sm:$0xff]
        %s1566 = scalar_lea.vmem %s450, 448
        %v1567 = vld [vmem:[%s1566] ss:$5 sm:$0xff]
        %s1568 = scalar_lea.vmem %s450, 488
        %v1569 = vld [vmem:[%s1568] ss:$5 sm:$0x7]
        %s1570 = scalar_lea.vmem [#allocation4], 320
        %v1571 = vld [vmem:[%s1570] sm:$0xff]
        %v1572 = vld [vmem:[%s1570 + $0x8] sm:$0xff]
        %v1573 = vld [vmem:[%s1570 + $0x10] sm:$0xff]
        %v1574 = vld [vmem:[%s1570 + $0x18] sm:$0xff]
        %v1575 = vld [vmem:[%s1570 + $0x20] sm:$0xff]
        %v1577 = vsel %vm513, %v1545, 0
        %v1580 = vsel %vm513, %v1547, 0
        %v1583 = vsel %vm513, %v1549, 0
        %v1586 = vsel %vm513, %v1551, 0
        %v1589 = vsel %vm513, %v1553, 0
        %v1592 = vsel %vm513, %v1555, 0
        %v1595 = vsel %vm513, %v1557, 0
        %v1598 = vsel %vm513, %v1559, 0
        %v1601 = vsel %vm513, %v1561, 0
        %v1604 = vsel %vm513, %v1563, 0
        %v1607 = vsel %vm513, %v1565, 0
        %v1610 = vsel %vm513, %v1567, 0
        %v1613 = vsel %vm513, %v1569, 0
        %1615 = vmatpush.msra.mxu0 0.0
        %1616 = vmatpush.msra.mxu0 0.0
        %1617 = vmatpush.msra.mxu0 0.0
        %1618 = vmatpush.msra.mxu0 0.0
        %1619 = vmatpush.msra.mxu0 0.0
        %1620 = vmatpush.msra.mxu0 0.0
        %1621 = vmatpush.msra.mxu0 0.0
        %1622 = vmatpush.msra.mxu0 0.0
        %1623 = vmatpush.msra.mxu0 0.0
        %1624 = vmatpush.msra.mxu0 0.0
        %1625 = vmatpush.msra.mxu0 0.0
        %1626 = vmatpush.msra.mxu0 %v1575
        %1627 = vmatpush.msra.mxu0 %v1574
        %1628 = vmatpush.msra.mxu0 %v1573
        %1629 = vmatpush.msra.mxu0 %v1572
        %1630 = vmatpush.msra.mxu0 %v1571
        %1631 = vmatmul.f32.gmra.mxu0 %v1577
        %v1632 = vpop.f32.mrf.mxu0
        %v1633 = vadd.f32 0.0, %v1632
        %1634 = vmatmul.f32.gmra.mxu0 %v1580
        %v1635 = vpop.f32.mrf.mxu0
        %v1636 = vadd.f32 0.0, %v1635
        %1637 = vmatmul.f32.gmra.mxu0 %v1583
        %v1638 = vpop.f32.mrf.mxu0
        %v1639 = vadd.f32 0.0, %v1638
        %1640 = vmatmul.f32.gmra.mxu0 %v1586
        %v1641 = vpop.f32.mrf.mxu0
        %v1642 = vadd.f32 0.0, %v1641
        %1643 = vmatmul.f32.gmra.mxu0 %v1589
        %v1644 = vpop.f32.mrf.mxu0
        %v1645 = vadd.f32 0.0, %v1644
        %1646 = vmatmul.f32.gmra.mxu0 %v1592
        %v1647 = vpop.f32.mrf.mxu0
        %v1648 = vadd.f32 0.0, %v1647
        %1649 = vmatmul.f32.gmra.mxu0 %v1595
        %v1650 = vpop.f32.mrf.mxu0
        %v1651 = vadd.f32 0.0, %v1650
        %1652 = vmatmul.f32.gmra.mxu0 %v1598
        %v1653 = vpop.f32.mrf.mxu0
        %v1654 = vadd.f32 0.0, %v1653
        %1655 = vmatmul.f32.gmra.mxu0 %v1601
        %v1656 = vpop.f32.mrf.mxu0
        %v1657 = vadd.f32 0.0, %v1656
        %1658 = vmatmul.f32.gmra.mxu0 %v1604
        %v1659 = vpop.f32.mrf.mxu0
        %v1660 = vadd.f32 0.0, %v1659
        %1661 = vmatmul.f32.gmra.mxu0 %v1607
        %v1662 = vpop.f32.mrf.mxu0
        %v1663 = vadd.f32 0.0, %v1662
        %1664 = vmatmul.f32.gmra.mxu0 %v1610
        %v1665 = vpop.f32.mrf.mxu0
        %v1666 = vadd.f32 0.0, %v1665
        %1667 = vmatmul.f32.gmra.mxu0 %v1613
        %v1668 = vpop.f32.mrf.mxu0
        %v1669 = vadd.f32 0.0, %v1668
        %1670 = vdwg.mxu0
        %v1671 = vadd.f32 %v1531, %v1633
        %v1672 = vadd.f32 %v1532, %v1636
        %v1673 = vadd.f32 %v1533, %v1639
        %v1674 = vadd.f32 %v1534, %v1642
        %v1675 = vadd.f32 %v1535, %v1645
        %v1676 = vadd.f32 %v1536, %v1648
        %v1677 = vadd.f32 %v1537, %v1651
        %v1678 = vadd.f32 %v1538, %v1654
        %v1679 = vadd.f32 %v1539, %v1657
        %v1680 = vadd.f32 %v1540, %v1660
        %v1681 = vadd.f32 %v1541, %v1663
        %v1682 = vadd.f32 %v1542, %v1666
        %v1683 = vadd.f32 %v1543, %v1669
        %s1684 = scalar_lea.vmem %s450, 9
        %v1685 = vld [vmem:[%s1684] ss:$5 sm:$0xff]
        %s1686 = scalar_lea.vmem %s450, 49
        %v1687 = vld [vmem:[%s1686] ss:$5 sm:$0xff]
        %s1688 = scalar_lea.vmem %s450, 89
        %v1689 = vld [vmem:[%s1688] ss:$5 sm:$0xff]
        %s1690 = scalar_lea.vmem %s450, 129
        %v1691 = vld [vmem:[%s1690] ss:$5 sm:$0xff]
        %s1692 = scalar_lea.vmem %s450, 169
        %v1693 = vld [vmem:[%s1692] ss:$5 sm:$0xff]
        %s1694 = scalar_lea.vmem %s450, 209
        %v1695 = vld [vmem:[%s1694] ss:$5 sm:$0xff]
        %s1696 = scalar_lea.vmem %s450, 249
        %v1697 = vld [vmem:[%s1696] ss:$5 sm:$0xff]
        %s1698 = scalar_lea.vmem %s450, 289
        %v1699 = vld [vmem:[%s1698] ss:$5 sm:$0xff]
        %s1700 = scalar_lea.vmem %s450, 329
        %v1701 = vld [vmem:[%s1700] ss:$5 sm:$0xff]
        %s1702 = scalar_lea.vmem %s450, 369
        %v1703 = vld [vmem:[%s1702] ss:$5 sm:$0xff]
        %s1704 = scalar_lea.vmem %s450, 409
        %v1705 = vld [vmem:[%s1704] ss:$5 sm:$0xff]
        %s1706 = scalar_lea.vmem %s450, 449
        %v1707 = vld [vmem:[%s1706] ss:$5 sm:$0xff]
        %s1708 = scalar_lea.vmem %s450, 489
        %v1709 = vld [vmem:[%s1708] ss:$5 sm:$0x7]
        %s1710 = scalar_lea.vmem [#allocation4], 360
        %v1711 = vld [vmem:[%s1710] sm:$0xff]
        %v1712 = vld [vmem:[%s1710 + $0x8] sm:$0xff]
        %v1713 = vld [vmem:[%s1710 + $0x10] sm:$0xff]
        %v1714 = vld [vmem:[%s1710 + $0x18] sm:$0xff]
        %v1715 = vld [vmem:[%s1710 + $0x20] sm:$0xff]
        %v1717 = vsel %vm513, %v1685, 0
        %v1720 = vsel %vm513, %v1687, 0
        %v1723 = vsel %vm513, %v1689, 0
        %v1726 = vsel %vm513, %v1691, 0
        %v1729 = vsel %vm513, %v1693, 0
        %v1732 = vsel %vm513, %v1695, 0
        %v1735 = vsel %vm513, %v1697, 0
        %v1738 = vsel %vm513, %v1699, 0
        %v1741 = vsel %vm513, %v1701, 0
        %v1744 = vsel %vm513, %v1703, 0
        %v1747 = vsel %vm513, %v1705, 0
        %v1750 = vsel %vm513, %v1707, 0
        %v1753 = vsel %vm513, %v1709, 0
        %1755 = vmatpush.msra.mxu0 0.0
        %1756 = vmatpush.msra.mxu0 0.0
        %1757 = vmatpush.msra.mxu0 0.0
        %1758 = vmatpush.msra.mxu0 0.0
        %1759 = vmatpush.msra.mxu0 0.0
        %1760 = vmatpush.msra.mxu0 0.0
        %1761 = vmatpush.msra.mxu0 0.0
        %1762 = vmatpush.msra.mxu0 0.0
        %1763 = vmatpush.msra.mxu0 0.0
        %1764 = vmatpush.msra.mxu0 0.0
        %1765 = vmatpush.msra.mxu0 0.0
        %1766 = vmatpush.msra.mxu0 %v1715
        %1767 = vmatpush.msra.mxu0 %v1714
        %1768 = vmatpush.msra.mxu0 %v1713
        %1769 = vmatpush.msra.mxu0 %v1712
        %1770 = vmatpush.msra.mxu0 %v1711
        %1771 = vmatmul.f32.gmra.mxu0 %v1717
        %v1772 = vpop.f32.mrf.mxu0
        %v1773 = vadd.f32 0.0, %v1772
        %1774 = vmatmul.f32.gmra.mxu0 %v1720
        %v1775 = vpop.f32.mrf.mxu0
        %v1776 = vadd.f32 0.0, %v1775
        %1777 = vmatmul.f32.gmra.mxu0 %v1723
        %v1778 = vpop.f32.mrf.mxu0
        %v1779 = vadd.f32 0.0, %v1778
        %1780 = vmatmul.f32.gmra.mxu0 %v1726
        %v1781 = vpop.f32.mrf.mxu0
        %v1782 = vadd.f32 0.0, %v1781
        %1783 = vmatmul.f32.gmra.mxu0 %v1729
        %v1784 = vpop.f32.mrf.mxu0
        %v1785 = vadd.f32 0.0, %v1784
        %1786 = vmatmul.f32.gmra.mxu0 %v1732
        %v1787 = vpop.f32.mrf.mxu0
        %v1788 = vadd.f32 0.0, %v1787
        %1789 = vmatmul.f32.gmra.mxu0 %v1735
        %v1790 = vpop.f32.mrf.mxu0
        %v1791 = vadd.f32 0.0, %v1790
        %1792 = vmatmul.f32.gmra.mxu0 %v1738
        %v1793 = vpop.f32.mrf.mxu0
        %v1794 = vadd.f32 0.0, %v1793
        %1795 = vmatmul.f32.gmra.mxu0 %v1741
        %v1796 = vpop.f32.mrf.mxu0
        %v1797 = vadd.f32 0.0, %v1796
        %1798 = vmatmul.f32.gmra.mxu0 %v1744
        %v1799 = vpop.f32.mrf.mxu0
        %v1800 = vadd.f32 0.0, %v1799
        %1801 = vmatmul.f32.gmra.mxu0 %v1747
        %v1802 = vpop.f32.mrf.mxu0
        %v1803 = vadd.f32 0.0, %v1802
        %1804 = vmatmul.f32.gmra.mxu0 %v1750
        %v1805 = vpop.f32.mrf.mxu0
        %v1806 = vadd.f32 0.0, %v1805
        %1807 = vmatmul.f32.gmra.mxu0 %v1753
        %v1808 = vpop.f32.mrf.mxu0
        %v1809 = vadd.f32 0.0, %v1808
        %1810 = vdwg.mxu0
        %v1811 = vadd.f32 %v1671, %v1773
        %v1812 = vadd.f32 %v1672, %v1776
        %v1813 = vadd.f32 %v1673, %v1779
        %v1814 = vadd.f32 %v1674, %v1782
        %v1815 = vadd.f32 %v1675, %v1785
        %v1816 = vadd.f32 %v1676, %v1788
        %v1817 = vadd.f32 %v1677, %v1791
        %v1818 = vadd.f32 %v1678, %v1794
        %v1819 = vadd.f32 %v1679, %v1797
        %v1820 = vadd.f32 %v1680, %v1800
        %v1821 = vadd.f32 %v1681, %v1803
        %v1822 = vadd.f32 %v1682, %v1806
        %v1823 = vadd.f32 %v1683, %v1809
        %v1824 = vld [vmem:[%s2] sm:$0x1]
        %v1825 = vperm.slane %v1824, 0
        %v1826 = vadd.f32 %v1811, %v1825
        %v1827 = vadd.f32 %v1812, %v1825
        %v1828 = vadd.f32 %v1813, %v1825
        %v1829 = vadd.f32 %v1814, %v1825
        %v1830 = vadd.f32 %v1815, %v1825
        %v1831 = vadd.f32 %v1816, %v1825
        %v1832 = vadd.f32 %v1817, %v1825
        %v1833 = vadd.f32 %v1818, %v1825
        %v1834 = vadd.f32 %v1819, %v1825
        %v1835 = vadd.f32 %v1820, %v1825
        %v1836 = vadd.f32 %v1821, %v1825
        %v1837 = vadd.f32 %v1822, %v1825
        %v1838 = vadd.f32 %v1823, %v1825
        %v1839 = vmax.f32 %v1826, 0.0
        %v1840 = vmax.f32 %v1827, 0.0
        %v1841 = vmax.f32 %v1828, 0.0
        %v1842 = vmax.f32 %v1829, 0.0
        %v1843 = vmax.f32 %v1830, 0.0
        %v1844 = vmax.f32 %v1831, 0.0
        %v1845 = vmax.f32 %v1832, 0.0
        %v1846 = vmax.f32 %v1833, 0.0
        %v1847 = vmax.f32 %v1834, 0.0
        %v1848 = vmax.f32 %v1835, 0.0
        %v1849 = vmax.f32 %v1836, 0.0
        %v1850 = vmax.f32 %v1837, 0.0
        %v1851 = vmax.f32 %v1838, 0.0
        %v1852 = vld [vmem:[%s2 + $0x1] sm:$0x1]
        %v1853 = vperm.slane %v1852, 0
        %v1854 = vmul.f32 %v1839, %v1853
        %v1855 = vmul.f32 %v1840, %v1853
        %v1856 = vmul.f32 %v1841, %v1853
        %v1857 = vmul.f32 %v1842, %v1853
        %v1858 = vmul.f32 %v1843, %v1853
        %v1859 = vmul.f32 %v1844, %v1853
        %v1860 = vmul.f32 %v1845, %v1853
        %v1861 = vmul.f32 %v1846, %v1853
        %v1862 = vmul.f32 %v1847, %v1853
        %v1863 = vmul.f32 %v1848, %v1853
        %v1864 = vmul.f32 %v1849, %v1853
        %v1865 = vmul.f32 %v1850, %v1853
        %v1866 = vmul.f32 %v1851, %v1853
        %v1867 = vld [vmem:[%s2 + $0x2] sm:$0x1]
        %v1868 = vperm.slane %v1867, 0
        %v1869 = vadd.f32 %v1854, %v1868
        %v1870 = vadd.f32 %v1855, %v1868
        %v1871 = vadd.f32 %v1856, %v1868
        %v1872 = vadd.f32 %v1857, %v1868
        %v1873 = vadd.f32 %v1858, %v1868
        %v1874 = vadd.f32 %v1859, %v1868
        %v1875 = vadd.f32 %v1860, %v1868
        %v1876 = vadd.f32 %v1861, %v1868
        %v1877 = vadd.f32 %v1862, %v1868
        %v1878 = vadd.f32 %v1863, %v1868
        %v1879 = vadd.f32 %v1864, %v1868
        %v1880 = vadd.f32 %v1865, %v1868
        %v1881 = vadd.f32 %v1866, %v1868
        %1882 = vst [vmem:[#allocation2] sm:$0xff] %v1869
        %1883 = vst [vmem:[#allocation2 + $0x8] sm:$0xff] %v1870
        %1884 = vst [vmem:[#allocation2 + $0x10] sm:$0xff] %v1871
        %1885 = vst [vmem:[#allocation2 + $0x18] sm:$0xff] %v1872
        %1886 = vst [vmem:[#allocation2 + $0x20] sm:$0xff] %v1873
        %1887 = vst [vmem:[#allocation2 + $0x28] sm:$0xff] %v1874
        %1888 = vst [vmem:[#allocation2 + $0x30] sm:$0xff] %v1875
        %1889 = vst [vmem:[#allocation2 + $0x38] sm:$0xff] %v1876
        %1890 = vst [vmem:[#allocation2 + $0x40] sm:$0xff] %v1877
        %1891 = vst [vmem:[#allocation2 + $0x48] sm:$0xff] %v1878
        %1892 = vst [vmem:[#allocation2 + $0x50] sm:$0xff] %v1879
        %1893 = vst [vmem:[#allocation2 + $0x58] sm:$0xff] %v1880
        %1894 = vst [vmem:[#allocation2 + $0x60] sm:$0x7] %v1881
        %v1895 = vld [vmem:[#allocation2] ss:$5 sm:$0xff]
        %s1896 = scalar_lea.vmem [#allocation2], 40
        %v1897 = vld [vmem:[%s1896] ss:$5 sm:$0xff]
        %s1898 = scalar_lea.vmem [#allocation2], 80
        %v1899 = vld [vmem:[%s1898] ss:$5 sm:$0x3]
        %v1900 = vld [vmem:[%s3] sm:$0xff]
        %v1901 = vld [vmem:[%s3 + $0x8] sm:$0xff]
        %v1902 = vld [vmem:[%s3 + $0x10] sm:$0xff]
        %v1903 = vld [vmem:[%s3 + $0x18] sm:$0xff]
        %v1904 = vld [vmem:[%s3 + $0x20] sm:$0xff]
        %v1905 = vld [vmem:[%s3 + $0x28] sm:$0xff]
        %v1906 = vld [vmem:[%s3 + $0x30] sm:$0xff]
        %v1907 = vld [vmem:[%s3 + $0x38] sm:$0xff]
        %v1908 = vld [vmem:[%s3 + $0x40] sm:$0xff]
        %v1909 = vld [vmem:[%s3 + $0x48] sm:$0xff]
        %v1910 = vld [vmem:[%s3 + $0x50] sm:$0xff]
        %v1911 = vld [vmem:[%s3 + $0x58] sm:$0xff]
        %v1912 = vld [vmem:[%s3 + $0x60] sm:$0xff]
        %v1913 = vld [vmem:[%s3 + $0x68] sm:$0xff]
        %v1914 = vld [vmem:[%s3 + $0x70] sm:$0xff]
        %v1915 = vld [vmem:[%s3 + $0x78] sm:$0xff]
        %s1916 = scalar_lea.vmem [#allocation2], 1
        %v1917 = vld [vmem:[%s1916] ss:$5 sm:$0xff]
        %s1918 = scalar_lea.vmem [#allocation2], 41
        %v1919 = vld [vmem:[%s1918] ss:$5 sm:$0xff]
        %s1920 = scalar_lea.vmem [#allocation2], 81
        %v1921 = vld [vmem:[%s1920] ss:$5 sm:$0x3]
        %s1922 = scalar_lea.vmem %s3, 128
        %v1923 = vld [vmem:[%s1922] sm:$0xff]
        %v1924 = vld [vmem:[%s1922 + $0x8] sm:$0xff]
        %v1925 = vld [vmem:[%s1922 + $0x10] sm:$0xff]
        %v1926 = vld [vmem:[%s1922 + $0x18] sm:$0xff]
        %v1927 = vld [vmem:[%s1922 + $0x20] sm:$0xff]
        %v1928 = vld [vmem:[%s1922 + $0x28] sm:$0xff]
        %v1929 = vld [vmem:[%s1922 + $0x30] sm:$0xff]
        %v1930 = vld [vmem:[%s1922 + $0x38] sm:$0xff]
        %v1931 = vld [vmem:[%s1922 + $0x40] sm:$0xff]
        %v1932 = vld [vmem:[%s1922 + $0x48] sm:$0xff]
        %v1933 = vld [vmem:[%s1922 + $0x50] sm:$0xff]
        %v1934 = vld [vmem:[%s1922 + $0x58] sm:$0xff]
        %v1935 = vld [vmem:[%s1922 + $0x60] sm:$0xff]
        %v1936 = vld [vmem:[%s1922 + $0x68] sm:$0xff]
        %v1937 = vld [vmem:[%s1922 + $0x70] sm:$0xff]
        %v1938 = vld [vmem:[%s1922 + $0x78] sm:$0xff]
        %1939 = vmatpush.msra.mxu0 %v1938
        %1940 = vmatpush.msra.mxu0 %v1937
        %1941 = vmatpush.msra.mxu0 %v1936
        %1942 = vmatpush.msra.mxu0 %v1935
        %1943 = vmatpush.msra.mxu0 %v1934
        %1944 = vmatpush.msra.mxu0 %v1933
        %1945 = vmatpush.msra.mxu0 %v1932
        %1946 = vmatpush.msra.mxu0 %v1931
        %1947 = vmatpush.msra.mxu0 %v1930
        %1948 = vmatpush.msra.mxu0 %v1929
        %1949 = vmatpush.msra.mxu0 %v1928
        %1950 = vmatpush.msra.mxu0 %v1927
        %1951 = vmatpush.msra.mxu0 %v1926
        %1952 = vmatpush.msra.mxu0 %v1925
        %1953 = vmatpush.msra.mxu0 %v1924
        %1954 = vmatpush.msra.mxu0 %v1923
        %1955 = vmatmul.f32.gmra.mxu0 %v1917
        %v1956 = vpop.f32.mrf.mxu0
        %v1957 = vadd.f32 0.0, %v1956
        %1958 = vmatmul.f32.gmra.mxu0 %v1919
        %v1959 = vpop.f32.mrf.mxu0
        %v1960 = vadd.f32 0.0, %v1959
        %1961 = vmatmul.f32.gmra.mxu0 %v1921
        %v1962 = vpop.f32.mrf.mxu0
        %v1963 = vadd.f32 0.0, %v1962
        %1964 = vdwg.mxu0
        %1965 = vmatpush.msra.mxu0 %v1915
        %1966 = vmatpush.msra.mxu0 %v1914
        %1967 = vmatpush.msra.mxu0 %v1913
        %1968 = vmatpush.msra.mxu0 %v1912
        %1969 = vmatpush.msra.mxu0 %v1911
        %1970 = vmatpush.msra.mxu0 %v1910
        %1971 = vmatpush.msra.mxu0 %v1909
        %1972 = vmatpush.msra.mxu0 %v1908
        %1973 = vmatpush.msra.mxu0 %v1907
        %1974 = vmatpush.msra.mxu0 %v1906
        %1975 = vmatpush.msra.mxu0 %v1905
        %1976 = vmatpush.msra.mxu0 %v1904
        %1977 = vmatpush.msra.mxu0 %v1903
        %1978 = vmatpush.msra.mxu0 %v1902
        %1979 = vmatpush.msra.mxu0 %v1901
        %1980 = vmatpush.msra.mxu0 %v1900
        %1981 = vmatmul.f32.gmra.mxu0 %v1895
        %v1982 = vpop.f32.mrf.mxu0
        %v1983 = vadd.f32 %v1957, %v1982
        %1984 = vmatmul.f32.gmra.mxu0 %v1897
        %v1985 = vpop.f32.mrf.mxu0
        %v1986 = vadd.f32 %v1960, %v1985
        %1987 = vmatmul.f32.gmra.mxu0 %v1899
        %v1988 = vpop.f32.mrf.mxu0
        %v1989 = vadd.f32 %v1963, %v1988
        %1990 = vdwg.mxu0
        %s1991 = scalar_lea.vmem [#allocation2], 2
        %v1992 = vld [vmem:[%s1991] ss:$5 sm:$0xff]
        %s1993 = scalar_lea.vmem [#allocation2], 42
        %v1994 = vld [vmem:[%s1993] ss:$5 sm:$0xff]
        %s1995 = scalar_lea.vmem [#allocation2], 82
        %v1996 = vld [vmem:[%s1995] ss:$5 sm:$0x3]
        %s1997 = scalar_lea.vmem %s3, 256
        %v1998 = vld [vmem:[%s1997] sm:$0xff]
        %v1999 = vld [vmem:[%s1997 + $0x8] sm:$0xff]
        %v2000 = vld [vmem:[%s1997 + $0x10] sm:$0xff]
        %v2001 = vld [vmem:[%s1997 + $0x18] sm:$0xff]
        %v2002 = vld [vmem:[%s1997 + $0x20] sm:$0xff]
        %v2003 = vld [vmem:[%s1997 + $0x28] sm:$0xff]
        %v2004 = vld [vmem:[%s1997 + $0x30] sm:$0xff]
        %v2005 = vld [vmem:[%s1997 + $0x38] sm:$0xff]
        %v2006 = vld [vmem:[%s1997 + $0x40] sm:$0xff]
        %v2007 = vld [vmem:[%s1997 + $0x48] sm:$0xff]
        %v2008 = vld [vmem:[%s1997 + $0x50] sm:$0xff]
        %v2009 = vld [vmem:[%s1997 + $0x58] sm:$0xff]
        %v2010 = vld [vmem:[%s1997 + $0x60] sm:$0xff]
        %v2011 = vld [vmem:[%s1997 + $0x68] sm:$0xff]
        %v2012 = vld [vmem:[%s1997 + $0x70] sm:$0xff]
        %v2013 = vld [vmem:[%s1997 + $0x78] sm:$0xff]
        %2014 = vmatpush.msra.mxu0 %v2013
        %2015 = vmatpush.msra.mxu0 %v2012
        %2016 = vmatpush.msra.mxu0 %v2011
        %2017 = vmatpush.msra.mxu0 %v2010
        %2018 = vmatpush.msra.mxu0 %v2009
        %2019 = vmatpush.msra.mxu0 %v2008
        %2020 = vmatpush.msra.mxu0 %v2007
        %2021 = vmatpush.msra.mxu0 %v2006
        %2022 = vmatpush.msra.mxu0 %v2005
        %2023 = vmatpush.msra.mxu0 %v2004
        %2024 = vmatpush.msra.mxu0 %v2003
        %2025 = vmatpush.msra.mxu0 %v2002
        %2026 = vmatpush.msra.mxu0 %v2001
        %2027 = vmatpush.msra.mxu0 %v2000
        %2028 = vmatpush.msra.mxu0 %v1999
        %2029 = vmatpush.msra.mxu0 %v1998
        %2030 = vmatmul.f32.gmra.mxu0 %v1992
        %v2031 = vpop.f32.mrf.mxu0
        %v2032 = vadd.f32 0.0, %v2031
        %2033 = vmatmul.f32.gmra.mxu0 %v1994
        %v2034 = vpop.f32.mrf.mxu0
        %v2035 = vadd.f32 0.0, %v2034
        %2036 = vmatmul.f32.gmra.mxu0 %v1996
        %v2037 = vpop.f32.mrf.mxu0
        %v2038 = vadd.f32 0.0, %v2037
        %2039 = vdwg.mxu0
        %v2040 = vadd.f32 %v1983, %v2032
        %v2041 = vadd.f32 %v1986, %v2035
        %v2042 = vadd.f32 %v1989, %v2038
        %s2043 = scalar_lea.vmem [#allocation2], 3
        %v2044 = vld [vmem:[%s2043] ss:$5 sm:$0xff]
        %s2045 = scalar_lea.vmem [#allocation2], 43
        %v2046 = vld [vmem:[%s2045] ss:$5 sm:$0xff]
        %s2047 = scalar_lea.vmem [#allocation2], 83
        %v2048 = vld [vmem:[%s2047] ss:$5 sm:$0x3]
        %s2049 = scalar_lea.vmem %s3, 384
        %v2050 = vld [vmem:[%s2049] sm:$0xff]
        %v2051 = vld [vmem:[%s2049 + $0x8] sm:$0xff]
        %v2052 = vld [vmem:[%s2049 + $0x10] sm:$0xff]
        %v2053 = vld [vmem:[%s2049 + $0x18] sm:$0xff]
        %v2054 = vld [vmem:[%s2049 + $0x20] sm:$0xff]
        %v2055 = vld [vmem:[%s2049 + $0x28] sm:$0xff]
        %v2056 = vld [vmem:[%s2049 + $0x30] sm:$0xff]
        %v2057 = vld [vmem:[%s2049 + $0x38] sm:$0xff]
        %v2058 = vld [vmem:[%s2049 + $0x40] sm:$0xff]
        %v2059 = vld [vmem:[%s2049 + $0x48] sm:$0xff]
        %v2060 = vld [vmem:[%s2049 + $0x50] sm:$0xff]
        %v2061 = vld [vmem:[%s2049 + $0x58] sm:$0xff]
        %v2062 = vld [vmem:[%s2049 + $0x60] sm:$0xff]
        %v2063 = vld [vmem:[%s2049 + $0x68] sm:$0xff]
        %v2064 = vld [vmem:[%s2049 + $0x70] sm:$0xff]
        %v2065 = vld [vmem:[%s2049 + $0x78] sm:$0xff]
        %2066 = vmatpush.msra.mxu0 %v2065
        %2067 = vmatpush.msra.mxu0 %v2064
        %2068 = vmatpush.msra.mxu0 %v2063
        %2069 = vmatpush.msra.mxu0 %v2062
        %2070 = vmatpush.msra.mxu0 %v2061
        %2071 = vmatpush.msra.mxu0 %v2060
        %2072 = vmatpush.msra.mxu0 %v2059
        %2073 = vmatpush.msra.mxu0 %v2058
        %2074 = vmatpush.msra.mxu0 %v2057
        %2075 = vmatpush.msra.mxu0 %v2056
        %2076 = vmatpush.msra.mxu0 %v2055
        %2077 = vmatpush.msra.mxu0 %v2054
        %2078 = vmatpush.msra.mxu0 %v2053
        %2079 = vmatpush.msra.mxu0 %v2052
        %2080 = vmatpush.msra.mxu0 %v2051
        %2081 = vmatpush.msra.mxu0 %v2050
        %2082 = vmatmul.f32.gmra.mxu0 %v2044
        %v2083 = vpop.f32.mrf.mxu0
        %v2084 = vadd.f32 0.0, %v2083
        %2085 = vmatmul.f32.gmra.mxu0 %v2046
        %v2086 = vpop.f32.mrf.mxu0
        %v2087 = vadd.f32 0.0, %v2086
        %2088 = vmatmul.f32.gmra.mxu0 %v2048
        %v2089 = vpop.f32.mrf.mxu0
        %v2090 = vadd.f32 0.0, %v2089
        %2091 = vdwg.mxu0
        %v2092 = vadd.f32 %v2040, %v2084
        %v2093 = vadd.f32 %v2041, %v2087
        %v2094 = vadd.f32 %v2042, %v2090
        %s2095 = scalar_lea.vmem [#allocation2], 4
        %v2096 = vld [vmem:[%s2095] ss:$5 sm:$0xff]
        %s2097 = scalar_lea.vmem [#allocation2], 44
        %v2098 = vld [vmem:[%s2097] ss:$5 sm:$0xff]
        %s2099 = scalar_lea.vmem [#allocation2], 84
        %v2100 = vld [vmem:[%s2099] ss:$5 sm:$0x3]
        %s2101 = scalar_lea.vmem %s3, 512
        %v2102 = vld [vmem:[%s2101] sm:$0xff]
        %v2103 = vld [vmem:[%s2101 + $0x8] sm:$0xff]
        %v2104 = vld [vmem:[%s2101 + $0x10] sm:$0xff]
        %v2105 = vld [vmem:[%s2101 + $0x18] sm:$0xff]
        %v2106 = vld [vmem:[%s2101 + $0x20] sm:$0xff]
        %v2107 = vld [vmem:[%s2101 + $0x28] sm:$0xff]
        %v2108 = vld [vmem:[%s2101 + $0x30] sm:$0xff]
        %v2109 = vld [vmem:[%s2101 + $0x38] sm:$0xff]
        %v2110 = vld [vmem:[%s2101 + $0x40] sm:$0xff]
        %v2111 = vld [vmem:[%s2101 + $0x48] sm:$0xff]
        %v2112 = vld [vmem:[%s2101 + $0x50] sm:$0xff]
        %v2113 = vld [vmem:[%s2101 + $0x58] sm:$0xff]
        %v2114 = vld [vmem:[%s2101 + $0x60] sm:$0xff]
        %v2115 = vld [vmem:[%s2101 + $0x68] sm:$0xff]
        %v2116 = vld [vmem:[%s2101 + $0x70] sm:$0xff]
        %v2117 = vld [vmem:[%s2101 + $0x78] sm:$0xff]
        %2118 = vmatpush.msra.mxu0 %v2117
        %2119 = vmatpush.msra.mxu0 %v2116
        %2120 = vmatpush.msra.mxu0 %v2115
        %2121 = vmatpush.msra.mxu0 %v2114
        %2122 = vmatpush.msra.mxu0 %v2113
        %2123 = vmatpush.msra.mxu0 %v2112
        %2124 = vmatpush.msra.mxu0 %v2111
        %2125 = vmatpush.msra.mxu0 %v2110
        %2126 = vmatpush.msra.mxu0 %v2109
        %2127 = vmatpush.msra.mxu0 %v2108
        %2128 = vmatpush.msra.mxu0 %v2107
        %2129 = vmatpush.msra.mxu0 %v2106
        %2130 = vmatpush.msra.mxu0 %v2105
        %2131 = vmatpush.msra.mxu0 %v2104
        %2132 = vmatpush.msra.mxu0 %v2103
        %2133 = vmatpush.msra.mxu0 %v2102
        %2134 = vmatmul.f32.gmra.mxu0 %v2096
        %v2135 = vpop.f32.mrf.mxu0
        %v2136 = vadd.f32 0.0, %v2135
        %2137 = vmatmul.f32.gmra.mxu0 %v2098
        %v2138 = vpop.f32.mrf.mxu0
        %v2139 = vadd.f32 0.0, %v2138
        %2140 = vmatmul.f32.gmra.mxu0 %v2100
        %v2141 = vpop.f32.mrf.mxu0
        %v2142 = vadd.f32 0.0, %v2141
        %2143 = vdwg.mxu0
        %v2144 = vadd.f32 %v2092, %v2136
        %v2145 = vadd.f32 %v2093, %v2139
        %v2146 = vadd.f32 %v2094, %v2142
        %s2147 = scalar_lea.vmem [#allocation2], 5
        %v2148 = vld [vmem:[%s2147] ss:$5 sm:$0xff]
        %s2149 = scalar_lea.vmem [#allocation2], 45
        %v2150 = vld [vmem:[%s2149] ss:$5 sm:$0xff]
        %s2151 = scalar_lea.vmem [#allocation2], 85
        %v2152 = vld [vmem:[%s2151] ss:$5 sm:$0x3]
        %s2153 = scalar_lea.vmem %s3, 640
        %v2154 = vld [vmem:[%s2153] sm:$0xff]
        %v2155 = vld [vmem:[%s2153 + $0x8] sm:$0xff]
        %v2156 = vld [vmem:[%s2153 + $0x10] sm:$0xff]
        %v2157 = vld [vmem:[%s2153 + $0x18] sm:$0xff]
        %v2158 = vld [vmem:[%s2153 + $0x20] sm:$0xff]
        %v2159 = vld [vmem:[%s2153 + $0x28] sm:$0xff]
        %v2160 = vld [vmem:[%s2153 + $0x30] sm:$0xff]
        %v2161 = vld [vmem:[%s2153 + $0x38] sm:$0xff]
        %v2162 = vld [vmem:[%s2153 + $0x40] sm:$0xff]
        %v2163 = vld [vmem:[%s2153 + $0x48] sm:$0xff]
        %v2164 = vld [vmem:[%s2153 + $0x50] sm:$0xff]
        %v2165 = vld [vmem:[%s2153 + $0x58] sm:$0xff]
        %v2166 = vld [vmem:[%s2153 + $0x60] sm:$0xff]
        %v2167 = vld [vmem:[%s2153 + $0x68] sm:$0xff]
        %v2168 = vld [vmem:[%s2153 + $0x70] sm:$0xff]
        %v2169 = vld [vmem:[%s2153 + $0x78] sm:$0xff]
        %2170 = vmatpush.msra.mxu0 %v2169
        %2171 = vmatpush.msra.mxu0 %v2168
        %2172 = vmatpush.msra.mxu0 %v2167
        %2173 = vmatpush.msra.mxu0 %v2166
        %2174 = vmatpush.msra.mxu0 %v2165
        %2175 = vmatpush.msra.mxu0 %v2164
        %2176 = vmatpush.msra.mxu0 %v2163
        %2177 = vmatpush.msra.mxu0 %v2162
        %2178 = vmatpush.msra.mxu0 %v2161
        %2179 = vmatpush.msra.mxu0 %v2160
        %2180 = vmatpush.msra.mxu0 %v2159
        %2181 = vmatpush.msra.mxu0 %v2158
        %2182 = vmatpush.msra.mxu0 %v2157
        %2183 = vmatpush.msra.mxu0 %v2156
        %2184 = vmatpush.msra.mxu0 %v2155
        %2185 = vmatpush.msra.mxu0 %v2154
        %2186 = vmatmul.f32.gmra.mxu0 %v2148
        %v2187 = vpop.f32.mrf.mxu0
        %v2188 = vadd.f32 0.0, %v2187
        %2189 = vmatmul.f32.gmra.mxu0 %v2150
        %v2190 = vpop.f32.mrf.mxu0
        %v2191 = vadd.f32 0.0, %v2190
        %2192 = vmatmul.f32.gmra.mxu0 %v2152
        %v2193 = vpop.f32.mrf.mxu0
        %v2194 = vadd.f32 0.0, %v2193
        %2195 = vdwg.mxu0
        %v2196 = vadd.f32 %v2144, %v2188
        %v2197 = vadd.f32 %v2145, %v2191
        %v2198 = vadd.f32 %v2146, %v2194
        %s2199 = scalar_lea.vmem [#allocation2], 6
        %v2200 = vld [vmem:[%s2199] ss:$5 sm:$0xff]
        %s2201 = scalar_lea.vmem [#allocation2], 46
        %v2202 = vld [vmem:[%s2201] ss:$5 sm:$0xff]
        %s2203 = scalar_lea.vmem [#allocation2], 86
        %v2204 = vld [vmem:[%s2203] ss:$5 sm:$0x3]
        %s2205 = scalar_lea.vmem %s3, 768
        %v2206 = vld [vmem:[%s2205] sm:$0xff]
        %v2207 = vld [vmem:[%s2205 + $0x8] sm:$0xff]
        %v2208 = vld [vmem:[%s2205 + $0x10] sm:$0xff]
        %v2209 = vld [vmem:[%s2205 + $0x18] sm:$0xff]
        %v2210 = vld [vmem:[%s2205 + $0x20] sm:$0xff]
        %v2211 = vld [vmem:[%s2205 + $0x28] sm:$0xff]
        %v2212 = vld [vmem:[%s2205 + $0x30] sm:$0xff]
        %v2213 = vld [vmem:[%s2205 + $0x38] sm:$0xff]
        %v2214 = vld [vmem:[%s2205 + $0x40] sm:$0xff]
        %v2215 = vld [vmem:[%s2205 + $0x48] sm:$0xff]
        %v2216 = vld [vmem:[%s2205 + $0x50] sm:$0xff]
        %v2217 = vld [vmem:[%s2205 + $0x58] sm:$0xff]
        %v2218 = vld [vmem:[%s2205 + $0x60] sm:$0xff]
        %v2219 = vld [vmem:[%s2205 + $0x68] sm:$0xff]
        %v2220 = vld [vmem:[%s2205 + $0x70] sm:$0xff]
        %v2221 = vld [vmem:[%s2205 + $0x78] sm:$0xff]
        %2222 = vmatpush.msra.mxu0 %v2221
        %2223 = vmatpush.msra.mxu0 %v2220
        %2224 = vmatpush.msra.mxu0 %v2219
        %2225 = vmatpush.msra.mxu0 %v2218
        %2226 = vmatpush.msra.mxu0 %v2217
        %2227 = vmatpush.msra.mxu0 %v2216
        %2228 = vmatpush.msra.mxu0 %v2215
        %2229 = vmatpush.msra.mxu0 %v2214
        %2230 = vmatpush.msra.mxu0 %v2213
        %2231 = vmatpush.msra.mxu0 %v2212
        %2232 = vmatpush.msra.mxu0 %v2211
        %2233 = vmatpush.msra.mxu0 %v2210
        %2234 = vmatpush.msra.mxu0 %v2209
        %2235 = vmatpush.msra.mxu0 %v2208
        %2236 = vmatpush.msra.mxu0 %v2207
        %2237 = vmatpush.msra.mxu0 %v2206
        %2238 = vmatmul.f32.gmra.mxu0 %v2200
        %v2239 = vpop.f32.mrf.mxu0
        %v2240 = vadd.f32 0.0, %v2239
        %2241 = vmatmul.f32.gmra.mxu0 %v2202
        %v2242 = vpop.f32.mrf.mxu0
        %v2243 = vadd.f32 0.0, %v2242
        %2244 = vmatmul.f32.gmra.mxu0 %v2204
        %v2245 = vpop.f32.mrf.mxu0
        %v2246 = vadd.f32 0.0, %v2245
        %2247 = vdwg.mxu0
        %v2248 = vadd.f32 %v2196, %v2240
        %v2249 = vadd.f32 %v2197, %v2243
        %v2250 = vadd.f32 %v2198, %v2246
        %s2251 = scalar_lea.vmem [#allocation2], 7
        %v2252 = vld [vmem:[%s2251] ss:$5 sm:$0xff]
        %s2253 = scalar_lea.vmem [#allocation2], 47
        %v2254 = vld [vmem:[%s2253] ss:$5 sm:$0xff]
        %s2255 = scalar_lea.vmem [#allocation2], 87
        %v2256 = vld [vmem:[%s2255] ss:$5 sm:$0x3]
        %s2257 = scalar_lea.vmem %s3, 896
        %v2258 = vld [vmem:[%s2257] sm:$0xff]
        %v2259 = vld [vmem:[%s2257 + $0x8] sm:$0xff]
        %v2260 = vld [vmem:[%s2257 + $0x10] sm:$0xff]
        %v2261 = vld [vmem:[%s2257 + $0x18] sm:$0xff]
        %v2262 = vld [vmem:[%s2257 + $0x20] sm:$0xff]
        %v2263 = vld [vmem:[%s2257 + $0x28] sm:$0xff]
        %v2264 = vld [vmem:[%s2257 + $0x30] sm:$0xff]
        %v2265 = vld [vmem:[%s2257 + $0x38] sm:$0xff]
        %v2266 = vld [vmem:[%s2257 + $0x40] sm:$0xff]
        %v2267 = vld [vmem:[%s2257 + $0x48] sm:$0xff]
        %v2268 = vld [vmem:[%s2257 + $0x50] sm:$0xff]
        %v2269 = vld [vmem:[%s2257 + $0x58] sm:$0xff]
        %v2270 = vld [vmem:[%s2257 + $0x60] sm:$0xff]
        %v2271 = vld [vmem:[%s2257 + $0x68] sm:$0xff]
        %v2272 = vld [vmem:[%s2257 + $0x70] sm:$0xff]
        %v2273 = vld [vmem:[%s2257 + $0x78] sm:$0xff]
        %2274 = vmatpush.msra.mxu0 %v2273
        %2275 = vmatpush.msra.mxu0 %v2272
        %2276 = vmatpush.msra.mxu0 %v2271
        %2277 = vmatpush.msra.mxu0 %v2270
        %2278 = vmatpush.msra.mxu0 %v2269
        %2279 = vmatpush.msra.mxu0 %v2268
        %2280 = vmatpush.msra.mxu0 %v2267
        %2281 = vmatpush.msra.mxu0 %v2266
        %2282 = vmatpush.msra.mxu0 %v2265
        %2283 = vmatpush.msra.mxu0 %v2264
        %2284 = vmatpush.msra.mxu0 %v2263
        %2285 = vmatpush.msra.mxu0 %v2262
        %2286 = vmatpush.msra.mxu0 %v2261
        %2287 = vmatpush.msra.mxu0 %v2260
        %2288 = vmatpush.msra.mxu0 %v2259
        %2289 = vmatpush.msra.mxu0 %v2258
        %2290 = vmatmul.f32.gmra.mxu0 %v2252
        %v2291 = vpop.f32.mrf.mxu0
        %v2292 = vadd.f32 0.0, %v2291
        %2293 = vmatmul.f32.gmra.mxu0 %v2254
        %v2294 = vpop.f32.mrf.mxu0
        %v2295 = vadd.f32 0.0, %v2294
        %2296 = vmatmul.f32.gmra.mxu0 %v2256
        %v2297 = vpop.f32.mrf.mxu0
        %v2298 = vadd.f32 0.0, %v2297
        %2299 = vdwg.mxu0
        %v2300 = vadd.f32 %v2248, %v2292
        %v2301 = vadd.f32 %v2249, %v2295
        %v2302 = vadd.f32 %v2250, %v2298
        %s2303 = scalar_lea.vmem [#allocation2], 8
        %v2304 = vld [vmem:[%s2303] ss:$5 sm:$0xff]
        %s2305 = scalar_lea.vmem [#allocation2], 48
        %v2306 = vld [vmem:[%s2305] ss:$5 sm:$0xff]
        %s2307 = scalar_lea.vmem [#allocation2], 88
        %v2308 = vld [vmem:[%s2307] ss:$5 sm:$0x3]
        %s2309 = scalar_lea.vmem %s3, 1024
        %v2310 = vld [vmem:[%s2309] sm:$0xff]
        %v2311 = vld [vmem:[%s2309 + $0x8] sm:$0xff]
        %v2312 = vld [vmem:[%s2309 + $0x10] sm:$0xff]
        %v2313 = vld [vmem:[%s2309 + $0x18] sm:$0xff]
        %v2314 = vld [vmem:[%s2309 + $0x20] sm:$0xff]
        %v2315 = vld [vmem:[%s2309 + $0x28] sm:$0xff]
        %v2316 = vld [vmem:[%s2309 + $0x30] sm:$0xff]
        %v2317 = vld [vmem:[%s2309 + $0x38] sm:$0xff]
        %v2318 = vld [vmem:[%s2309 + $0x40] sm:$0xff]
        %v2319 = vld [vmem:[%s2309 + $0x48] sm:$0xff]
        %v2320 = vld [vmem:[%s2309 + $0x50] sm:$0xff]
        %v2321 = vld [vmem:[%s2309 + $0x58] sm:$0xff]
        %v2322 = vld [vmem:[%s2309 + $0x60] sm:$0xff]
        %v2323 = vld [vmem:[%s2309 + $0x68] sm:$0xff]
        %v2324 = vld [vmem:[%s2309 + $0x70] sm:$0xff]
        %v2325 = vld [vmem:[%s2309 + $0x78] sm:$0xff]
        %2326 = vmatpush.msra.mxu0 %v2325
        %2327 = vmatpush.msra.mxu0 %v2324
        %2328 = vmatpush.msra.mxu0 %v2323
        %2329 = vmatpush.msra.mxu0 %v2322
        %2330 = vmatpush.msra.mxu0 %v2321
        %2331 = vmatpush.msra.mxu0 %v2320
        %2332 = vmatpush.msra.mxu0 %v2319
        %2333 = vmatpush.msra.mxu0 %v2318
        %2334 = vmatpush.msra.mxu0 %v2317
        %2335 = vmatpush.msra.mxu0 %v2316
        %2336 = vmatpush.msra.mxu0 %v2315
        %2337 = vmatpush.msra.mxu0 %v2314
        %2338 = vmatpush.msra.mxu0 %v2313
        %2339 = vmatpush.msra.mxu0 %v2312
        %2340 = vmatpush.msra.mxu0 %v2311
        %2341 = vmatpush.msra.mxu0 %v2310
        %2342 = vmatmul.f32.gmra.mxu0 %v2304
        %v2343 = vpop.f32.mrf.mxu0
        %v2344 = vadd.f32 0.0, %v2343
        %2345 = vmatmul.f32.gmra.mxu0 %v2306
        %v2346 = vpop.f32.mrf.mxu0
        %v2347 = vadd.f32 0.0, %v2346
        %2348 = vmatmul.f32.gmra.mxu0 %v2308
        %v2349 = vpop.f32.mrf.mxu0
        %v2350 = vadd.f32 0.0, %v2349
        %2351 = vdwg.mxu0
        %v2352 = vadd.f32 %v2300, %v2344
        %v2353 = vadd.f32 %v2301, %v2347
        %v2354 = vadd.f32 %v2302, %v2350
        %s2355 = scalar_lea.vmem [#allocation2], 9
        %v2356 = vld [vmem:[%s2355] ss:$5 sm:$0xff]
        %s2357 = scalar_lea.vmem [#allocation2], 49
        %v2358 = vld [vmem:[%s2357] ss:$5 sm:$0xff]
        %s2359 = scalar_lea.vmem [#allocation2], 89
        %v2360 = vld [vmem:[%s2359] ss:$5 sm:$0x3]
        %s2361 = scalar_lea.vmem %s3, 1152
        %v2362 = vld [vmem:[%s2361] sm:$0xff]
        %v2363 = vld [vmem:[%s2361 + $0x8] sm:$0xff]
        %v2364 = vld [vmem:[%s2361 + $0x10] sm:$0xff]
        %v2365 = vld [vmem:[%s2361 + $0x18] sm:$0xff]
        %v2366 = vld [vmem:[%s2361 + $0x20] sm:$0xff]
        %v2367 = vld [vmem:[%s2361 + $0x28] sm:$0xff]
        %v2368 = vld [vmem:[%s2361 + $0x30] sm:$0xff]
        %v2369 = vld [vmem:[%s2361 + $0x38] sm:$0xff]
        %v2370 = vld [vmem:[%s2361 + $0x40] sm:$0xff]
        %v2371 = vld [vmem:[%s2361 + $0x48] sm:$0xff]
        %v2372 = vld [vmem:[%s2361 + $0x50] sm:$0xff]
        %v2373 = vld [vmem:[%s2361 + $0x58] sm:$0xff]
        %v2374 = vld [vmem:[%s2361 + $0x60] sm:$0xff]
        %v2375 = vld [vmem:[%s2361 + $0x68] sm:$0xff]
        %v2376 = vld [vmem:[%s2361 + $0x70] sm:$0xff]
        %v2377 = vld [vmem:[%s2361 + $0x78] sm:$0xff]
        %2378 = vmatpush.msra.mxu0 %v2377
        %2379 = vmatpush.msra.mxu0 %v2376
        %2380 = vmatpush.msra.mxu0 %v2375
        %2381 = vmatpush.msra.mxu0 %v2374
        %2382 = vmatpush.msra.mxu0 %v2373
        %2383 = vmatpush.msra.mxu0 %v2372
        %2384 = vmatpush.msra.mxu0 %v2371
        %2385 = vmatpush.msra.mxu0 %v2370
        %2386 = vmatpush.msra.mxu0 %v2369
        %2387 = vmatpush.msra.mxu0 %v2368
        %2388 = vmatpush.msra.mxu0 %v2367
        %2389 = vmatpush.msra.mxu0 %v2366
        %2390 = vmatpush.msra.mxu0 %v2365
        %2391 = vmatpush.msra.mxu0 %v2364
        %2392 = vmatpush.msra.mxu0 %v2363
        %2393 = vmatpush.msra.mxu0 %v2362
        %2394 = vmatmul.f32.gmra.mxu0 %v2356
        %v2395 = vpop.f32.mrf.mxu0
        %v2396 = vadd.f32 0.0, %v2395
        %2397 = vmatmul.f32.gmra.mxu0 %v2358
        %v2398 = vpop.f32.mrf.mxu0
        %v2399 = vadd.f32 0.0, %v2398
        %2400 = vmatmul.f32.gmra.mxu0 %v2360
        %v2401 = vpop.f32.mrf.mxu0
        %v2402 = vadd.f32 0.0, %v2401
        %2403 = vdwg.mxu0
        %v2404 = vadd.f32 %v2352, %v2396
        %v2405 = vadd.f32 %v2353, %v2399
        %v2406 = vadd.f32 %v2354, %v2402
        %v2407 = vld [vmem:[%s4] sm:$0x1]
        %v2408 = vperm.slane %v2407, 0
        %v2409 = vadd.f32 %v2404, %v2408
        %v2410 = vadd.f32 %v2405, %v2408
        %v2411 = vadd.f32 %v2406, %v2408
        %v2412 = vmax.f32 %v2409, 0.0
        %v2413 = vmax.f32 %v2410, 0.0
        %v2414 = vmax.f32 %v2411, 0.0
        %v2415 = vld [vmem:[%s4 + $0x1] sm:$0x1]
        %v2416 = vperm.slane %v2415, 0
        %v2417 = vmul.f32 %v2412, %v2416
        %v2418 = vmul.f32 %v2413, %v2416
        %v2419 = vmul.f32 %v2414, %v2416
        %v2420 = vld [vmem:[%s4 + $0x2] sm:$0x1]
        %v2421 = vperm.slane %v2420, 0
        %v2422 = vadd.f32 %v2417, %v2421
        %v2423 = vadd.f32 %v2418, %v2421
        %v2424 = vadd.f32 %v2419, %v2421
        %2425 = vst [vmem:[#allocation3] sm:$0xff] %v2422
        %2426 = vst [vmem:[#allocation3 + $0x8] sm:$0xff] %v2423
        %2427 = vst [vmem:[#allocation3 + $0x10] sm:$0x3] %v2424
        %v2428 = vld [vmem:[#allocation3] ss:$5 sm:$0x3]
        %v2429 = vld [vmem:[#allocation7] sm:$0xff]
        %v2430 = vld [vmem:[#allocation7 + $0x8] sm:$0xff]
        %v2431 = vld [vmem:[#allocation7 + $0x10] sm:$0xff]
        %v2432 = vld [vmem:[#allocation7 + $0x18] sm:$0xff]
        %v2433 = vld [vmem:[#allocation7 + $0x20] sm:$0xff]
        %v2434 = vld [vmem:[#allocation7 + $0x28] sm:$0xff]
        %v2435 = vld [vmem:[#allocation7 + $0x30] sm:$0xff]
        %v2436 = vld [vmem:[#allocation7 + $0x38] sm:$0xff]
        %v2437 = vld [vmem:[#allocation7 + $0x40] sm:$0xff]
        %v2438 = vld [vmem:[#allocation7 + $0x48] sm:$0xff]
        %v2439 = vld [vmem:[#allocation7 + $0x50] sm:$0xff]
        %v2440 = vld [vmem:[#allocation7 + $0x58] sm:$0xff]
        %v2441 = vld [vmem:[#allocation7 + $0x60] sm:$0xff]
        %v2442 = vld [vmem:[#allocation7 + $0x68] sm:$0xff]
        %v2443 = vld [vmem:[#allocation7 + $0x70] sm:$0xff]
        %v2444 = vld [vmem:[#allocation7 + $0x78] sm:$0xff]
        %s2445 = scalar_lea.vmem [#allocation3], 1
        %v2446 = vld [vmem:[%s2445] ss:$5 sm:$0x3]
        %s2447 = scalar_lea.vmem [#allocation7], 128
        %v2448 = vld [vmem:[%s2447] sm:$0xff]
        %v2449 = vld [vmem:[%s2447 + $0x8] sm:$0xff]
        %v2450 = vld [vmem:[%s2447 + $0x10] sm:$0xff]
        %v2451 = vld [vmem:[%s2447 + $0x18] sm:$0xff]
        %v2452 = vld [vmem:[%s2447 + $0x20] sm:$0xff]
        %v2453 = vld [vmem:[%s2447 + $0x28] sm:$0xff]
        %v2454 = vld [vmem:[%s2447 + $0x30] sm:$0xff]
        %v2455 = vld [vmem:[%s2447 + $0x38] sm:$0xff]
        %v2456 = vld [vmem:[%s2447 + $0x40] sm:$0xff]
        %v2457 = vld [vmem:[%s2447 + $0x48] sm:$0xff]
        %v2458 = vld [vmem:[%s2447 + $0x50] sm:$0xff]
        %v2459 = vld [vmem:[%s2447 + $0x58] sm:$0xff]
        %v2460 = vld [vmem:[%s2447 + $0x60] sm:$0xff]
        %v2461 = vld [vmem:[%s2447 + $0x68] sm:$0xff]
        %v2462 = vld [vmem:[%s2447 + $0x70] sm:$0xff]
        %v2463 = vld [vmem:[%s2447 + $0x78] sm:$0xff]
        %2464 = vmatpush.msra.mxu0 %v2463
        %2465 = vmatpush.msra.mxu0 %v2462
        %2466 = vmatpush.msra.mxu0 %v2461
        %2467 = vmatpush.msra.mxu0 %v2460
        %2468 = vmatpush.msra.mxu0 %v2459
        %2469 = vmatpush.msra.mxu0 %v2458
        %2470 = vmatpush.msra.mxu0 %v2457
        %2471 = vmatpush.msra.mxu0 %v2456
        %2472 = vmatpush.msra.mxu0 %v2455
        %2473 = vmatpush.msra.mxu0 %v2454
        %2474 = vmatpush.msra.mxu0 %v2453
        %2475 = vmatpush.msra.mxu0 %v2452
        %2476 = vmatpush.msra.mxu0 %v2451
        %2477 = vmatpush.msra.mxu0 %v2450
        %2478 = vmatpush.msra.mxu0 %v2449
        %2479 = vmatpush.msra.mxu0 %v2448
        %2480 = vmatmul.f32.gmra.mxu0 %v2446
        %v2481 = vpop.f32.mrf.mxu0
        %v2482 = vadd.f32 0.0, %v2481
        %2483 = vdwg.mxu0
        %2484 = vmatpush.msra.mxu0 %v2444
        %2485 = vmatpush.msra.mxu0 %v2443
        %2486 = vmatpush.msra.mxu0 %v2442
        %2487 = vmatpush.msra.mxu0 %v2441
        %2488 = vmatpush.msra.mxu0 %v2440
        %2489 = vmatpush.msra.mxu0 %v2439
        %2490 = vmatpush.msra.mxu0 %v2438
        %2491 = vmatpush.msra.mxu0 %v2437
        %2492 = vmatpush.msra.mxu0 %v2436
        %2493 = vmatpush.msra.mxu0 %v2435
        %2494 = vmatpush.msra.mxu0 %v2434
        %2495 = vmatpush.msra.mxu0 %v2433
        %2496 = vmatpush.msra.mxu0 %v2432
        %2497 = vmatpush.msra.mxu0 %v2431
        %2498 = vmatpush.msra.mxu0 %v2430
        %2499 = vmatpush.msra.mxu0 %v2429
        %2500 = vmatmul.f32.gmra.mxu0 %v2428
        %v2501 = vpop.f32.mrf.mxu0
        %v2502 = vadd.f32 %v2482, %v2501
        %2503 = vdwg.mxu0
        %s2504 = scalar_lea.vmem [#allocation3], 2
        %v2505 = vld [vmem:[%s2504] ss:$5 sm:$0x3]
        %s2506 = scalar_lea.vmem [#allocation7], 256
        %v2507 = vld [vmem:[%s2506] sm:$0xff]
        %v2508 = vld [vmem:[%s2506 + $0x8] sm:$0xff]
        %v2509 = vld [vmem:[%s2506 + $0x10] sm:$0xff]
        %v2510 = vld [vmem:[%s2506 + $0x18] sm:$0xff]
        %v2511 = vld [vmem:[%s2506 + $0x20] sm:$0xff]
        %v2512 = vld [vmem:[%s2506 + $0x28] sm:$0xff]
        %v2513 = vld [vmem:[%s2506 + $0x30] sm:$0xff]
        %v2514 = vld [vmem:[%s2506 + $0x38] sm:$0xff]
        %v2515 = vld [vmem:[%s2506 + $0x40] sm:$0xff]
        %v2516 = vld [vmem:[%s2506 + $0x48] sm:$0xff]
        %v2517 = vld [vmem:[%s2506 + $0x50] sm:$0xff]
        %v2518 = vld [vmem:[%s2506 + $0x58] sm:$0xff]
        %v2519 = vld [vmem:[%s2506 + $0x60] sm:$0xff]
        %v2520 = vld [vmem:[%s2506 + $0x68] sm:$0xff]
        %v2521 = vld [vmem:[%s2506 + $0x70] sm:$0xff]
        %v2522 = vld [vmem:[%s2506 + $0x78] sm:$0xff]
        %2523 = vmatpush.msra.mxu0 %v2522
        %2524 = vmatpush.msra.mxu0 %v2521
        %2525 = vmatpush.msra.mxu0 %v2520
        %2526 = vmatpush.msra.mxu0 %v2519
        %2527 = vmatpush.msra.mxu0 %v2518
        %2528 = vmatpush.msra.mxu0 %v2517
        %2529 = vmatpush.msra.mxu0 %v2516
        %2530 = vmatpush.msra.mxu0 %v2515
        %2531 = vmatpush.msra.mxu0 %v2514
        %2532 = vmatpush.msra.mxu0 %v2513
        %2533 = vmatpush.msra.mxu0 %v2512
        %2534 = vmatpush.msra.mxu0 %v2511
        %2535 = vmatpush.msra.mxu0 %v2510
        %2536 = vmatpush.msra.mxu0 %v2509
        %2537 = vmatpush.msra.mxu0 %v2508
        %2538 = vmatpush.msra.mxu0 %v2507
        %2539 = vmatmul.f32.gmra.mxu0 %v2505
        %v2540 = vpop.f32.mrf.mxu0
        %v2541 = vadd.f32 0.0, %v2540
        %2542 = vdwg.mxu0
        %v2543 = vadd.f32 %v2502, %v2541
        %s2544 = scalar_lea.vmem [#allocation3], 3
        %v2545 = vld [vmem:[%s2544] ss:$5 sm:$0x3]
        %s2546 = scalar_lea.vmem [#allocation7], 384
        %v2547 = vld [vmem:[%s2546] sm:$0xff]
        %v2548 = vld [vmem:[%s2546 + $0x8] sm:$0xff]
        %v2549 = vld [vmem:[%s2546 + $0x10] sm:$0xff]
        %v2550 = vld [vmem:[%s2546 + $0x18] sm:$0xff]
        %v2551 = vld [vmem:[%s2546 + $0x20] sm:$0xff]
        %v2552 = vld [vmem:[%s2546 + $0x28] sm:$0xff]
        %v2553 = vld [vmem:[%s2546 + $0x30] sm:$0xff]
        %v2554 = vld [vmem:[%s2546 + $0x38] sm:$0xff]
        %v2555 = vld [vmem:[%s2546 + $0x40] sm:$0xff]
        %v2556 = vld [vmem:[%s2546 + $0x48] sm:$0xff]
        %v2557 = vld [vmem:[%s2546 + $0x50] sm:$0xff]
        %v2558 = vld [vmem:[%s2546 + $0x58] sm:$0xff]
        %v2559 = vld [vmem:[%s2546 + $0x60] sm:$0xff]
        %v2560 = vld [vmem:[%s2546 + $0x68] sm:$0xff]
        %v2561 = vld [vmem:[%s2546 + $0x70] sm:$0xff]
        %v2562 = vld [vmem:[%s2546 + $0x78] sm:$0xff]
        %2563 = vmatpush.msra.mxu0 %v2562
        %2564 = vmatpush.msra.mxu0 %v2561
        %2565 = vmatpush.msra.mxu0 %v2560
        %2566 = vmatpush.msra.mxu0 %v2559
        %2567 = vmatpush.msra.mxu0 %v2558
        %2568 = vmatpush.msra.mxu0 %v2557
        %2569 = vmatpush.msra.mxu0 %v2556
        %2570 = vmatpush.msra.mxu0 %v2555
        %2571 = vmatpush.msra.mxu0 %v2554
        %2572 = vmatpush.msra.mxu0 %v2553
        %2573 = vmatpush.msra.mxu0 %v2552
        %2574 = vmatpush.msra.mxu0 %v2551
        %2575 = vmatpush.msra.mxu0 %v2550
        %2576 = vmatpush.msra.mxu0 %v2549
        %2577 = vmatpush.msra.mxu0 %v2548
        %2578 = vmatpush.msra.mxu0 %v2547
        %2579 = vmatmul.f32.gmra.mxu0 %v2545
        %v2580 = vpop.f32.mrf.mxu0
        %v2581 = vadd.f32 0.0, %v2580
        %2582 = vdwg.mxu0
        %v2583 = vadd.f32 %v2543, %v2581
        %s2584 = scalar_lea.vmem [#allocation3], 4
        %v2585 = vld [vmem:[%s2584] ss:$5 sm:$0x3]
        %s2586 = scalar_lea.vmem [#allocation7], 512
        %v2587 = vld [vmem:[%s2586] sm:$0xff]
        %v2588 = vld [vmem:[%s2586 + $0x8] sm:$0xff]
        %v2589 = vld [vmem:[%s2586 + $0x10] sm:$0xff]
        %v2590 = vld [vmem:[%s2586 + $0x18] sm:$0xff]
        %v2591 = vld [vmem:[%s2586 + $0x20] sm:$0xff]
        %v2592 = vld [vmem:[%s2586 + $0x28] sm:$0xff]
        %v2593 = vld [vmem:[%s2586 + $0x30] sm:$0xff]
        %v2594 = vld [vmem:[%s2586 + $0x38] sm:$0xff]
        %v2595 = vld [vmem:[%s2586 + $0x40] sm:$0xff]
        %v2596 = vld [vmem:[%s2586 + $0x48] sm:$0xff]
        %v2597 = vld [vmem:[%s2586 + $0x50] sm:$0xff]
        %v2598 = vld [vmem:[%s2586 + $0x58] sm:$0xff]
        %v2599 = vld [vmem:[%s2586 + $0x60] sm:$0xff]
        %v2600 = vld [vmem:[%s2586 + $0x68] sm:$0xff]
        %v2601 = vld [vmem:[%s2586 + $0x70] sm:$0xff]
        %v2602 = vld [vmem:[%s2586 + $0x78] sm:$0xff]
        %2603 = vmatpush.msra.mxu0 %v2602
        %2604 = vmatpush.msra.mxu0 %v2601
        %2605 = vmatpush.msra.mxu0 %v2600
        %2606 = vmatpush.msra.mxu0 %v2599
        %2607 = vmatpush.msra.mxu0 %v2598
        %2608 = vmatpush.msra.mxu0 %v2597
        %2609 = vmatpush.msra.mxu0 %v2596
        %2610 = vmatpush.msra.mxu0 %v2595
        %2611 = vmatpush.msra.mxu0 %v2594
        %2612 = vmatpush.msra.mxu0 %v2593
        %2613 = vmatpush.msra.mxu0 %v2592
        %2614 = vmatpush.msra.mxu0 %v2591
        %2615 = vmatpush.msra.mxu0 %v2590
        %2616 = vmatpush.msra.mxu0 %v2589
        %2617 = vmatpush.msra.mxu0 %v2588
        %2618 = vmatpush.msra.mxu0 %v2587
        %2619 = vmatmul.f32.gmra.mxu0 %v2585
        %v2620 = vpop.f32.mrf.mxu0
        %v2621 = vadd.f32 0.0, %v2620
        %2622 = vdwg.mxu0
        %v2623 = vadd.f32 %v2583, %v2621
        %s2624 = scalar_lea.vmem [#allocation3], 5
        %v2625 = vld [vmem:[%s2624] ss:$5 sm:$0x3]
        %s2626 = scalar_lea.vmem [#allocation7], 640
        %v2627 = vld [vmem:[%s2626] sm:$0xff]
        %v2628 = vld [vmem:[%s2626 + $0x8] sm:$0xff]
        %v2629 = vld [vmem:[%s2626 + $0x10] sm:$0xff]
        %v2630 = vld [vmem:[%s2626 + $0x18] sm:$0xff]
        %v2631 = vld [vmem:[%s2626 + $0x20] sm:$0xff]
        %v2632 = vld [vmem:[%s2626 + $0x28] sm:$0xff]
        %v2633 = vld [vmem:[%s2626 + $0x30] sm:$0xff]
        %v2634 = vld [vmem:[%s2626 + $0x38] sm:$0xff]
        %v2635 = vld [vmem:[%s2626 + $0x40] sm:$0xff]
        %v2636 = vld [vmem:[%s2626 + $0x48] sm:$0xff]
        %v2637 = vld [vmem:[%s2626 + $0x50] sm:$0xff]
        %v2638 = vld [vmem:[%s2626 + $0x58] sm:$0xff]
        %v2639 = vld [vmem:[%s2626 + $0x60] sm:$0xff]
        %v2640 = vld [vmem:[%s2626 + $0x68] sm:$0xff]
        %v2641 = vld [vmem:[%s2626 + $0x70] sm:$0xff]
        %v2642 = vld [vmem:[%s2626 + $0x78] sm:$0xff]
        %2643 = vmatpush.msra.mxu0 %v2642
        %2644 = vmatpush.msra.mxu0 %v2641
        %2645 = vmatpush.msra.mxu0 %v2640
        %2646 = vmatpush.msra.mxu0 %v2639
        %2647 = vmatpush.msra.mxu0 %v2638
        %2648 = vmatpush.msra.mxu0 %v2637
        %2649 = vmatpush.msra.mxu0 %v2636
        %2650 = vmatpush.msra.mxu0 %v2635
        %2651 = vmatpush.msra.mxu0 %v2634
        %2652 = vmatpush.msra.mxu0 %v2633
        %2653 = vmatpush.msra.mxu0 %v2632
        %2654 = vmatpush.msra.mxu0 %v2631
        %2655 = vmatpush.msra.mxu0 %v2630
        %2656 = vmatpush.msra.mxu0 %v2629
        %2657 = vmatpush.msra.mxu0 %v2628
        %2658 = vmatpush.msra.mxu0 %v2627
        %2659 = vmatmul.f32.gmra.mxu0 %v2625
        %v2660 = vpop.f32.mrf.mxu0
        %v2661 = vadd.f32 0.0, %v2660
        %2662 = vdwg.mxu0
        %v2663 = vadd.f32 %v2623, %v2661
        %s2664 = scalar_lea.vmem [#allocation3], 6
        %v2665 = vld [vmem:[%s2664] ss:$5 sm:$0x3]
        %s2666 = scalar_lea.vmem [#allocation7], 768
        %v2667 = vld [vmem:[%s2666] sm:$0xff]
        %v2668 = vld [vmem:[%s2666 + $0x8] sm:$0xff]
        %v2669 = vld [vmem:[%s2666 + $0x10] sm:$0xff]
        %v2670 = vld [vmem:[%s2666 + $0x18] sm:$0xff]
        %v2671 = vld [vmem:[%s2666 + $0x20] sm:$0xff]
        %v2672 = vld [vmem:[%s2666 + $0x28] sm:$0xff]
        %v2673 = vld [vmem:[%s2666 + $0x30] sm:$0xff]
        %v2674 = vld [vmem:[%s2666 + $0x38] sm:$0xff]
        %v2675 = vld [vmem:[%s2666 + $0x40] sm:$0xff]
        %v2676 = vld [vmem:[%s2666 + $0x48] sm:$0xff]
        %v2677 = vld [vmem:[%s2666 + $0x50] sm:$0xff]
        %v2678 = vld [vmem:[%s2666 + $0x58] sm:$0xff]
        %v2679 = vld [vmem:[%s2666 + $0x60] sm:$0xff]
        %v2680 = vld [vmem:[%s2666 + $0x68] sm:$0xff]
        %v2681 = vld [vmem:[%s2666 + $0x70] sm:$0xff]
        %v2682 = vld [vmem:[%s2666 + $0x78] sm:$0xff]
        %2683 = vmatpush.msra.mxu0 %v2682
        %2684 = vmatpush.msra.mxu0 %v2681
        %2685 = vmatpush.msra.mxu0 %v2680
        %2686 = vmatpush.msra.mxu0 %v2679
        %2687 = vmatpush.msra.mxu0 %v2678
        %2688 = vmatpush.msra.mxu0 %v2677
        %2689 = vmatpush.msra.mxu0 %v2676
        %2690 = vmatpush.msra.mxu0 %v2675
        %2691 = vmatpush.msra.mxu0 %v2674
        %2692 = vmatpush.msra.mxu0 %v2673
        %2693 = vmatpush.msra.mxu0 %v2672
        %2694 = vmatpush.msra.mxu0 %v2671
        %2695 = vmatpush.msra.mxu0 %v2670
        %2696 = vmatpush.msra.mxu0 %v2669
        %2697 = vmatpush.msra.mxu0 %v2668
        %2698 = vmatpush.msra.mxu0 %v2667
        %2699 = vmatmul.f32.gmra.mxu0 %v2665
        %v2700 = vpop.f32.mrf.mxu0
        %v2701 = vadd.f32 0.0, %v2700
        %2702 = vdwg.mxu0
        %v2703 = vadd.f32 %v2663, %v2701
        %s2704 = scalar_lea.vmem [#allocation3], 7
        %v2705 = vld [vmem:[%s2704] ss:$5 sm:$0x3]
        %s2706 = scalar_lea.vmem [#allocation7], 896
        %v2707 = vld [vmem:[%s2706] sm:$0xff]
        %v2708 = vld [vmem:[%s2706 + $0x8] sm:$0xff]
        %v2709 = vld [vmem:[%s2706 + $0x10] sm:$0xff]
        %v2710 = vld [vmem:[%s2706 + $0x18] sm:$0xff]
        %v2711 = vld [vmem:[%s2706 + $0x20] sm:$0xff]
        %v2712 = vld [vmem:[%s2706 + $0x28] sm:$0xff]
        %v2713 = vld [vmem:[%s2706 + $0x30] sm:$0xff]
        %v2714 = vld [vmem:[%s2706 + $0x38] sm:$0xff]
        %v2715 = vld [vmem:[%s2706 + $0x40] sm:$0xff]
        %v2716 = vld [vmem:[%s2706 + $0x48] sm:$0xff]
        %v2717 = vld [vmem:[%s2706 + $0x50] sm:$0xff]
        %v2718 = vld [vmem:[%s2706 + $0x58] sm:$0xff]
        %v2719 = vld [vmem:[%s2706 + $0x60] sm:$0xff]
        %v2720 = vld [vmem:[%s2706 + $0x68] sm:$0xff]
        %v2721 = vld [vmem:[%s2706 + $0x70] sm:$0xff]
        %v2722 = vld [vmem:[%s2706 + $0x78] sm:$0xff]
        %2723 = vmatpush.msra.mxu0 %v2722
        %2724 = vmatpush.msra.mxu0 %v2721
        %2725 = vmatpush.msra.mxu0 %v2720
        %2726 = vmatpush.msra.mxu0 %v2719
        %2727 = vmatpush.msra.mxu0 %v2718
        %2728 = vmatpush.msra.mxu0 %v2717
        %2729 = vmatpush.msra.mxu0 %v2716
        %2730 = vmatpush.msra.mxu0 %v2715
        %2731 = vmatpush.msra.mxu0 %v2714
        %2732 = vmatpush.msra.mxu0 %v2713
        %2733 = vmatpush.msra.mxu0 %v2712
        %2734 = vmatpush.msra.mxu0 %v2711
        %2735 = vmatpush.msra.mxu0 %v2710
        %2736 = vmatpush.msra.mxu0 %v2709
        %2737 = vmatpush.msra.mxu0 %v2708
        %2738 = vmatpush.msra.mxu0 %v2707
        %2739 = vmatmul.f32.gmra.mxu0 %v2705
        %v2740 = vpop.f32.mrf.mxu0
        %v2741 = vadd.f32 0.0, %v2740
        %2742 = vdwg.mxu0
        %v2743 = vadd.f32 %v2703, %v2741
        %s2744 = scalar_lea.vmem [#allocation3], 8
        %v2745 = vld [vmem:[%s2744] ss:$5 sm:$0x3]
        %s2746 = scalar_lea.vmem [#allocation7], 1024
        %v2747 = vld [vmem:[%s2746] sm:$0xff]
        %v2748 = vld [vmem:[%s2746 + $0x8] sm:$0xff]
        %v2749 = vld [vmem:[%s2746 + $0x10] sm:$0xff]
        %v2750 = vld [vmem:[%s2746 + $0x18] sm:$0xff]
        %v2751 = vld [vmem:[%s2746 + $0x20] sm:$0xff]
        %v2752 = vld [vmem:[%s2746 + $0x28] sm:$0xff]
        %v2753 = vld [vmem:[%s2746 + $0x30] sm:$0xff]
        %v2754 = vld [vmem:[%s2746 + $0x38] sm:$0xff]
        %v2755 = vld [vmem:[%s2746 + $0x40] sm:$0xff]
        %v2756 = vld [vmem:[%s2746 + $0x48] sm:$0xff]
        %v2757 = vld [vmem:[%s2746 + $0x50] sm:$0xff]
        %v2758 = vld [vmem:[%s2746 + $0x58] sm:$0xff]
        %v2759 = vld [vmem:[%s2746 + $0x60] sm:$0xff]
        %v2760 = vld [vmem:[%s2746 + $0x68] sm:$0xff]
        %v2761 = vld [vmem:[%s2746 + $0x70] sm:$0xff]
        %v2762 = vld [vmem:[%s2746 + $0x78] sm:$0xff]
        %2763 = vmatpush.msra.mxu0 %v2762
        %2764 = vmatpush.msra.mxu0 %v2761
        %2765 = vmatpush.msra.mxu0 %v2760
        %2766 = vmatpush.msra.mxu0 %v2759
        %2767 = vmatpush.msra.mxu0 %v2758
        %2768 = vmatpush.msra.mxu0 %v2757
        %2769 = vmatpush.msra.mxu0 %v2756
        %2770 = vmatpush.msra.mxu0 %v2755
        %2771 = vmatpush.msra.mxu0 %v2754
        %2772 = vmatpush.msra.mxu0 %v2753
        %2773 = vmatpush.msra.mxu0 %v2752
        %2774 = vmatpush.msra.mxu0 %v2751
        %2775 = vmatpush.msra.mxu0 %v2750
        %2776 = vmatpush.msra.mxu0 %v2749
        %2777 = vmatpush.msra.mxu0 %v2748
        %2778 = vmatpush.msra.mxu0 %v2747
        %2779 = vmatmul.f32.gmra.mxu0 %v2745
        %v2780 = vpop.f32.mrf.mxu0
        %v2781 = vadd.f32 0.0, %v2780
        %2782 = vdwg.mxu0
        %v2783 = vadd.f32 %v2743, %v2781
        %s2784 = scalar_lea.vmem [#allocation3], 9
        %v2785 = vld [vmem:[%s2784] ss:$5 sm:$0x3]
        %s2786 = scalar_lea.vmem [#allocation7], 1152
        %v2787 = vld [vmem:[%s2786] sm:$0xff]
        %v2788 = vld [vmem:[%s2786 + $0x8] sm:$0xff]
        %v2789 = vld [vmem:[%s2786 + $0x10] sm:$0xff]
        %v2790 = vld [vmem:[%s2786 + $0x18] sm:$0xff]
        %v2791 = vld [vmem:[%s2786 + $0x20] sm:$0xff]
        %v2792 = vld [vmem:[%s2786 + $0x28] sm:$0xff]
        %v2793 = vld [vmem:[%s2786 + $0x30] sm:$0xff]
        %v2794 = vld [vmem:[%s2786 + $0x38] sm:$0xff]
        %v2795 = vld [vmem:[%s2786 + $0x40] sm:$0xff]
        %v2796 = vld [vmem:[%s2786 + $0x48] sm:$0xff]
        %v2797 = vld [vmem:[%s2786 + $0x50] sm:$0xff]
        %v2798 = vld [vmem:[%s2786 + $0x58] sm:$0xff]
        %v2799 = vld [vmem:[%s2786 + $0x60] sm:$0xff]
        %v2800 = vld [vmem:[%s2786 + $0x68] sm:$0xff]
        %v2801 = vld [vmem:[%s2786 + $0x70] sm:$0xff]
        %v2802 = vld [vmem:[%s2786 + $0x78] sm:$0xff]
        %2803 = vmatpush.msra.mxu0 %v2802
        %2804 = vmatpush.msra.mxu0 %v2801
        %2805 = vmatpush.msra.mxu0 %v2800
        %2806 = vmatpush.msra.mxu0 %v2799
        %2807 = vmatpush.msra.mxu0 %v2798
        %2808 = vmatpush.msra.mxu0 %v2797
        %2809 = vmatpush.msra.mxu0 %v2796
        %2810 = vmatpush.msra.mxu0 %v2795
        %2811 = vmatpush.msra.mxu0 %v2794
        %2812 = vmatpush.msra.mxu0 %v2793
        %2813 = vmatpush.msra.mxu0 %v2792
        %2814 = vmatpush.msra.mxu0 %v2791
        %2815 = vmatpush.msra.mxu0 %v2790
        %2816 = vmatpush.msra.mxu0 %v2789
        %2817 = vmatpush.msra.mxu0 %v2788
        %2818 = vmatpush.msra.mxu0 %v2787
        %2819 = vmatmul.f32.gmra.mxu0 %v2785
        %v2820 = vpop.f32.mrf.mxu0
        %v2821 = vadd.f32 0.0, %v2820
        %2822 = vdwg.mxu0
        %v2823 = vadd.f32 %v2783, %v2821
        %v2824 = vld [vmem:[%s6] sm:$0x1]
        %v2825 = vperm.slane %v2824, 0
        %v2826 = vadd.f32 %v2823, %v2825
        %v2827 = vmax.f32 %v2826, 0.0
        %v2828 = vld [vmem:[%s6 + $0x1] sm:$0x1]
        %v2829 = vperm.slane %v2828, 0
        %v2830 = vmul.f32 %v2827, %v2829
        %v2831 = vld [vmem:[%s6 + $0x2] sm:$0x1]
        %v2832 = vperm.slane %v2831, 0
        %v2833 = vadd.f32 %v2830, %v2832
        %v2834 = vld [vmem:[%s8] sm:$0x1]
        %v2835 = vld [vmem:[#allocation9] sm:$0xff]
        %v2836 = vld [vmem:[#allocation9 + $0x8] sm:$0xff]
        %v2837 = vld [vmem:[#allocation9 + $0x10] sm:$0xff]
        %v2838 = vld [vmem:[#allocation9 + $0x18] sm:$0xff]
        %v2839 = vld [vmem:[#allocation9 + $0x20] sm:$0xff]
        %v2840 = vld [vmem:[#allocation9 + $0x28] sm:$0xff]
        %v2841 = vld [vmem:[#allocation9 + $0x30] sm:$0xff]
        %v2842 = vld [vmem:[#allocation9 + $0x38] sm:$0xff]
        %v2843 = vld [vmem:[#allocation9 + $0x40] sm:$0xff]
        %v2844 = vld [vmem:[#allocation9 + $0x48] sm:$0xff]
        %v2845 = vld [vmem:[#allocation9 + $0x50] sm:$0xff]
        %v2846 = vld [vmem:[#allocation9 + $0x58] sm:$0xff]
        %v2847 = vld [vmem:[#allocation9 + $0x60] sm:$0xff]
        %v2848 = vld [vmem:[#allocation9 + $0x68] sm:$0xff]
        %v2849 = vld [vmem:[#allocation9 + $0x70] sm:$0xff]
        %v2850 = vld [vmem:[#allocation9 + $0x78] sm:$0xff]
        %2851 = vmatpush.msra.mxu0 %v2850
        %2852 = vmatpush.msra.mxu0 %v2849
        %2853 = vmatpush.msra.mxu0 %v2848
        %2854 = vmatpush.msra.mxu0 %v2847
        %2855 = vmatpush.msra.mxu0 %v2846
        %2856 = vmatpush.msra.mxu0 %v2845
        %2857 = vmatpush.msra.mxu0 %v2844
        %2858 = vmatpush.msra.mxu0 %v2843
        %2859 = vmatpush.msra.mxu0 %v2842
        %2860 = vmatpush.msra.mxu0 %v2841
        %2861 = vmatpush.msra.mxu0 %v2840
        %2862 = vmatpush.msra.mxu0 %v2839
        %2863 = vmatpush.msra.mxu0 %v2838
        %2864 = vmatpush.msra.mxu0 %v2837
        %2865 = vmatpush.msra.mxu0 %v2836
        %2866 = vmatpush.msra.mxu0 %v2835
        %2867 = vmatmul.f32.gmra.mxu0 %v2833
        %v2868 = vpop.f32.mrf.mxu0
        %v2869 = vadd.f32 0.0, %v2868
        %2870 = vdwg.mxu0
        %v2871 = vadd.f32 %v2834, %v2869
        %s2872 = scalar_lea.vmem [#allocation9], 128
        %v2873 = vld [vmem:[%s2872] sm:$0xff]
        %v2874 = vld [vmem:[%s2872 + $0x8] sm:$0xff]
        %v2875 = vld [vmem:[%s2872 + $0x10] sm:$0xff]
        %v2876 = vld [vmem:[%s2872 + $0x18] sm:$0xff]
        %v2877 = vld [vmem:[%s2872 + $0x20] sm:$0xff]
        %v2878 = vld [vmem:[%s2872 + $0x28] sm:$0xff]
        %v2879 = vld [vmem:[%s2872 + $0x30] sm:$0xff]
        %v2880 = vld [vmem:[%s2872 + $0x38] sm:$0xff]
        %v2881 = vld [vmem:[%s2872 + $0x40] sm:$0xff]
        %v2882 = vld [vmem:[%s2872 + $0x48] sm:$0xff]
        %v2883 = vld [vmem:[%s2872 + $0x50] sm:$0xff]
        %v2884 = vld [vmem:[%s2872 + $0x58] sm:$0xff]
        %v2885 = vld [vmem:[%s2872 + $0x60] sm:$0xff]
        %v2886 = vld [vmem:[%s2872 + $0x68] sm:$0xff]
        %v2887 = vld [vmem:[%s2872 + $0x70] sm:$0xff]
        %v2888 = vld [vmem:[%s2872 + $0x78] sm:$0xff]
        %v2890 = vrot.slane %v2833, 1
        %2892 = vmatpush.msra.mxu0 %v2888
        %2893 = vmatpush.msra.mxu0 %v2887
        %2894 = vmatpush.msra.mxu0 %v2886
        %2895 = vmatpush.msra.mxu0 %v2885
        %2896 = vmatpush.msra.mxu0 %v2884
        %2897 = vmatpush.msra.mxu0 %v2883
        %2898 = vmatpush.msra.mxu0 %v2882
        %2899 = vmatpush.msra.mxu0 %v2881
        %2900 = vmatpush.msra.mxu0 %v2880
        %2901 = vmatpush.msra.mxu0 %v2879
        %2902 = vmatpush.msra.mxu0 %v2878
        %2903 = vmatpush.msra.mxu0 %v2877
        %2904 = vmatpush.msra.mxu0 %v2876
        %2905 = vmatpush.msra.mxu0 %v2875
        %2906 = vmatpush.msra.mxu0 %v2874
        %2907 = vmatpush.msra.mxu0 %v2873
        %2908 = vmatmul.f32.gmra.mxu0 %v2890
        %v2909 = vpop.f32.mrf.mxu0
        %v2910 = vadd.f32 0.0, %v2909
        %2911 = vdwg.mxu0
        %v2912 = vadd.f32 %v2871, %v2910
        %v2913 = vmax.f32 %v2912, 0.0
        %v2914 = vld [vmem:[#allocation10] sm:$0xff]
        %v2915 = vld [vmem:[#allocation10 + $0x8] sm:$0xff]
        %v2916 = vld [vmem:[#allocation10 + $0x10] sm:$0xff]
        %v2917 = vld [vmem:[#allocation10 + $0x18] sm:$0xff]
        %v2918 = vld [vmem:[#allocation10 + $0x20] sm:$0xff]
        %v2919 = vld [vmem:[#allocation10 + $0x28] sm:$0xff]
        %v2920 = vld [vmem:[#allocation10 + $0x30] sm:$0xff]
        %v2921 = vld [vmem:[#allocation10 + $0x38] sm:$0xff]
        %v2922 = vld [vmem:[#allocation10 + $0x40] sm:$0xff]
        %v2923 = vld [vmem:[#allocation10 + $0x48] sm:$0xff]
        %v2924 = vld [vmem:[#allocation10 + $0x50] sm:$0xff]
        %v2925 = vld [vmem:[#allocation10 + $0x58] sm:$0xff]
        %v2926 = vld [vmem:[#allocation10 + $0x60] sm:$0xff]
        %v2927 = vld [vmem:[#allocation10 + $0x68] sm:$0xff]
        %v2928 = vld [vmem:[#allocation10 + $0x70] sm:$0xff]
        %v2929 = vld [vmem:[#allocation10 + $0x78] sm:$0xff]
        %v2930 = vld [vmem:[%s10] sm:$0x1]
        %2931 = vmatpush.msra.mxu0 %v2929
        %2932 = vmatpush.msra.mxu0 %v2928
        %2933 = vmatpush.msra.mxu0 %v2927
        %2934 = vmatpush.msra.mxu0 %v2926
        %2935 = vmatpush.msra.mxu0 %v2925
        %2936 = vmatpush.msra.mxu0 %v2924
        %2937 = vmatpush.msra.mxu0 %v2923
        %2938 = vmatpush.msra.mxu0 %v2922
        %2939 = vmatpush.msra.mxu0 %v2921
        %2940 = vmatpush.msra.mxu0 %v2920
        %2941 = vmatpush.msra.mxu0 %v2919
        %2942 = vmatpush.msra.mxu0 %v2918
        %2943 = vmatpush.msra.mxu0 %v2917
        %2944 = vmatpush.msra.mxu0 %v2916
        %2945 = vmatpush.msra.mxu0 %v2915
        %2946 = vmatpush.msra.mxu0 %v2914
        %2947 = vmatmul.f32.gmra.mxu0 %v2913
        %v2948 = vpop.f32.mrf.mxu0
        %v2949 = vadd.f32 %v2930, %v2948
        %2950 = vdwg.mxu0
        %2951 = vst [vmem:[%s445] sm:$0x1] %v2949
        %s2952 = sand.u32 %s272, 1
        %s2953 = scalar_lea.sflag [#allocation6], %s2952
        %s2954 = sand.u32 %s272, 1
        %s2955 = scalar_lea.vmem [#allocation12], %s2954
        // Predicated region
        $region81: #{cnn_mel_1d_forward.1} parent=63 // pred_check
          %p2956 = pneg %p282
        $region82: #{cnn_mel_1d_forward.1} parent=63 // pred_check_branch
          %2958 = sbr.rel (%p2956) target = $region84
        $region83: #{cnn_mel_1d_forward.1} parent=63 // pred_region
          %2960 = vsyncadd %s2953, 0
          %s2961 = scalar_lea.hbm %s11, %s28
          %s2963 = sshll.u32 %s2955, 4
          %s2964 = int_to_ptr.vmem [resolvable:$true] %s2963
          %s2965 = sshll.u32 %s2961, 4
          %s2966 = int_to_ptr.hbm [resolvable:$true] %s2965
          %2968 = dma.vmem_to_hbm [thread:$0]  %s2964, 16, %s2966, %s2953
        $region84: #{cnn_mel_1d_forward.1} parent=63 // pred_fallthru
          _
      $region64: #{cnn_mel_1d_forward.1} parent=5 // pred_fallthru
        _
      %p2969 = scmp.le.s32.totalorder 2, %s23
      // Predicated region
      $region85: #{cnn_mel_1d_forward.1} parent=5 // pred_check
        %p2970 = pneg %p2969
      $region86: #{cnn_mel_1d_forward.1} parent=5 // pred_check_branch
        %2972 = sbr.rel (%p2970) target = $region88
      $region87: #{cnn_mel_1d_forward.1} parent=5 // pred_region
        %s2973 = ssub.s32 %s23, 2
        // Predicated region
        $region89: #{cnn_mel_1d_forward.1} parent=87 // pred_check
          %p2974 = pneg %p288
        $region90: #{cnn_mel_1d_forward.1} parent=87 // pred_check_branch
          %2976 = sbr.rel (%p2974) target = $region92
        $region91: #{cnn_mel_1d_forward.1} parent=87 // pred_region
          %s2977 = sand.u32 %s273, 1
          %s2978 = scalar_lea.sflag [#allocation6], %s2977
          %s2979 = sand.u32 %s273, 1
          %s2980 = scalar_lea.vmem [#allocation12], %s2979
          %2982 = dma.done %s2978, 16
        $region92: #{cnn_mel_1d_forward.1} parent=87 // pred_fallthru
          _
      $region88: #{cnn_mel_1d_forward.1} parent=5 // pred_fallthru
        _
    $region6: #{cnn_mel_1d_forward.1} parent=1 // loop_footer
      %s27 = sadd.s32 1, %s23
    $region7: #{cnn_mel_1d_forward.1} parent=1 // loop_footer_branch
      %22 = sbr.rel target = $region3
    $region8: #{cnn_mel_1d_forward.1} parent=1 // loop_exit
      _
    %2983 = vsyncpa [#allocation5], 1
    %s2984 = scalar_lea.sflag [#allocation5], 1
    %2985 = vsyncpa %s2984, 1
    %2986 = vsyncpa [#allocation8], 1
    %2987 = vsyncpa [#allocation11], 1
    %2988 = vsyncpa [#allocation6], 1
    %s2989 = scalar_lea.sflag [#allocation6], 1
    %2990 = vsyncpa %s2989, 1

</llo_original>
